<compile_context>
chip_gen: v6e
topology: v6e:2x2x1
jax: 0.10.0
libtpu: 0.0.40
codegen_flags: <defaults>
</compile_context>

<pallas_src>
import functools
import math

import jax
import jax.numpy as jnp
from jax.experimental import pallas as pl
from jax.experimental.pallas import tpu as pltpu


# ----------------------------------------------------------------------------
# helpers
# ----------------------------------------------------------------------------
def _round_up(n, m):
    return ((n + m - 1) // m) * m


def _choose_tile(n, pref, align):
    """Pick a tile (multiple of `align`, at most `pref`) and the padded extent."""
    t = min(pref, _round_up(n, align))
    return t, _round_up(n, t)


def _pad2d(x, rows, cols):
    r, c = x.shape
    if r == rows and c == cols:
        return x
    return jnp.pad(x, ((0, rows - r), (0, cols - c)))


# ----------------------------------------------------------------------------
# Tiled matmul kernel (optional ReLU epilogue)
# ----------------------------------------------------------------------------
def _matmul_kernel(x_ref, w_ref, b_ref, o_ref, acc_ref, *, relu):
    """y = x @ w + b. Grid = (M tiles, N tiles, K tiles). bf16 in, f32 acc."""
    k = pl.program_id(2)

    @pl.when(k == 0)
    def _():
        acc_ref[...] = jnp.zeros_like(acc_ref)

    acc_ref[...] += jnp.dot(x_ref[...], w_ref[...],
                            preferred_element_type=jnp.float32)

    @pl.when(k == pl.num_programs(2) - 1)
    def _():
        y = acc_ref[...] + b_ref[...]
        if relu:
            y = jnp.maximum(y, 0.0)
        o_ref[...] = y.astype(o_ref.dtype)


def linear(x, w, b, relu=False, out_dtype=jnp.bfloat16,
           tm_pref=256, tn_pref=256, tk_pref=512):
    """x: (..., K) @ w: (K, N) + b. bf16 operands, f32 accumulation, tiled."""
    orig_shape = x.shape
    K = orig_shape[-1]
    N = w.shape[1]
    x2 = x.reshape(-1, K).astype(jnp.bfloat16)
    M = x2.shape[0]

    tm, Mp = _choose_tile(M, tm_pref, 16)    # 16-row align: bf16 sublane packing
    tk, Kp = _choose_tile(K, tk_pref, 128)
    tn, Np = _choose_tile(N, tn_pref, 128)   # lane-dense output stores

    xp = _pad2d(x2, Mp, Kp)                              # stays bf16 (no f32 round trip)
    wp = _pad2d(w.astype(jnp.bfloat16), Kp, Np)
    bp = _pad2d(b.reshape(1, N).astype(jnp.float32), 1, Np)

    out = pl.pallas_call(
        functools.partial(_matmul_kernel, relu=relu),
        out_shape=jax.ShapeDtypeStruct((Mp, Np), out_dtype),
        grid_spec=pltpu.PrefetchScalarGridSpec(
            num_scalar_prefetch=0,
            grid=(Mp // tm, Np // tn, Kp // tk),
            in_specs=[
                pl.BlockSpec((tm, tk), lambda i, j, k: (i, k)),
                pl.BlockSpec((tk, tn), lambda i, j, k: (k, j)),
                pl.BlockSpec((1, tn), lambda i, j, k: (0, j)),
            ],
            out_specs=pl.BlockSpec((tm, tn), lambda i, j, k: (i, j)),
            scratch_shapes=[pltpu.VMEM((tm, tn), jnp.float32)],
        ),
        compiler_params=pltpu.CompilerParams(
            dimension_semantics=("parallel", "parallel", "arbitrary")),
    )(xp, wp, bp)
    if Mp != M or Np != N:
        out = out[:M, :N]
    return out.reshape(orig_shape[:-1] + (N,))


# ----------------------------------------------------------------------------
# Fused matmul (+ReLU) + residual + LayerNorm kernel
# ----------------------------------------------------------------------------
def _matmul_res_ln_kernel(x_ref, w_ref, b_ref, r_ref, g_ref, bt_ref, o_ref,
                          acc_ref, *, relu, eps):
    """y = LayerNorm( maybe_relu(x @ w + b) + residual ). Grid = (M tiles, K tiles)."""
    k = pl.program_id(1)

    @pl.when(k == 0)
    def _():
        acc_ref[...] = jnp.zeros_like(acc_ref)

    acc_ref[...] += jnp.dot(x_ref[...], w_ref[...],
                            preferred_element_type=jnp.float32)

    @pl.when(k == pl.num_programs(1) - 1)
    def _():
        y = acc_ref[...] + b_ref[...]
        if relu:
            y = jnp.maximum(y, 0.0)
        s = y + r_ref[...].astype(jnp.float32)
        mean = jnp.mean(s, axis=-1, keepdims=True)
        c = s - mean
        var = jnp.mean(c * c, axis=-1, keepdims=True)      # biased var (PyTorch LN)
        o_ref[...] = (c * jax.lax.rsqrt(var + eps) * g_ref[...]
                      + bt_ref[...]).astype(o_ref.dtype)


def linear_residual_layernorm(x, w, b, residual, gamma, beta, relu=False,
                              eps=1e-5, out_dtype=jnp.bfloat16,
                              tm_pref=256, tk_pref=512):
    """Fused (x @ w + b) [+ReLU] + residual -> LayerNorm over the last dim."""
    orig_shape = residual.shape
    K = x.shape[-1]
    D = w.shape[1]
    x2 = x.reshape(-1, K).astype(jnp.bfloat16)
    r2 = residual.reshape(-1, D).astype(jnp.bfloat16)
    M = x2.shape[0]

    tm, Mp = _choose_tile(M, tm_pref, 16)
    tk, Kp = _choose_tile(K, tk_pref, 128)

    xp = _pad2d(x2, Mp, Kp)
    wp = _pad2d(w.astype(jnp.bfloat16), Kp, D)
    rp = _pad2d(r2, Mp, D)
    bp = b.reshape(1, D).astype(jnp.float32)
    gp = gamma.reshape(1, D).astype(jnp.float32)
    btp = beta.reshape(1, D).astype(jnp.float32)

    out = pl.pallas_call(
        functools.partial(_matmul_res_ln_kernel, relu=relu, eps=eps),
        out_shape=jax.ShapeDtypeStruct((Mp, D), out_dtype),
        grid_spec=pltpu.PrefetchScalarGridSpec(
            num_scalar_prefetch=0,
            grid=(Mp // tm, Kp // tk),
            in_specs=[
                pl.BlockSpec((tm, tk), lambda i, k: (i, k)),
                pl.BlockSpec((tk, D), lambda i, k: (k, 0)),
                pl.BlockSpec((1, D), lambda i, k: (0, 0)),
                pl.BlockSpec((tm, D), lambda i, k: (i, 0)),
                pl.BlockSpec((1, D), lambda i, k: (0, 0)),
                pl.BlockSpec((1, D), lambda i, k: (0, 0)),
            ],
            out_specs=pl.BlockSpec((tm, D), lambda i, k: (i, 0)),
            scratch_shapes=[pltpu.VMEM((tm, D), jnp.float32)],
        ),
        compiler_params=pltpu.CompilerParams(
            dimension_semantics=("parallel", "arbitrary")),
    )(xp, wp, bp, rp, gp, btp)
    if Mp != M:
        out = out[:M, :]
    return out.reshape(orig_shape)


# ----------------------------------------------------------------------------
# Attention kernels: lane-dense (B, L, D) in/out, heads sliced in-kernel
# ----------------------------------------------------------------------------
def _attn_heads(q_at, k_at, v_at, bias, o_ref, *, head_num, head_dim):
    """Per-head online softmax attention; heads unrolled (static), bf16 MXU matmuls."""
    for h in range(head_num):
        q = q_at(h)                      # (Lq, Dh) bf16 — 1/temperature pre-folded into Q
        k = k_at(h)                      # (Lk, Dh) bf16
        v = v_at(h)                      # (Lk, Dh) bf16
        s = jax.lax.dot_general(q, k, (((1,), (1,)), ((), ())),
                                preferred_element_type=jnp.float32)   # (Lq, Lk) f32
        if bias is not None:
            s = s + bias
        s = s - jnp.max(s, axis=-1, keepdims=True)
        p = jnp.exp(s)
        p = p * pl.reciprocal(jnp.sum(p, axis=-1, keepdims=True), approx=True)
        ctx = jnp.dot(p.astype(v.dtype), v, preferred_element_type=jnp.float32)
        o_ref[0, :, pl.ds(h * head_dim, head_dim)] = ctx.astype(o_ref.dtype)


def _self_attn_kernel(qkv_ref, bias_ref, o_ref, *, head_num, head_dim, hidden):
    bias = bias_ref[0]                   # (Lq, Lk) additive mask: 0 or -1e9
    _attn_heads(
        lambda h: qkv_ref[0, :, pl.ds(h * head_dim, head_dim)],
        lambda h: qkv_ref[0, :, pl.ds(hidden + h * head_dim, head_dim)],
        lambda h: qkv_ref[0, :, pl.ds(2 * hidden + h * head_dim, head_dim)],
        bias, o_ref, head_num=head_num, head_dim=head_dim)


def _cross_attn_kernel(q_ref, kv_ref, o_ref, *, head_num, head_dim, hidden):
    _attn_heads(
        lambda h: q_ref[0, :, pl.ds(h * head_dim, head_dim)],
        lambda h: kv_ref[0, :, pl.ds(h * head_dim, head_dim)],
        lambda h: kv_ref[0, :, pl.ds(hidden + h * head_dim, head_dim)],
        None, o_ref, head_num=head_num, head_dim=head_dim)


def self_attention(qkv, bias, head_num, hidden):
    """qkv: (B, Lq, 3*hidden) bf16 (fused projection output), bias: (B, Lq, Lq) f32."""
    B, L, d3 = qkv.shape
    head_dim = hidden // head_num
    return pl.pallas_call(
        functools.partial(_self_attn_kernel, head_num=head_num,
                          head_dim=head_dim, hidden=hidden),
        out_shape=jax.ShapeDtypeStruct((B, L, hidden), jnp.bfloat16),
        grid=(B,),
        in_specs=[
            pl.BlockSpec((1, L, d3), lambda b: (b, 0, 0)),
            pl.BlockSpec((1, L, L), lambda b: (b, 0, 0)),
        ],
        out_specs=pl.BlockSpec((1, L, hidden), lambda b: (b, 0, 0)),
        compiler_params=pltpu.CompilerParams(
            dimension_semantics=("parallel",)),
    )(qkv.astype(jnp.bfloat16), bias.astype(jnp.float32))


def cross_attention(q, kv, head_num, hidden):
    """q: (B, Lq, hidden) bf16, kv: (B, Lk, 2*hidden) bf16 (fused KV). No mask."""
    B, Lq, D = q.shape
    Lk = kv.shape[1]
    head_dim = hidden // head_num
    # TODO(synk): for long encoder sequences on v7x, tile Lk (flash-style) instead
    # of holding all of K/V per batch element in VMEM.
    return pl.pallas_call(
        functools.partial(_cross_attn_kernel, head_num=head_num,
                          head_dim=head_dim, hidden=hidden),
        out_shape=jax.ShapeDtypeStruct((B, Lq, hidden), jnp.bfloat16),
        grid=(B,),
        in_specs=[
            pl.BlockSpec((1, Lq, D), lambda b: (b, 0, 0)),
            pl.BlockSpec((1, Lk, 2 * hidden), lambda b: (b, 0, 0)),
        ],
        out_specs=pl.BlockSpec((1, Lq, hidden), lambda b: (b, 0, 0)),
        compiler_params=pltpu.CompilerParams(
            dimension_semantics=("parallel",)),
    )(q.astype(jnp.bfloat16), kv.astype(jnp.bfloat16))


# ----------------------------------------------------------------------------
# Glue: positional encoding, masks, module composition (XLA, jit-fused)
# ----------------------------------------------------------------------------
def position_encoding(hidden_dim, max_len=500):
    pos = jnp.arange(max_len, dtype=jnp.float32)[:, None]
    i = jnp.arange(hidden_dim, dtype=jnp.float32)[None, :]
    angle_rates = 1.0 / jnp.power(10000.0, (2.0 * jnp.floor(i / 2.0)) / hidden_dim)
    pe = pos * angle_rates
    pe = pe.at[:, 0::2].set(jnp.sin(pe[:, 0::2]))
    pe = pe.at[:, 1::2].set(jnp.cos(pe[:, 1::2]))
    return pe  # (max_len, hidden_dim)


def build_tgt_bias(text, pad_id):
    """Additive attention bias: 0.0 where visible, -1e9 where masked. (B, L, L)."""
    B, L = text.shape
    pad = (text == pad_id)
    pad = pad.at[:, 0].set(False)                  # pad_mask[:, 0] = False
    pad = pad[:, None, :]                          # (B, 1, L) — mask over keys
    order = jnp.triu(jnp.ones((L, L), dtype=bool), k=1)[None]  # (1, L, L)
    mask = pad | order                             # (B, L, L)
    return jnp.where(mask, -1e9, 0.0).astype(jnp.float32)


def decoder_layer(tgt, src, tgt_bias, p, head_num, hidden):
    # --- self-attention: fused QKV projection feeds the attention kernel directly ---
    qkv = linear(tgt, p["self_wqkv"], p["self_bqkv"])                    # (B, L, 3D) bf16
    ctx = self_attention(qkv, tgt_bias, head_num, hidden)                # (B, L, D)  bf16
    out1 = linear_residual_layernorm(ctx, p["self_out_w"], p["self_out_b"],
                                     residual=tgt, gamma=p["ln1_g"], beta=p["ln1_b"])
    # --- cross-attention: query from the ORIGINAL tgt (matches reference),
    #     residual is the self-attention output out1 ---
    q = linear(tgt, p["cross_wq"], p["cross_bq"])                        # (B, L, D)  bf16
    kv = linear(src, p["cross_wkv"], p["cross_bkv"])                     # (B, S, 2D) bf16
    ctx2 = cross_attention(q, kv, head_num, hidden)
    out2 = linear_residual_layernorm(ctx2, p["cross_out_w"], p["cross_out_b"],
                                     residual=out1, gamma=p["ln2_g"], beta=p["ln2_b"])
    # --- Feedforward: Linear -> ReLU -> Linear -> ReLU (two ReLUs, per reference),
    #     second linear fused with residual + LayerNorm ---
    h = linear(out2, p["ff_w1"], p["ff_b1"], relu=True)
    out3 = linear_residual_layernorm(h, p["ff_w2"], p["ff_b2"],
                                     residual=out2, gamma=p["ln3_g"],
                                     beta=p["ln3_b"], relu=True)
    return out3


def transformer_decoder_forward(prepped, src, text, *, head_num, pad_id):
    hidden = prepped["emb_scaled"].shape[1]
    L = text.shape[1]

    # text embedding (pre-scaled by sqrt(hidden)) + positional encoding, then bf16
    tgt = prepped["emb_scaled"][text] + prepped["pos_enc"][None, :L, :]
    tgt = tgt.astype(jnp.bfloat16)
    src_b = src.astype(jnp.bfloat16)

    tgt_bias = build_tgt_bias(text, pad_id)
    for lp in prepped["layers"]:
        tgt = decoder_layer(tgt, src_b, tgt_bias, lp, head_num, hidden)

    # generator -> (B, L, num_classes), f32 output
    return linear(tgt, prepped["gen_w"], prepped["gen_b"], out_dtype=jnp.float32)


# ----------------------------------------------------------------------------
# Parameter construction & one-time preprocessing (fusions hoisted out of forward)
# ----------------------------------------------------------------------------
def make_mha_params(key, q_channels, k_channels):
    ks = jax.random.split(key, 4)
    s = 0.02
    return {
        "q_w": s * jax.random.normal(ks[0], (q_channels, q_channels), jnp.float32),
        "q_b": jnp.zeros((q_channels,), jnp.float32),
        "k_w": s * jax.random.normal(ks[1], (k_channels, q_channels), jnp.float32),
        "k_b": jnp.zeros((q_channels,), jnp.float32),
        "v_w": s * jax.random.normal(ks[2], (k_channels, q_channels), jnp.float32),
        "v_b": jnp.zeros((q_channels,), jnp.float32),
        "out_w": s * jax.random.normal(ks[3], (q_channels, q_channels), jnp.float32),
        "out_b": jnp.zeros((q_channels,), jnp.float32),
    }


def make_params(key, num_classes, src_dim, hidden_dim, filter_dim, layer_num, max_len=500):
    keys = jax.random.split(key, 2 + layer_num)
    s = 0.02
    layers = []
    for l in range(layer_num):
        lk = jax.random.split(keys[2 + l], 4)
        layers.append({
            "self_attn": make_mha_params(lk[0], hidden_dim, hidden_dim),
            "cross_attn": make_mha_params(lk[1], hidden_dim, src_dim),
            "ln1_g": jnp.ones((hidden_dim,), jnp.float32),
            "ln1_b": jnp.zeros((hidden_dim,), jnp.float32),
            "ln2_g": jnp.ones((hidden_dim,), jnp.float32),
            "ln2_b": jnp.zeros((hidden_dim,), jnp.float32),
            "ln3_g": jnp.ones((hidden_dim,), jnp.float32),
            "ln3_b": jnp.zeros((hidden_dim,), jnp.float32),
            "ff_w1": s * jax.random.normal(lk[2], (hidden_dim, filter_dim), jnp.float32),
            "ff_b1": jnp.zeros((filter_dim,), jnp.float32),
            "ff_w2": s * jax.random.normal(lk[3], (filter_dim, hidden_dim), jnp.float32),
            "ff_b2": jnp.zeros((hidden_dim,), jnp.float32),
        })
    return {
        "embedding": s * jax.random.normal(keys[0], (num_classes + 1, hidden_dim), jnp.float32),
        "pos_enc": position_encoding(hidden_dim, max_len),
        "layers": layers,
        "gen_w": s * jax.random.normal(keys[1], (hidden_dim, num_classes), jnp.float32),
        "gen_b": jnp.zeros((num_classes,), jnp.float32),
    }


def prepare_params(params):
    """One-time fusion of weights: QKV/KV concat, 1/temperature into Q, sqrt(hidden)
    into the embedding table, matmul weights cast to bf16."""
    hidden = params["embedding"].shape[1]
    inv_t = 1.0 / math.sqrt(hidden)   # temperature = sqrt(head_num*head_dim) = sqrt(hidden)
    layers = []
    for lp in params["layers"]:
        sa, ca = lp["self_attn"], lp["cross_attn"]
        layers.append({
            "self_wqkv": jnp.concatenate([sa["q_w"] * inv_t, sa["k_w"], sa["v_w"]],
                                         axis=1).astype(jnp.bfloat16),
            "self_bqkv": jnp.concatenate([sa["q_b"] * inv_t, sa["k_b"], sa["v_b"]], axis=0),
            "self_out_w": sa["out_w"].astype(jnp.bfloat16),
            "self_out_b": sa["out_b"],
            "cross_wq": (ca["q_w"] * inv_t).astype(jnp.bfloat16),
            "cross_bq": ca["q_b"] * inv_t,
            "cross_wkv": jnp.concatenate([ca["k_w"], ca["v_w"]], axis=1).astype(jnp.bfloat16),
            "cross_bkv": jnp.concatenate([ca["k_b"], ca["v_b"]], axis=0),
            "cross_out_w": ca["out_w"].astype(jnp.bfloat16),
            "cross_out_b": ca["out_b"],
            "ln1_g": lp["ln1_g"], "ln1_b": lp["ln1_b"],
            "ln2_g": lp["ln2_g"], "ln2_b": lp["ln2_b"],
            "ln3_g": lp["ln3_g"], "ln3_b": lp["ln3_b"],
            "ff_w1": lp["ff_w1"].astype(jnp.bfloat16), "ff_b1": lp["ff_b1"],
            "ff_w2": lp["ff_w2"].astype(jnp.bfloat16), "ff_b2": lp["ff_b2"],
        })
    return {
        "emb_scaled": params["embedding"] * math.sqrt(hidden),
        "pos_enc": params["pos_enc"],
        "layers": layers,
        "gen_w": params["gen_w"].astype(jnp.bfloat16),
        "gen_b": params["gen_b"],
    }


if __name__ == "__main__":
    # small config consistent with the module
    batch = 2
    seq = 8            # text length
    src_len = 16       # flattened encoder feature length
    hidden_dim = 32
    src_dim = 48
    filter_dim = 64
    head_num = 4
    num_classes = 10
    pad_id = 0
    layer_num = 2

    key = jax.random.PRNGKey(0)
    k_param, k_src, k_text = jax.random.split(key, 3)

    params = make_params(k_param, num_classes, src_dim, hidden_dim, filter_dim, layer_num)
    prepped = prepare_params(params)
    src = jax.random.normal(k_src, (batch, src_len, src_dim), jnp.float32)
    text = jax.random.randint(k_text, (batch, seq), 0, num_classes + 1)

    fwd = jax.jit(functools.partial(transformer_decoder_forward,
                                    head_num=head_num, pad_id=pad_id))
    out = fwd(prepped, src, text)
    out = jax.block_until_ready(out)
    assert out.shape == (batch, seq, num_classes)
    assert bool(jnp.all(jnp.isfinite(out)))
    # TODO(synk): autoregressive (is_train=False) greedy-decode loop not implemented;
    # only the teacher-forcing training path is reproduced.
    print("KERNEL_OK")
</pallas_src>

<mosaic_0001>
module attributes {stable_mosaic.version = 11 : i64} {
  func.func @_matmul_kernel(%arg0: i32, %arg1: i32, %arg2: i32, %arg3: memref<16x128xbf16, #tpu.memory_space<vmem>>, %arg4: memref<128x128xbf16, #tpu.memory_space<vmem>>, %arg5: memref<1x128xf32, #tpu.memory_space<vmem>>, %arg6: memref<16x128xbf16, #tpu.memory_space<vmem>>, %arg7: memref<16x128xf32, #tpu.memory_space<vmem>>) attributes {dimension_semantics = [#tpu.dimension_semantics<parallel>, #tpu.dimension_semantics<parallel>, #tpu.dimension_semantics<arbitrary>], iteration_bounds = array<i64: 1, 1, 1>, scalar_prefetch = 0 : i64, scratch_operands = 1 : i64, tpu.core_type = #tpu.core_type<tc>, window_params = [{transform_indices = @transform_0, window_bounds = array<i64: 16, 128>}, {transform_indices = @transform_1, window_bounds = array<i64: 128, 128>}, {transform_indices = @transform_2, window_bounds = array<i64: 1, 128>}, {transform_indices = @transform_3, window_bounds = array<i64: 16, 128>}]} {
    %c0_i32 = arith.constant 0 : i32
    %0 = arith.cmpi eq, %arg2, %c0_i32 : i32
    %1 = arith.extui %0 : i1 to i32
    %c0_i32_0 = arith.constant 0 : i32
    %2 = arith.cmpi ne, %1, %c0_i32_0 : i32
    scf.if %2 {
      %cst_10 = arith.constant 0.000000e+00 : f32
      %12 = vector.broadcast %cst_10 : f32 to vector<16x128xf32>
      %c0_11 = arith.constant 0 : index
      %c0_12 = arith.constant 0 : index
      %13 = vector.load %arg7[%c0_11, %c0_12] : memref<16x128xf32, #tpu.memory_space<vmem>>, vector<16x128xf32>
      tpu.vector_store %arg7[%c0_11, %c0_12], %12 {strides = array<i32>} : memref<16x128xf32, #tpu.memory_space<vmem>>, vector<16x128xf32>,
    } else {
    }
    %c0 = arith.constant 0 : index
    %c0_1 = arith.constant 0 : index
    %3 = vector.load %arg7[%c0, %c0_1] : memref<16x128xf32, #tpu.memory_space<vmem>>, vector<16x128xf32>
    %c0_2 = arith.constant 0 : index
    %c0_3 = arith.constant 0 : index
    %4 = vector.load %arg3[%c0_2, %c0_3] : memref<16x128xbf16, #tpu.memory_space<vmem>>, vector<16x128xbf16>
    %c0_4 = arith.constant 0 : index
    %c0_5 = arith.constant 0 : index
    %5 = vector.load %arg4[%c0_4, %c0_5] : memref<128x128xbf16, #tpu.memory_space<vmem>>, vector<128x128xbf16>
    %cst = arith.constant dense<0.000000e+00> : vector<16x128xf32>
    %6 = tpu.matmul %4, %5, %cst {dimension_numbers = #tpu.dot_dimension_numbers<[1], [0], [0], [1], [0, 0, 1, 1], [], []>} : vector<16x128xbf16>, vector<128x128xbf16>, vector<16x128xf32> -> vector<16x128xf32>
    %7 = arith.addf %3, %6 : vector<16x128xf32>
    %c0_6 = arith.constant 0 : index
    %c0_7 = arith.constant 0 : index
    %8 = vector.load %arg7[%c0_6, %c0_7] : memref<16x128xf32, #tpu.memory_space<vmem>>, vector<16x128xf32>
    tpu.vector_store %arg7[%c0_6, %c0_7], %7 {strides = array<i32>} : memref<16x128xf32, #tpu.memory_space<vmem>>, vector<16x128xf32>,
    %c0_i32_8 = arith.constant 0 : i32
    %9 = arith.cmpi eq, %arg2, %c0_i32_8 : i32
    %10 = arith.extui %9 : i1 to i32
    %c0_i32_9 = arith.constant 0 : i32
    %11 = arith.cmpi ne, %10, %c0_i32_9 : i32
    scf.if %11 {
      %c0_10 = arith.constant 0 : index
      %c0_11 = arith.constant 0 : index
      %12 = vector.load %arg7[%c0_10, %c0_11] : memref<16x128xf32, #tpu.memory_space<vmem>>, vector<16x128xf32>
      %c0_12 = arith.constant 0 : index
      %c0_13 = arith.constant 0 : index
      %13 = vector.load %arg5[%c0_12, %c0_13] : memref<1x128xf32, #tpu.memory_space<vmem>>, vector<1x128xf32>
      %14 = vector.broadcast %13 : vector<1x128xf32> to vector<16x128xf32>
      %15 = arith.addf %12, %14 : vector<16x128xf32>
      %16 = arith.truncf %15 : vector<16x128xf32> to vector<16x128xbf16>
      %c0_14 = arith.constant 0 : index
      %c0_15 = arith.constant 0 : index
      %17 = vector.load %arg6[%c0_14, %c0_15] : memref<16x128xbf16, #tpu.memory_space<vmem>>, vector<16x128xbf16>
      tpu.vector_store %arg6[%c0_14, %c0_15], %16 {strides = array<i32>} : memref<16x128xbf16, #tpu.memory_space<vmem>>, vector<16x128xbf16>,
    } else {
    }
    return
  }
  func.func @transform_0(%arg0: i32, %arg1: i32, %arg2: i32) -> (i32, i32) {
    %c0_i32 = arith.constant 0 : i32
    return %arg0, %arg2 : i32, i32
  }
  func.func @transform_1(%arg0: i32, %arg1: i32, %arg2: i32) -> (i32, i32) {
    %c0_i32 = arith.constant 0 : i32
    return %arg2, %arg1 : i32, i32
  }
  func.func @transform_2(%arg0: i32, %arg1: i32, %arg2: i32) -> (i32, i32) {
    %c0_i32 = arith.constant 0 : i32
    %c0_i32_0 = arith.constant 0 : i32
    return %c0_i32, %arg1 : i32, i32
  }
  func.func @transform_3(%arg0: i32, %arg1: i32, %arg2: i32) -> (i32, i32) {
    %c0_i32 = arith.constant 0 : i32
    return %arg0, %arg1 : i32, i32
  }
}

module attributes {stable_mosaic.version = 11 : i64} {
  func.func @_self_attn_kernel(%arg0: i32, %arg1: memref<1x8x96xbf16, #tpu.memory_space<vmem>>, %arg2: memref<1x8x8xf32, #tpu.memory_space<vmem>>, %arg3: memref<1x8x32xbf16, #tpu.memory_space<vmem>>) attributes {dimension_semantics = [#tpu.dimension_semantics<parallel>], iteration_bounds = array<i64: 2>, scalar_prefetch = 0 : i64, scratch_operands = 0 : i64, tpu.core_type = #tpu.core_type<tc>, window_params = [{transform_indices = @transform_0, window_bounds = array<i64: 1, 8, 96>}, {transform_indices = @transform_1, window_bounds = array<i64: 1, 8, 8>}, {transform_indices = @transform_2, window_bounds = array<i64: 1, 8, 32>}]} {
    %c0 = arith.constant 0 : index
    %c0_0 = arith.constant 0 : index
    %c0_1 = arith.constant 0 : index
    %0 = vector.load %arg2[%c0, %c0_0, %c0_1] : memref<1x8x8xf32, #tpu.memory_space<vmem>>, vector<1x8x8xf32>
    %1 = vector.shape_cast %0 : vector<1x8x8xf32> to vector<8x8xf32>
    %c0_2 = arith.constant 0 : index
    %c0_3 = arith.constant 0 : index
    %c0_4 = arith.constant 0 : index
    %2 = vector.load %arg1[%c0_2, %c0_3, %c0_4] : memref<1x8x96xbf16, #tpu.memory_space<vmem>>, vector<1x8x8xbf16>
    %3 = vector.shape_cast %2 : vector<1x8x8xbf16> to vector<8x8xbf16>
    %c0_5 = arith.constant 0 : index
    %c0_6 = arith.constant 0 : index
    %c32 = arith.constant 32 : index
    %4 = vector.load %arg1[%c0_5, %c0_6, %c32] : memref<1x8x96xbf16, #tpu.memory_space<vmem>>, vector<1x8x8xbf16>
    %5 = vector.shape_cast %4 : vector<1x8x8xbf16> to vector<8x8xbf16>
    %c0_7 = arith.constant 0 : index
    %c0_8 = arith.constant 0 : index
    %c64 = arith.constant 64 : index
    %6 = vector.load %arg1[%c0_7, %c0_8, %c64] : memref<1x8x96xbf16, #tpu.memory_space<vmem>>, vector<1x8x8xbf16>
    %7 = vector.shape_cast %6 : vector<1x8x8xbf16> to vector<8x8xbf16>
    %cst = arith.constant dense<0.000000e+00> : vector<8x8xf32>
    %8 = tpu.matmul %3, %5, %cst {dimension_numbers = #tpu.dot_dimension_numbers<[1], [1], [0], [0], [0, 0, 1, 0], [], []>} : vector<8x8xbf16>, vector<8x8xbf16>, vector<8x8xf32> -> vector<8x8xf32>
    %9 = arith.addf %8, %1 : vector<8x8xf32>
    %cst_9 = arith.constant dense<0xFF800000> : vector<8xf32>
    %10 = vector.multi_reduction <maximumf>, %9, %cst_9 [1] : vector<8x8xf32> to vector<8xf32>
    %11 = vector.shape_cast %10 : vector<8xf32> to vector<8x1xf32>
    %12 = vector.broadcast %11 : vector<8x1xf32> to vector<8x8xf32>
    %13 = arith.subf %9, %12 : vector<8x8xf32>
    %14 = math.exp %13 : vector<8x8xf32>
    %cst_10 = arith.constant dense<0.000000e+00> : vector<8xf32>
    %15 = vector.multi_reduction <add>, %14, %cst_10 [1] : vector<8x8xf32> to vector<8xf32>
    %16 = vector.shape_cast %15 : vector<8xf32> to vector<8x1xf32>
    %17 = tpu.reciprocal %16 {approx = true} : vector<8x1xf32> -> vector<8x1xf32>
    %18 = vector.broadcast %17 : vector<8x1xf32> to vector<8x8xf32>
    %19 = arith.mulf %14, %18 : vector<8x8xf32>
    %20 = arith.truncf %19 : vector<8x8xf32> to vector<8x8xbf16>
    %cst_11 = arith.constant dense<0.000000e+00> : vector<8x8xf32>
    %21 = tpu.matmul %20, %7, %cst_11 {dimension_numbers = #tpu.dot_dimension_numbers<[1], [0], [0], [1], [0, 0, 1, 1], [], []>} : vector<8x8xbf16>, vector<8x8xbf16>, vector<8x8xf32> -> vector<8x8xf32>
    %22 = arith.truncf %21 : vector<8x8xf32> to vector<8x8xbf16>
    %c0_12 = arith.constant 0 : index
    %c0_13 = arith.constant 0 : index
    %c0_14 = arith.constant 0 : index
    %23 = vector.load %arg3[%c0_12, %c0_13, %c0_14] : memref<1x8x32xbf16, #tpu.memory_space<vmem>>, vector<1x8x8xbf16>
    %24 = vector.shape_cast %23 : vector<1x8x8xbf16> to vector<8x8xbf16>
    %25 = vector.shape_cast %22 : vector<8x8xbf16> to vector<1x8x8xbf16>
    tpu.vector_store %arg3[%c0_12, %c0_13, %c0_14], %25 {strides = array<i32>} : memref<1x8x32xbf16, #tpu.memory_space<vmem>>, vector<1x8x8xbf16>,
    %c0_15 = arith.constant 0 : index
    %c0_16 = arith.constant 0 : index
    %c8 = arith.constant 8 : index
    %26 = vector.load %arg1[%c0_15, %c0_16, %c8] : memref<1x8x96xbf16, #tpu.memory_space<vmem>>, vector<1x8x8xbf16>
    %27 = vector.shape_cast %26 : vector<1x8x8xbf16> to vector<8x8xbf16>
    %c0_17 = arith.constant 0 : index
    %c0_18 = arith.constant 0 : index
    %c40 = arith.constant 40 : index
    %28 = vector.load %arg1[%c0_17, %c0_18, %c40] : memref<1x8x96xbf16, #tpu.memory_space<vmem>>, vector<1x8x8xbf16>
    %29 = vector.shape_cast %28 : vector<1x8x8xbf16> to vector<8x8xbf16>
    %c0_19 = arith.constant 0 : index
    %c0_20 = arith.constant 0 : index
    %c72 = arith.constant 72 : index
    %30 = vector.load %arg1[%c0_19, %c0_20, %c72] : memref<1x8x96xbf16, #tpu.memory_space<vmem>>, vector<1x8x8xbf16>
    %31 = vector.shape_cast %30 : vector<1x8x8xbf16> to vector<8x8xbf16>
    %cst_21 = arith.constant dense<0.000000e+00> : vector<8x8xf32>
    %32 = tpu.matmul %27, %29, %cst_21 {dimension_numbers = #tpu.dot_dimension_numbers<[1], [1], [0], [0], [0, 0, 1, 0], [], []>} : vector<8x8xbf16>, vector<8x8xbf16>, vector<8x8xf32> -> vector<8x8xf32>
    %33 = arith.addf %32, %1 : vector<8x8xf32>
    %cst_22 = arith.constant dense<0xFF800000> : vector<8xf32>
    %34 = vector.multi_reduction <maximumf>, %33, %cst_22 [1] : vector<8x8xf32> to vector<8xf32>
    %35 = vector.shape_cast %34 : vector<8xf32> to vector<8x1xf32>
    %36 = vector.broadcast %35 : vector<8x1xf32> to vector<8x8xf32>
    %37 = arith.subf %33, %36 : vector<8x8xf32>
    %38 = math.exp %37 : vector<8x8xf32>
    %cst_23 = arith.constant dense<0.000000e+00> : vector<8xf32>
    %39 = vector.multi_reduction <add>, %38, %cst_23 [1] : vector<8x8xf32> to vector<8xf32>
    %40 = vector.shape_cast %39 : vector<8xf32> to vector<8x1xf32>
    %41 = tpu.reciprocal %40 {approx = true} : vector<8x1xf32> -> vector<8x1xf32>
    %42 = vector.broadcast %41 : vector<8x1xf32> to vector<8x8xf32>
    %43 = arith.mulf %38, %42 : vector<8x8xf32>
    %44 = arith.truncf %43 : vector<8x8xf32> to vector<8x8xbf16>
    %cst_24 = arith.constant dense<0.000000e+00> : vector<8x8xf32>
    %45 = tpu.matmul %44, %31, %cst_24 {dimension_numbers = #tpu.dot_dimension_numbers<[1], [0], [0], [1], [0, 0, 1, 1], [], []>} : vector<8x8xbf16>, vector<8x8xbf16>, vector<8x8xf32> -> vector<8x8xf32>
    %46 = arith.truncf %45 : vector<8x8xf32> to vector<8x8xbf16>
    %c0_25 = arith.constant 0 : index
    %c0_26 = arith.constant 0 : index
    %c8_27 = arith.constant 8 : index
    %47 = vector.load %arg3[%c0_25, %c0_26, %c8_27] : memref<1x8x32xbf16, #tpu.memory_space<vmem>>, vector<1x8x8xbf16>
    %48 = vector.shape_cast %47 : vector<1x8x8xbf16> to vector<8x8xbf16>
    %49 = vector.shape_cast %46 : vector<8x8xbf16> to vector<1x8x8xbf16>
    tpu.vector_store %arg3[%c0_25, %c0_26, %c8_27], %49 {strides = array<i32>} : memref<1x8x32xbf16, #tpu.memory_space<vmem>>, vector<1x8x8xbf16>,
    %c0_28 = arith.constant 0 : index
    %c0_29 = arith.constant 0 : index
    %c16 = arith.constant 16 : index
    %50 = vector.load %arg1[%c0_28, %c0_29, %c16] : memref<1x8x96xbf16, #tpu.memory_space<vmem>>, vector<1x8x8xbf16>
    %51 = vector.shape_cast %50 : vector<1x8x8xbf16> to vector<8x8xbf16>
    %c0_30 = arith.constant 0 : index
    %c0_31 = arith.constant 0 : index
    %c48 = arith.constant 48 : index
    %52 = vector.load %arg1[%c0_30, %c0_31, %c48] : memref<1x8x96xbf16, #tpu.memory_space<vmem>>, vector<1x8x8xbf16>
    %53 = vector.shape_cast %52 : vector<1x8x8xbf16> to vector<8x8xbf16>
    %c0_32 = arith.constant 0 : index
    %c0_33 = arith.constant 0 : index
    %c80 = arith.constant 80 : index
    %54 = vector.load %arg1[%c0_32, %c0_33, %c80] : memref<1x8x96xbf16, #tpu.memory_space<vmem>>, vector<1x8x8xbf16>
    %55 = vector.shape_cast %54 : vector<1x8x8xbf16> to vector<8x8xbf16>
    %cst_34 = arith.constant dense<0.000000e+00> : vector<8x8xf32>
    %56 = tpu.matmul %51, %53, %cst_34 {dimension_numbers = #tpu.dot_dimension_numbers<[1], [1], [0], [0], [0, 0, 1, 0], [], []>} : vector<8x8xbf16>, vector<8x8xbf16>, vector<8x8xf32> -> vector<8x8xf32>
    %57 = arith.addf %56, %1 : vector<8x8xf32>
    %cst_35 = arith.constant dense<0xFF800000> : vector<8xf32>
    %58 = vector.multi_reduction <maximumf>, %57, %cst_35 [1] : vector<8x8xf32> to vector<8xf32>
    %59 = vector.shape_cast %58 : vector<8xf32> to vector<8x1xf32>
    %60 = vector.broadcast %59 : vector<8x1xf32> to vector<8x8xf32>
    %61 = arith.subf %57, %60 : vector<8x8xf32>
    %62 = math.exp %61 : vector<8x8xf32>
    %cst_36 = arith.constant dense<0.000000e+00> : vector<8xf32>
    %63 = vector.multi_reduction <add>, %62, %cst_36 [1] : vector<8x8xf32> to vector<8xf32>
    %64 = vector.shape_cast %63 : vector<8xf32> to vector<8x1xf32>
    %65 = tpu.reciprocal %64 {approx = true} : vector<8x1xf32> -> vector<8x1xf32>
    %66 = vector.broadcast %65 : vector<8x1xf32> to vector<8x8xf32>
    %67 = arith.mulf %62, %66 : vector<8x8xf32>
    %68 = arith.truncf %67 : vector<8x8xf32> to vector<8x8xbf16>
    %cst_37 = arith.constant dense<0.000000e+00> : vector<8x8xf32>
    %69 = tpu.matmul %68, %55, %cst_37 {dimension_numbers = #tpu.dot_dimension_numbers<[1], [0], [0], [1], [0, 0, 1, 1], [], []>} : vector<8x8xbf16>, vector<8x8xbf16>, vector<8x8xf32> -> vector<8x8xf32>
    %70 = arith.truncf %69 : vector<8x8xf32> to vector<8x8xbf16>
    %c0_38 = arith.constant 0 : index
    %c0_39 = arith.constant 0 : index
    %c16_40 = arith.constant 16 : index
    %71 = vector.load %arg3[%c0_38, %c0_39, %c16_40] : memref<1x8x32xbf16, #tpu.memory_space<vmem>>, vector<1x8x8xbf16>
    %72 = vector.shape_cast %71 : vector<1x8x8xbf16> to vector<8x8xbf16>
    %73 = vector.shape_cast %70 : vector<8x8xbf16> to vector<1x8x8xbf16>
    tpu.vector_store %arg3[%c0_38, %c0_39, %c16_40], %73 {strides = array<i32>} : memref<1x8x32xbf16, #tpu.memory_space<vmem>>, vector<1x8x8xbf16>,
    %c0_41 = arith.constant 0 : index
    %c0_42 = arith.constant 0 : index
    %c24 = arith.constant 24 : index
    %74 = vector.load %arg1[%c0_41, %c0_42, %c24] : memref<1x8x96xbf16, #tpu.memory_space<vmem>>, vector<1x8x8xbf16>
    %75 = vector.shape_cast %74 : vector<1x8x8xbf16> to vector<8x8xbf16>
    %c0_43 = arith.constant 0 : index
    %c0_44 = arith.constant 0 : index
    %c56 = arith.constant 56 : index
    %76 = vector.load %arg1[%c0_43, %c0_44, %c56] : memref<1x8x96xbf16, #tpu.memory_space<vmem>>, vector<1x8x8xbf16>
    %77 = vector.shape_cast %76 : vector<1x8x8xbf16> to vector<8x8xbf16>
    %c0_45 = arith.constant 0 : index
    %c0_46 = arith.constant 0 : index
    %c88 = arith.constant 88 : index
    %78 = vector.load %arg1[%c0_45, %c0_46, %c88] : memref<1x8x96xbf16, #tpu.memory_space<vmem>>, vector<1x8x8xbf16>
    %79 = vector.shape_cast %78 : vector<1x8x8xbf16> to vector<8x8xbf16>
    %cst_47 = arith.constant dense<0.000000e+00> : vector<8x8xf32>
    %80 = tpu.matmul %75, %77, %cst_47 {dimension_numbers = #tpu.dot_dimension_numbers<[1], [1], [0], [0], [0, 0, 1, 0], [], []>} : vector<8x8xbf16>, vector<8x8xbf16>, vector<8x8xf32> -> vector<8x8xf32>
    %81 = arith.addf %80, %1 : vector<8x8xf32>
    %cst_48 = arith.constant dense<0xFF800000> : vector<8xf32>
    %82 = vector.multi_reduction <maximumf>, %81, %cst_48 [1] : vector<8x8xf32> to vector<8xf32>
    %83 = vector.shape_cast %82 : vector<8xf32> to vector<8x1xf32>
    %84 = vector.broadcast %83 : vector<8x1xf32> to vector<8x8xf32>
    %85 = arith.subf %81, %84 : vector<8x8xf32>
    %86 = math.exp %85 : vector<8x8xf32>
    %cst_49 = arith.constant dense<0.000000e+00> : vector<8xf32>
    %87 = vector.multi_reduction <add>, %86, %cst_49 [1] : vector<8x8xf32> to vector<8xf32>
    %88 = vector.shape_cast %87 : vector<8xf32> to vector<8x1xf32>
    %89 = tpu.reciprocal %88 {approx = true} : vector<8x1xf32> -> vector<8x1xf32>
    %90 = vector.broadcast %89 : vector<8x1xf32> to vector<8x8xf32>
    %91 = arith.mulf %86, %90 : vector<8x8xf32>
    %92 = arith.truncf %91 : vector<8x8xf32> to vector<8x8xbf16>
    %cst_50 = arith.constant dense<0.000000e+00> : vector<8x8xf32>
    %93 = tpu.matmul %92, %79, %cst_50 {dimension_numbers = #tpu.dot_dimension_numbers<[1], [0], [0], [1], [0, 0, 1, 1], [], []>} : vector<8x8xbf16>, vector<8x8xbf16>, vector<8x8xf32> -> vector<8x8xf32>
    %94 = arith.truncf %93 : vector<8x8xf32> to vector<8x8xbf16>
    %c0_51 = arith.constant 0 : index
    %c0_52 = arith.constant 0 : index
    %c24_53 = arith.constant 24 : index
    %95 = vector.load %arg3[%c0_51, %c0_52, %c24_53] : memref<1x8x32xbf16, #tpu.memory_space<vmem>>, vector<1x8x8xbf16>
    %96 = vector.shape_cast %95 : vector<1x8x8xbf16> to vector<8x8xbf16>
    %97 = vector.shape_cast %94 : vector<8x8xbf16> to vector<1x8x8xbf16>
    tpu.vector_store %arg3[%c0_51, %c0_52, %c24_53], %97 {strides = array<i32>} : memref<1x8x32xbf16, #tpu.memory_space<vmem>>, vector<1x8x8xbf16>,
    return
  }
  func.func @transform_0(%arg0: i32) -> (i32, i32, i32) {
    %c0_i32 = arith.constant 0 : i32
    %c0_i32_0 = arith.constant 0 : i32
    %c0_i32_1 = arith.constant 0 : i32
    return %arg0, %c0_i32, %c0_i32_0 : i32, i32, i32
  }
  func.func @transform_1(%arg0: i32) -> (i32, i32, i32) {
    %c0_i32 = arith.constant 0 : i32
    %c0_i32_0 = arith.constant 0 : i32
    %c0_i32_1 = arith.constant 0 : i32
    return %arg0, %c0_i32, %c0_i32_0 : i32, i32, i32
  }
  func.func @transform_2(%arg0: i32) -> (i32, i32, i32) {
    %c0_i32 = arith.constant 0 : i32
    %c0_i32_0 = arith.constant 0 : i32
    %c0_i32_1 = arith.constant 0 : i32
    return %arg0, %c0_i32, %c0_i32_0 : i32, i32, i32
  }
}

module attributes {stable_mosaic.version = 11 : i64} {
  func.func @_matmul_res_ln_kernel(%arg0: i32, %arg1: i32, %arg2: memref<16x128xbf16, #tpu.memory_space<vmem>>, %arg3: memref<128x32xbf16, #tpu.memory_space<vmem>>, %arg4: memref<1x32xf32, #tpu.memory_space<vmem>>, %arg5: memref<16x32xbf16, #tpu.memory_space<vmem>>, %arg6: memref<1x32xf32, #tpu.memory_space<vmem>>, %arg7: memref<1x32xf32, #tpu.memory_space<vmem>>, %arg8: memref<16x32xbf16, #tpu.memory_space<vmem>>, %arg9: memref<16x32xf32, #tpu.memory_space<vmem>>) attributes {dimension_semantics = [#tpu.dimension_semantics<parallel>, #tpu.dimension_semantics<arbitrary>], iteration_bounds = array<i64: 1, 1>, scalar_prefetch = 0 : i64, scratch_operands = 1 : i64, tpu.core_type = #tpu.core_type<tc>, window_params = [{transform_indices = @transform_0, window_bounds = array<i64: 16, 128>}, {transform_indices = @transform_1, window_bounds = array<i64: 128, 32>}, {pipeline_mode = #tpu.pipeline_mode<synchronous>, transform_indices = @transform_2, window_bounds = array<i64: 1, 32>}, {transform_indices = @transform_3, window_bounds = array<i64: 16, 32>}, {pipeline_mode = #tpu.pipeline_mode<synchronous>, transform_indices = @transform_4, window_bounds = array<i64: 1, 32>}, {pipeline_mode = #tpu.pipeline_mode<synchronous>, transform_indices = @transform_5, window_bounds = array<i64: 1, 32>}, {transform_indices = @transform_6, window_bounds = array<i64: 16, 32>}]} {
    %c0_i32 = arith.constant 0 : i32
    %0 = arith.cmpi eq, %arg1, %c0_i32 : i32
    %1 = arith.extui %0 : i1 to i32
    %c0_i32_0 = arith.constant 0 : i32
    %2 = arith.cmpi ne, %1, %c0_i32_0 : i32
    scf.if %2 {
      %cst_10 = arith.constant 0.000000e+00 : f32
      %12 = vector.broadcast %cst_10 : f32 to vector<16x32xf32>
      %c0_11 = arith.constant 0 : index
      %c0_12 = arith.constant 0 : index
      %13 = vector.load %arg9[%c0_11, %c0_12] : memref<16x32xf32, #tpu.memory_space<vmem>>, vector<16x32xf32>
      tpu.vector_store %arg9[%c0_11, %c0_12], %12 {strides = array<i32>} : memref<16x32xf32, #tpu.memory_space<vmem>>, vector<16x32xf32>,
    } else {
    }
    %c0 = arith.constant 0 : index
    %c0_1 = arith.constant 0 : index
    %3 = vector.load %arg9[%c0, %c0_1] : memref<16x32xf32, #tpu.memory_space<vmem>>, vector<16x32xf32>
    %c0_2 = arith.constant 0 : index
    %c0_3 = arith.constant 0 : index
    %4 = vector.load %arg2[%c0_2, %c0_3] : memref<16x128xbf16, #tpu.memory_space<vmem>>, vector<16x128xbf16>
    %c0_4 = arith.constant 0 : index
    %c0_5 = arith.constant 0 : index
    %5 = vector.load %arg3[%c0_4, %c0_5] : memref<128x32xbf16, #tpu.memory_space<vmem>>, vector<128x32xbf16>
    %cst = arith.constant dense<0.000000e+00> : vector<16x32xf32>
    %6 = tpu.matmul %4, %5, %cst {dimension_numbers = #tpu.dot_dimension_numbers<[1], [0], [0], [1], [0, 0, 1, 1], [], []>} : vector<16x128xbf16>, vector<128x32xbf16>, vector<16x32xf32> -> vector<16x32xf32>
    %7 = arith.addf %3, %6 : vector<16x32xf32>
    %c0_6 = arith.constant 0 : index
    %c0_7 = arith.constant 0 : index
    %8 = vector.load %arg9[%c0_6, %c0_7] : memref<16x32xf32, #tpu.memory_space<vmem>>, vector<16x32xf32>
    tpu.vector_store %arg9[%c0_6, %c0_7], %7 {strides = array<i32>} : memref<16x32xf32, #tpu.memory_space<vmem>>, vector<16x32xf32>,
    %c0_i32_8 = arith.constant 0 : i32
    %9 = arith.cmpi eq, %arg1, %c0_i32_8 : i32
    %10 = arith.extui %9 : i1 to i32
    %c0_i32_9 = arith.constant 0 : i32
    %11 = arith.cmpi ne, %10, %c0_i32_9 : i32
    scf.if %11 {
      %c0_10 = arith.constant 0 : index
      %c0_11 = arith.constant 0 : index
      %12 = vector.load %arg9[%c0_10, %c0_11] : memref<16x32xf32, #tpu.memory_space<vmem>>, vector<16x32xf32>
      %c0_12 = arith.constant 0 : index
      %c0_13 = arith.constant 0 : index
      %13 = vector.load %arg4[%c0_12, %c0_13] : memref<1x32xf32, #tpu.memory_space<vmem>>, vector<1x32xf32>
      %14 = vector.broadcast %13 : vector<1x32xf32> to vector<16x32xf32>
      %15 = arith.addf %12, %14 : vector<16x32xf32>
      %c0_14 = arith.constant 0 : index
      %c0_15 = arith.constant 0 : index
      %16 = vector.load %arg5[%c0_14, %c0_15] : memref<16x32xbf16, #tpu.memory_space<vmem>>, vector<16x32xbf16>
      %17 = arith.extf %16 : vector<16x32xbf16> to vector<16x32xf32>
      %18 = arith.addf %15, %17 : vector<16x32xf32>
      %cst_16 = arith.constant dense<0.000000e+00> : vector<16xf32>
      %19 = vector.multi_reduction <add>, %18, %cst_16 [1] : vector<16x32xf32> to vector<16xf32>
      %20 = vector.shape_cast %19 : vector<16xf32> to vector<16x1xf32>
      %cst_17 = arith.constant 3.200000e+01 : f32
      %21 = vector.broadcast %cst_17 : f32 to vector<16x1xf32>
      %22 = arith.divf %20, %21 : vector<16x1xf32>
      %23 = vector.broadcast %22 : vector<16x1xf32> to vector<16x32xf32>
      %24 = arith.subf %18, %23 : vector<16x32xf32>
      %25 = arith.mulf %24, %24 : vector<16x32xf32>
      %cst_18 = arith.constant dense<0.000000e+00> : vector<16xf32>
      %26 = vector.multi_reduction <add>, %25, %cst_18 [1] : vector<16x32xf32> to vector<16xf32>
      %27 = vector.shape_cast %26 : vector<16xf32> to vector<16x1xf32>
      %cst_19 = arith.constant 3.200000e+01 : f32
      %28 = vector.broadcast %cst_19 : f32 to vector<16x1xf32>
      %29 = arith.divf %27, %28 : vector<16x1xf32>
      %cst_20 = arith.constant 9.99999974E-6 : f32
      %30 = vector.broadcast %cst_20 : f32 to vector<16x1xf32>
      %31 = arith.addf %29, %30 : vector<16x1xf32>
      %32 = math.rsqrt %31 : vector<16x1xf32>
      %33 = vector.broadcast %32 : vector<16x1xf32> to vector<16x32xf32>
      %34 = arith.mulf %24, %33 : vector<16x32xf32>
      %c0_21 = arith.constant 0 : index
      %c0_22 = arith.constant 0 : index
      %35 = vector.load %arg6[%c0_21, %c0_22] : memref<1x32xf32, #tpu.memory_space<vmem>>, vector<1x32xf32>
      %36 = vector.broadcast %35 : vector<1x32xf32> to vector<16x32xf32>
      %37 = arith.mulf %34, %36 : vector<16x32xf32>
      %c0_23 = arith.constant 0 : index
      %c0_24 = arith.constant 0 : index
      %38 = vector.load %arg7[%c0_23, %c0_24] : memref<1x32xf32, #tpu.memory_space<vmem>>, vector<1x32xf32>
      %39 = vector.broadcast %38 : vector<1x32xf32> to vector<16x32xf32>
      %40 = arith.addf %37, %39 : vector<16x32xf32>
      %41 = arith.truncf %40 : vector<16x32xf32> to vector<16x32xbf16>
      %c0_25 = arith.constant 0 : index
      %c0_26 = arith.constant 0 : index
      %42 = vector.load %arg8[%c0_25, %c0_26] : memref<16x32xbf16, #tpu.memory_space<vmem>>, vector<16x32xbf16>
      tpu.vector_store %arg8[%c0_25, %c0_26], %41 {strides = array<i32>} : memref<16x32xbf16, #tpu.memory_space<vmem>>, vector<16x32xbf16>,
    } else {
    }
    return
  }
  func.func @transform_0(%arg0: i32, %arg1: i32) -> (i32, i32) {
    %c0_i32 = arith.constant 0 : i32
    return %arg0, %arg1 : i32, i32
  }
  func.func @transform_1(%arg0: i32, %arg1: i32) -> (i32, i32) {
    %c0_i32 = arith.constant 0 : i32
    %c0_i32_0 = arith.constant 0 : i32
    return %arg1, %c0_i32 : i32, i32
  }
  func.func @transform_2(%arg0: i32, %arg1: i32) -> (i32, i32) {
    %c0_i32 = arith.constant 0 : i32
    %c0_i32_0 = arith.constant 0 : i32
    %c0_i32_1 = arith.constant 0 : i32
    return %c0_i32, %c0_i32_0 : i32, i32
  }
  func.func @transform_3(%arg0: i32, %arg1: i32) -> (i32, i32) {
    %c0_i32 = arith.constant 0 : i32
    %c0_i32_0 = arith.constant 0 : i32
    return %arg0, %c0_i32 : i32, i32
  }
  func.func @transform_4(%arg0: i32, %arg1: i32) -> (i32, i32) {
    %c0_i32 = arith.constant 0 : i32
    %c0_i32_0 = arith.constant 0 : i32
    %c0_i32_1 = arith.constant 0 : i32
    return %c0_i32, %c0_i32_0 : i32, i32
  }
  func.func @transform_5(%arg0: i32, %arg1: i32) -> (i32, i32) {
    %c0_i32 = arith.constant 0 : i32
    %c0_i32_0 = arith.constant 0 : i32
    %c0_i32_1 = arith.constant 0 : i32
    return %c0_i32, %c0_i32_0 : i32, i32
  }
  func.func @transform_6(%arg0: i32, %arg1: i32) -> (i32, i32) {
    %c0_i32 = arith.constant 0 : i32
    %c0_i32_0 = arith.constant 0 : i32
    return %arg0, %c0_i32 : i32, i32
  }
}

module attributes {stable_mosaic.version = 11 : i64} {
  func.func @_matmul_kernel(%arg0: i32, %arg1: i32, %arg2: i32, %arg3: memref<32x128xbf16, #tpu.memory_space<vmem>>, %arg4: memref<128x128xbf16, #tpu.memory_space<vmem>>, %arg5: memref<1x128xf32, #tpu.memory_space<vmem>>, %arg6: memref<32x128xbf16, #tpu.memory_space<vmem>>, %arg7: memref<32x128xf32, #tpu.memory_space<vmem>>) attributes {dimension_semantics = [#tpu.dimension_semantics<parallel>, #tpu.dimension_semantics<parallel>, #tpu.dimension_semantics<arbitrary>], iteration_bounds = array<i64: 1, 1, 1>, scalar_prefetch = 0 : i64, scratch_operands = 1 : i64, tpu.core_type = #tpu.core_type<tc>, window_params = [{transform_indices = @transform_0, window_bounds = array<i64: 32, 128>}, {transform_indices = @transform_1, window_bounds = array<i64: 128, 128>}, {transform_indices = @transform_2, window_bounds = array<i64: 1, 128>}, {transform_indices = @transform_3, window_bounds = array<i64: 32, 128>}]} {
    %c0_i32 = arith.constant 0 : i32
    %0 = arith.cmpi eq, %arg2, %c0_i32 : i32
    %1 = arith.extui %0 : i1 to i32
    %c0_i32_0 = arith.constant 0 : i32
    %2 = arith.cmpi ne, %1, %c0_i32_0 : i32
    scf.if %2 {
      %cst_10 = arith.constant 0.000000e+00 : f32
      %12 = vector.broadcast %cst_10 : f32 to vector<32x128xf32>
      %c0_11 = arith.constant 0 : index
      %c0_12 = arith.constant 0 : index
      %13 = vector.load %arg7[%c0_11, %c0_12] : memref<32x128xf32, #tpu.memory_space<vmem>>, vector<32x128xf32>
      tpu.vector_store %arg7[%c0_11, %c0_12], %12 {strides = array<i32>} : memref<32x128xf32, #tpu.memory_space<vmem>>, vector<32x128xf32>,
    } else {
    }
    %c0 = arith.constant 0 : index
    %c0_1 = arith.constant 0 : index
    %3 = vector.load %arg7[%c0, %c0_1] : memref<32x128xf32, #tpu.memory_space<vmem>>, vector<32x128xf32>
    %c0_2 = arith.constant 0 : index
    %c0_3 = arith.constant 0 : index
    %4 = vector.load %arg3[%c0_2, %c0_3] : memref<32x128xbf16, #tpu.memory_space<vmem>>, vector<32x128xbf16>
    %c0_4 = arith.constant 0 : index
    %c0_5 = arith.constant 0 : index
    %5 = vector.load %arg4[%c0_4, %c0_5] : memref<128x128xbf16, #tpu.memory_space<vmem>>, vector<128x128xbf16>
    %cst = arith.constant dense<0.000000e+00> : vector<32x128xf32>
    %6 = tpu.matmul %4, %5, %cst {dimension_numbers = #tpu.dot_dimension_numbers<[1], [0], [0], [1], [0, 0, 1, 1], [], []>} : vector<32x128xbf16>, vector<128x128xbf16>, vector<32x128xf32> -> vector<32x128xf32>
    %7 = arith.addf %3, %6 : vector<32x128xf32>
    %c0_6 = arith.constant 0 : index
    %c0_7 = arith.constant 0 : index
    %8 = vector.load %arg7[%c0_6, %c0_7] : memref<32x128xf32, #tpu.memory_space<vmem>>, vector<32x128xf32>
    tpu.vector_store %arg7[%c0_6, %c0_7], %7 {strides = array<i32>} : memref<32x128xf32, #tpu.memory_space<vmem>>, vector<32x128xf32>,
    %c0_i32_8 = arith.constant 0 : i32
    %9 = arith.cmpi eq, %arg2, %c0_i32_8 : i32
    %10 = arith.extui %9 : i1 to i32
    %c0_i32_9 = arith.constant 0 : i32
    %11 = arith.cmpi ne, %10, %c0_i32_9 : i32
    scf.if %11 {
      %c0_10 = arith.constant 0 : index
      %c0_11 = arith.constant 0 : index
      %12 = vector.load %arg7[%c0_10, %c0_11] : memref<32x128xf32, #tpu.memory_space<vmem>>, vector<32x128xf32>
      %c0_12 = arith.constant 0 : index
      %c0_13 = arith.constant 0 : index
      %13 = vector.load %arg5[%c0_12, %c0_13] : memref<1x128xf32, #tpu.memory_space<vmem>>, vector<1x128xf32>
      %14 = vector.broadcast %13 : vector<1x128xf32> to vector<32x128xf32>
      %15 = arith.addf %12, %14 : vector<32x128xf32>
      %16 = arith.truncf %15 : vector<32x128xf32> to vector<32x128xbf16>
      %c0_14 = arith.constant 0 : index
      %c0_15 = arith.constant 0 : index
      %17 = vector.load %arg6[%c0_14, %c0_15] : memref<32x128xbf16, #tpu.memory_space<vmem>>, vector<32x128xbf16>
      tpu.vector_store %arg6[%c0_14, %c0_15], %16 {strides = array<i32>} : memref<32x128xbf16, #tpu.memory_space<vmem>>, vector<32x128xbf16>,
    } else {
    }
    return
  }
  func.func @transform_0(%arg0: i32, %arg1: i32, %arg2: i32) -> (i32, i32) {
    %c0_i32 = arith.constant 0 : i32
    return %arg0, %arg2 : i32, i32
  }
  func.func @transform_1(%arg0: i32, %arg1: i32, %arg2: i32) -> (i32, i32) {
    %c0_i32 = arith.constant 0 : i32
    return %arg2, %arg1 : i32, i32
  }
  func.func @transform_2(%arg0: i32, %arg1: i32, %arg2: i32) -> (i32, i32) {
    %c0_i32 = arith.constant 0 : i32
    %c0_i32_0 = arith.constant 0 : i32
    return %c0_i32, %arg1 : i32, i32
  }
  func.func @transform_3(%arg0: i32, %arg1: i32, %arg2: i32) -> (i32, i32) {
    %c0_i32 = arith.constant 0 : i32
    return %arg0, %arg1 : i32, i32
  }
}

module attributes {stable_mosaic.version = 11 : i64} {
  func.func @_cross_attn_kernel(%arg0: i32, %arg1: memref<1x8x32xbf16, #tpu.memory_space<vmem>>, %arg2: memref<1x16x64xbf16, #tpu.memory_space<vmem>>, %arg3: memref<1x8x32xbf16, #tpu.memory_space<vmem>>) attributes {dimension_semantics = [#tpu.dimension_semantics<parallel>], iteration_bounds = array<i64: 2>, scalar_prefetch = 0 : i64, scratch_operands = 0 : i64, tpu.core_type = #tpu.core_type<tc>, window_params = [{transform_indices = @transform_0, window_bounds = array<i64: 1, 8, 32>}, {transform_indices = @transform_1, window_bounds = array<i64: 1, 16, 64>}, {transform_indices = @transform_2, window_bounds = array<i64: 1, 8, 32>}]} {
    %c0 = arith.constant 0 : index
    %c0_0 = arith.constant 0 : index
    %c0_1 = arith.constant 0 : index
    %0 = vector.load %arg1[%c0, %c0_0, %c0_1] : memref<1x8x32xbf16, #tpu.memory_space<vmem>>, vector<1x8x8xbf16>
    %1 = vector.shape_cast %0 : vector<1x8x8xbf16> to vector<8x8xbf16>
    %c0_2 = arith.constant 0 : index
    %c0_3 = arith.constant 0 : index
    %c0_4 = arith.constant 0 : index
    %2 = vector.load %arg2[%c0_2, %c0_3, %c0_4] : memref<1x16x64xbf16, #tpu.memory_space<vmem>>, vector<1x16x8xbf16>
    %3 = vector.shape_cast %2 : vector<1x16x8xbf16> to vector<16x8xbf16>
    %c0_5 = arith.constant 0 : index
    %c0_6 = arith.constant 0 : index
    %c32 = arith.constant 32 : index
    %4 = vector.load %arg2[%c0_5, %c0_6, %c32] : memref<1x16x64xbf16, #tpu.memory_space<vmem>>, vector<1x16x8xbf16>
    %5 = vector.shape_cast %4 : vector<1x16x8xbf16> to vector<16x8xbf16>
    %cst = arith.constant dense<0.000000e+00> : vector<8x16xf32>
    %6 = tpu.matmul %1, %3, %cst {dimension_numbers = #tpu.dot_dimension_numbers<[1], [1], [0], [0], [0, 0, 1, 0], [], []>} : vector<8x8xbf16>, vector<16x8xbf16>, vector<8x16xf32> -> vector<8x16xf32>
    %cst_7 = arith.constant dense<0xFF800000> : vector<8xf32>
    %7 = vector.multi_reduction <maximumf>, %6, %cst_7 [1] : vector<8x16xf32> to vector<8xf32>
    %8 = vector.shape_cast %7 : vector<8xf32> to vector<8x1xf32>
    %9 = vector.broadcast %8 : vector<8x1xf32> to vector<8x16xf32>
    %10 = arith.subf %6, %9 : vector<8x16xf32>
    %11 = math.exp %10 : vector<8x16xf32>
    %cst_8 = arith.constant dense<0.000000e+00> : vector<8xf32>
    %12 = vector.multi_reduction <add>, %11, %cst_8 [1] : vector<8x16xf32> to vector<8xf32>
    %13 = vector.shape_cast %12 : vector<8xf32> to vector<8x1xf32>
    %14 = tpu.reciprocal %13 {approx = true} : vector<8x1xf32> -> vector<8x1xf32>
    %15 = vector.broadcast %14 : vector<8x1xf32> to vector<8x16xf32>
    %16 = arith.mulf %11, %15 : vector<8x16xf32>
    %17 = arith.truncf %16 : vector<8x16xf32> to vector<8x16xbf16>
    %cst_9 = arith.constant dense<0.000000e+00> : vector<8x8xf32>
    %18 = tpu.matmul %17, %5, %cst_9 {dimension_numbers = #tpu.dot_dimension_numbers<[1], [0], [0], [1], [0, 0, 1, 1], [], []>} : vector<8x16xbf16>, vector<16x8xbf16>, vector<8x8xf32> -> vector<8x8xf32>
    %19 = arith.truncf %18 : vector<8x8xf32> to vector<8x8xbf16>
    %c0_10 = arith.constant 0 : index
    %c0_11 = arith.constant 0 : index
    %c0_12 = arith.constant 0 : index
    %20 = vector.load %arg3[%c0_10, %c0_11, %c0_12] : memref<1x8x32xbf16, #tpu.memory_space<vmem>>, vector<1x8x8xbf16>
    %21 = vector.shape_cast %20 : vector<1x8x8xbf16> to vector<8x8xbf16>
    %22 = vector.shape_cast %19 : vector<8x8xbf16> to vector<1x8x8xbf16>
    tpu.vector_store %arg3[%c0_10, %c0_11, %c0_12], %22 {strides = array<i32>} : memref<1x8x32xbf16, #tpu.memory_space<vmem>>, vector<1x8x8xbf16>,
    %c0_13 = arith.constant 0 : index
    %c0_14 = arith.constant 0 : index
    %c8 = arith.constant 8 : index
    %23 = vector.load %arg1[%c0_13, %c0_14, %c8] : memref<1x8x32xbf16, #tpu.memory_space<vmem>>, vector<1x8x8xbf16>
    %24 = vector.shape_cast %23 : vector<1x8x8xbf16> to vector<8x8xbf16>
    %c0_15 = arith.constant 0 : index
    %c0_16 = arith.constant 0 : index
    %c8_17 = arith.constant 8 : index
    %25 = vector.load %arg2[%c0_15, %c0_16, %c8_17] : memref<1x16x64xbf16, #tpu.memory_space<vmem>>, vector<1x16x8xbf16>
    %26 = vector.shape_cast %25 : vector<1x16x8xbf16> to vector<16x8xbf16>
    %c0_18 = arith.constant 0 : index
    %c0_19 = arith.constant 0 : index
    %c40 = arith.constant 40 : index
    %27 = vector.load %arg2[%c0_18, %c0_19, %c40] : memref<1x16x64xbf16, #tpu.memory_space<vmem>>, vector<1x16x8xbf16>
    %28 = vector.shape_cast %27 : vector<1x16x8xbf16> to vector<16x8xbf16>
    %cst_20 = arith.constant dense<0.000000e+00> : vector<8x16xf32>
    %29 = tpu.matmul %24, %26, %cst_20 {dimension_numbers = #tpu.dot_dimension_numbers<[1], [1], [0], [0], [0, 0, 1, 0], [], []>} : vector<8x8xbf16>, vector<16x8xbf16>, vector<8x16xf32> -> vector<8x16xf32>
    %cst_21 = arith.constant dense<0xFF800000> : vector<8xf32>
    %30 = vector.multi_reduction <maximumf>, %29, %cst_21 [1] : vector<8x16xf32> to vector<8xf32>
    %31 = vector.shape_cast %30 : vector<8xf32> to vector<8x1xf32>
    %32 = vector.broadcast %31 : vector<8x1xf32> to vector<8x16xf32>
    %33 = arith.subf %29, %32 : vector<8x16xf32>
    %34 = math.exp %33 : vector<8x16xf32>
    %cst_22 = arith.constant dense<0.000000e+00> : vector<8xf32>
    %35 = vector.multi_reduction <add>, %34, %cst_22 [1] : vector<8x16xf32> to vector<8xf32>
    %36 = vector.shape_cast %35 : vector<8xf32> to vector<8x1xf32>
    %37 = tpu.reciprocal %36 {approx = true} : vector<8x1xf32> -> vector<8x1xf32>
    %38 = vector.broadcast %37 : vector<8x1xf32> to vector<8x16xf32>
    %39 = arith.mulf %34, %38 : vector<8x16xf32>
    %40 = arith.truncf %39 : vector<8x16xf32> to vector<8x16xbf16>
    %cst_23 = arith.constant dense<0.000000e+00> : vector<8x8xf32>
    %41 = tpu.matmul %40, %28, %cst_23 {dimension_numbers = #tpu.dot_dimension_numbers<[1], [0], [0], [1], [0, 0, 1, 1], [], []>} : vector<8x16xbf16>, vector<16x8xbf16>, vector<8x8xf32> -> vector<8x8xf32>
    %42 = arith.truncf %41 : vector<8x8xf32> to vector<8x8xbf16>
    %c0_24 = arith.constant 0 : index
    %c0_25 = arith.constant 0 : index
    %c8_26 = arith.constant 8 : index
    %43 = vector.load %arg3[%c0_24, %c0_25, %c8_26] : memref<1x8x32xbf16, #tpu.memory_space<vmem>>, vector<1x8x8xbf16>
    %44 = vector.shape_cast %43 : vector<1x8x8xbf16> to vector<8x8xbf16>
    %45 = vector.shape_cast %42 : vector<8x8xbf16> to vector<1x8x8xbf16>
    tpu.vector_store %arg3[%c0_24, %c0_25, %c8_26], %45 {strides = array<i32>} : memref<1x8x32xbf16, #tpu.memory_space<vmem>>, vector<1x8x8xbf16>,
    %c0_27 = arith.constant 0 : index
    %c0_28 = arith.constant 0 : index
    %c16 = arith.constant 16 : index
    %46 = vector.load %arg1[%c0_27, %c0_28, %c16] : memref<1x8x32xbf16, #tpu.memory_space<vmem>>, vector<1x8x8xbf16>
    %47 = vector.shape_cast %46 : vector<1x8x8xbf16> to vector<8x8xbf16>
    %c0_29 = arith.constant 0 : index
    %c0_30 = arith.constant 0 : index
    %c16_31 = arith.constant 16 : index
    %48 = vector.load %arg2[%c0_29, %c0_30, %c16_31] : memref<1x16x64xbf16, #tpu.memory_space<vmem>>, vector<1x16x8xbf16>
    %49 = vector.shape_cast %48 : vector<1x16x8xbf16> to vector<16x8xbf16>
    %c0_32 = arith.constant 0 : index
    %c0_33 = arith.constant 0 : index
    %c48 = arith.constant 48 : index
    %50 = vector.load %arg2[%c0_32, %c0_33, %c48] : memref<1x16x64xbf16, #tpu.memory_space<vmem>>, vector<1x16x8xbf16>
    %51 = vector.shape_cast %50 : vector<1x16x8xbf16> to vector<16x8xbf16>
    %cst_34 = arith.constant dense<0.000000e+00> : vector<8x16xf32>
    %52 = tpu.matmul %47, %49, %cst_34 {dimension_numbers = #tpu.dot_dimension_numbers<[1], [1], [0], [0], [0, 0, 1, 0], [], []>} : vector<8x8xbf16>, vector<16x8xbf16>, vector<8x16xf32> -> vector<8x16xf32>
    %cst_35 = arith.constant dense<0xFF800000> : vector<8xf32>
    %53 = vector.multi_reduction <maximumf>, %52, %cst_35 [1] : vector<8x16xf32> to vector<8xf32>
    %54 = vector.shape_cast %53 : vector<8xf32> to vector<8x1xf32>
    %55 = vector.broadcast %54 : vector<8x1xf32> to vector<8x16xf32>
    %56 = arith.subf %52, %55 : vector<8x16xf32>
    %57 = math.exp %56 : vector<8x16xf32>
    %cst_36 = arith.constant dense<0.000000e+00> : vector<8xf32>
    %58 = vector.multi_reduction <add>, %57, %cst_36 [1] : vector<8x16xf32> to vector<8xf32>
    %59 = vector.shape_cast %58 : vector<8xf32> to vector<8x1xf32>
    %60 = tpu.reciprocal %59 {approx = true} : vector<8x1xf32> -> vector<8x1xf32>
    %61 = vector.broadcast %60 : vector<8x1xf32> to vector<8x16xf32>
    %62 = arith.mulf %57, %61 : vector<8x16xf32>
    %63 = arith.truncf %62 : vector<8x16xf32> to vector<8x16xbf16>
    %cst_37 = arith.constant dense<0.000000e+00> : vector<8x8xf32>
    %64 = tpu.matmul %63, %51, %cst_37 {dimension_numbers = #tpu.dot_dimension_numbers<[1], [0], [0], [1], [0, 0, 1, 1], [], []>} : vector<8x16xbf16>, vector<16x8xbf16>, vector<8x8xf32> -> vector<8x8xf32>
    %65 = arith.truncf %64 : vector<8x8xf32> to vector<8x8xbf16>
    %c0_38 = arith.constant 0 : index
    %c0_39 = arith.constant 0 : index
    %c16_40 = arith.constant 16 : index
    %66 = vector.load %arg3[%c0_38, %c0_39, %c16_40] : memref<1x8x32xbf16, #tpu.memory_space<vmem>>, vector<1x8x8xbf16>
    %67 = vector.shape_cast %66 : vector<1x8x8xbf16> to vector<8x8xbf16>
    %68 = vector.shape_cast %65 : vector<8x8xbf16> to vector<1x8x8xbf16>
    tpu.vector_store %arg3[%c0_38, %c0_39, %c16_40], %68 {strides = array<i32>} : memref<1x8x32xbf16, #tpu.memory_space<vmem>>, vector<1x8x8xbf16>,
    %c0_41 = arith.constant 0 : index
    %c0_42 = arith.constant 0 : index
    %c24 = arith.constant 24 : index
    %69 = vector.load %arg1[%c0_41, %c0_42, %c24] : memref<1x8x32xbf16, #tpu.memory_space<vmem>>, vector<1x8x8xbf16>
    %70 = vector.shape_cast %69 : vector<1x8x8xbf16> to vector<8x8xbf16>
    %c0_43 = arith.constant 0 : index
    %c0_44 = arith.constant 0 : index
    %c24_45 = arith.constant 24 : index
    %71 = vector.load %arg2[%c0_43, %c0_44, %c24_45] : memref<1x16x64xbf16, #tpu.memory_space<vmem>>, vector<1x16x8xbf16>
    %72 = vector.shape_cast %71 : vector<1x16x8xbf16> to vector<16x8xbf16>
    %c0_46 = arith.constant 0 : index
    %c0_47 = arith.constant 0 : index
    %c56 = arith.constant 56 : index
    %73 = vector.load %arg2[%c0_46, %c0_47, %c56] : memref<1x16x64xbf16, #tpu.memory_space<vmem>>, vector<1x16x8xbf16>
    %74 = vector.shape_cast %73 : vector<1x16x8xbf16> to vector<16x8xbf16>
    %cst_48 = arith.constant dense<0.000000e+00> : vector<8x16xf32>
    %75 = tpu.matmul %70, %72, %cst_48 {dimension_numbers = #tpu.dot_dimension_numbers<[1], [1], [0], [0], [0, 0, 1, 0], [], []>} : vector<8x8xbf16>, vector<16x8xbf16>, vector<8x16xf32> -> vector<8x16xf32>
    %cst_49 = arith.constant dense<0xFF800000> : vector<8xf32>
    %76 = vector.multi_reduction <maximumf>, %75, %cst_49 [1] : vector<8x16xf32> to vector<8xf32>
    %77 = vector.shape_cast %76 : vector<8xf32> to vector<8x1xf32>
    %78 = vector.broadcast %77 : vector<8x1xf32> to vector<8x16xf32>
    %79 = arith.subf %75, %78 : vector<8x16xf32>
    %80 = math.exp %79 : vector<8x16xf32>
    %cst_50 = arith.constant dense<0.000000e+00> : vector<8xf32>
    %81 = vector.multi_reduction <add>, %80, %cst_50 [1] : vector<8x16xf32> to vector<8xf32>
    %82 = vector.shape_cast %81 : vector<8xf32> to vector<8x1xf32>
    %83 = tpu.reciprocal %82 {approx = true} : vector<8x1xf32> -> vector<8x1xf32>
    %84 = vector.broadcast %83 : vector<8x1xf32> to vector<8x16xf32>
    %85 = arith.mulf %80, %84 : vector<8x16xf32>
    %86 = arith.truncf %85 : vector<8x16xf32> to vector<8x16xbf16>
    %cst_51 = arith.constant dense<0.000000e+00> : vector<8x8xf32>
    %87 = tpu.matmul %86, %74, %cst_51 {dimension_numbers = #tpu.dot_dimension_numbers<[1], [0], [0], [1], [0, 0, 1, 1], [], []>} : vector<8x16xbf16>, vector<16x8xbf16>, vector<8x8xf32> -> vector<8x8xf32>
    %88 = arith.truncf %87 : vector<8x8xf32> to vector<8x8xbf16>
    %c0_52 = arith.constant 0 : index
    %c0_53 = arith.constant 0 : index
    %c24_54 = arith.constant 24 : index
    %89 = vector.load %arg3[%c0_52, %c0_53, %c24_54] : memref<1x8x32xbf16, #tpu.memory_space<vmem>>, vector<1x8x8xbf16>
    %90 = vector.shape_cast %89 : vector<1x8x8xbf16> to vector<8x8xbf16>
    %91 = vector.shape_cast %88 : vector<8x8xbf16> to vector<1x8x8xbf16>
    tpu.vector_store %arg3[%c0_52, %c0_53, %c24_54], %91 {strides = array<i32>} : memref<1x8x32xbf16, #tpu.memory_space<vmem>>, vector<1x8x8xbf16>,
    return
  }
  func.func @transform_0(%arg0: i32) -> (i32, i32, i32) {
    %c0_i32 = arith.constant 0 : i32
    %c0_i32_0 = arith.constant 0 : i32
    %c0_i32_1 = arith.constant 0 : i32
    return %arg0, %c0_i32, %c0_i32_0 : i32, i32, i32
  }
  func.func @transform_1(%arg0: i32) -> (i32, i32, i32) {
    %c0_i32 = arith.constant 0 : i32
    %c0_i32_0 = arith.constant 0 : i32
    %c0_i32_1 = arith.constant 0 : i32
    return %arg0, %c0_i32, %c0_i32_0 : i32, i32, i32
  }
  func.func @transform_2(%arg0: i32) -> (i32, i32, i32) {
    %c0_i32 = arith.constant 0 : i32
    %c0_i32_0 = arith.constant 0 : i32
    %c0_i32_1 = arith.constant 0 : i32
    return %arg0, %c0_i32, %c0_i32_0 : i32, i32, i32
  }
}

module attributes {stable_mosaic.version = 11 : i64} {
  func.func @_matmul_res_ln_kernel(%arg0: i32, %arg1: i32, %arg2: memref<16x128xbf16, #tpu.memory_space<vmem>>, %arg3: memref<128x32xbf16, #tpu.memory_space<vmem>>, %arg4: memref<1x32xf32, #tpu.memory_space<vmem>>, %arg5: memref<16x32xbf16, #tpu.memory_space<vmem>>, %arg6: memref<1x32xf32, #tpu.memory_space<vmem>>, %arg7: memref<1x32xf32, #tpu.memory_space<vmem>>, %arg8: memref<16x32xbf16, #tpu.memory_space<vmem>>, %arg9: memref<16x32xf32, #tpu.memory_space<vmem>>) attributes {dimension_semantics = [#tpu.dimension_semantics<parallel>, #tpu.dimension_semantics<arbitrary>], iteration_bounds = array<i64: 1, 1>, scalar_prefetch = 0 : i64, scratch_operands = 1 : i64, tpu.core_type = #tpu.core_type<tc>, window_params = [{transform_indices = @transform_0, window_bounds = array<i64: 16, 128>}, {transform_indices = @transform_1, window_bounds = array<i64: 128, 32>}, {pipeline_mode = #tpu.pipeline_mode<synchronous>, transform_indices = @transform_2, window_bounds = array<i64: 1, 32>}, {transform_indices = @transform_3, window_bounds = array<i64: 16, 32>}, {pipeline_mode = #tpu.pipeline_mode<synchronous>, transform_indices = @transform_4, window_bounds = array<i64: 1, 32>}, {pipeline_mode = #tpu.pipeline_mode<synchronous>, transform_indices = @transform_5, window_bounds = array<i64: 1, 32>}, {transform_indices = @transform_6, window_bounds = array<i64: 16, 32>}]} {
    %c0_i32 = arith.constant 0 : i32
    %0 = arith.cmpi eq, %arg1, %c0_i32 : i32
    %1 = arith.extui %0 : i1 to i32
    %c0_i32_0 = arith.constant 0 : i32
    %2 = arith.cmpi ne, %1, %c0_i32_0 : i32
    scf.if %2 {
      %cst_10 = arith.constant 0.000000e+00 : f32
      %12 = vector.broadcast %cst_10 : f32 to vector<16x32xf32>
      %c0_11 = arith.constant 0 : index
      %c0_12 = arith.constant 0 : index
      %13 = vector.load %arg9[%c0_11, %c0_12] : memref<16x32xf32, #tpu.memory_space<vmem>>, vector<16x32xf32>
      tpu.vector_store %arg9[%c0_11, %c0_12], %12 {strides = array<i32>} : memref<16x32xf32, #tpu.memory_space<vmem>>, vector<16x32xf32>,
    } else {
    }
    %c0 = arith.constant 0 : index
    %c0_1 = arith.constant 0 : index
    %3 = vector.load %arg9[%c0, %c0_1] : memref<16x32xf32, #tpu.memory_space<vmem>>, vector<16x32xf32>
    %c0_2 = arith.constant 0 : index
    %c0_3 = arith.constant 0 : index
    %4 = vector.load %arg2[%c0_2, %c0_3] : memref<16x128xbf16, #tpu.memory_space<vmem>>, vector<16x128xbf16>
    %c0_4 = arith.constant 0 : index
    %c0_5 = arith.constant 0 : index
    %5 = vector.load %arg3[%c0_4, %c0_5] : memref<128x32xbf16, #tpu.memory_space<vmem>>, vector<128x32xbf16>
    %cst = arith.constant dense<0.000000e+00> : vector<16x32xf32>
    %6 = tpu.matmul %4, %5, %cst {dimension_numbers = #tpu.dot_dimension_numbers<[1], [0], [0], [1], [0, 0, 1, 1], [], []>} : vector<16x128xbf16>, vector<128x32xbf16>, vector<16x32xf32> -> vector<16x32xf32>
    %7 = arith.addf %3, %6 : vector<16x32xf32>
    %c0_6 = arith.constant 0 : index
    %c0_7 = arith.constant 0 : index
    %8 = vector.load %arg9[%c0_6, %c0_7] : memref<16x32xf32, #tpu.memory_space<vmem>>, vector<16x32xf32>
    tpu.vector_store %arg9[%c0_6, %c0_7], %7 {strides = array<i32>} : memref<16x32xf32, #tpu.memory_space<vmem>>, vector<16x32xf32>,
    %c0_i32_8 = arith.constant 0 : i32
    %9 = arith.cmpi eq, %arg1, %c0_i32_8 : i32
    %10 = arith.extui %9 : i1 to i32
    %c0_i32_9 = arith.constant 0 : i32
    %11 = arith.cmpi ne, %10, %c0_i32_9 : i32
    scf.if %11 {
      %c0_10 = arith.constant 0 : index
      %c0_11 = arith.constant 0 : index
      %12 = vector.load %arg9[%c0_10, %c0_11] : memref<16x32xf32, #tpu.memory_space<vmem>>, vector<16x32xf32>
      %c0_12 = arith.constant 0 : index
      %c0_13 = arith.constant 0 : index
      %13 = vector.load %arg4[%c0_12, %c0_13] : memref<1x32xf32, #tpu.memory_space<vmem>>, vector<1x32xf32>
      %14 = vector.broadcast %13 : vector<1x32xf32> to vector<16x32xf32>
      %15 = arith.addf %12, %14 : vector<16x32xf32>
      %cst_14 = arith.constant 0.000000e+00 : f32
      %16 = vector.broadcast %cst_14 : f32 to vector<16x32xf32>
      %17 = arith.maximumf %15, %16 : vector<16x32xf32>
      %c0_15 = arith.constant 0 : index
      %c0_16 = arith.constant 0 : index
      %18 = vector.load %arg5[%c0_15, %c0_16] : memref<16x32xbf16, #tpu.memory_space<vmem>>, vector<16x32xbf16>
      %19 = arith.extf %18 : vector<16x32xbf16> to vector<16x32xf32>
      %20 = arith.addf %17, %19 : vector<16x32xf32>
      %cst_17 = arith.constant dense<0.000000e+00> : vector<16xf32>
      %21 = vector.multi_reduction <add>, %20, %cst_17 [1] : vector<16x32xf32> to vector<16xf32>
      %22 = vector.shape_cast %21 : vector<16xf32> to vector<16x1xf32>
      %cst_18 = arith.constant 3.200000e+01 : f32
      %23 = vector.broadcast %cst_18 : f32 to vector<16x1xf32>
      %24 = arith.divf %22, %23 : vector<16x1xf32>
      %25 = vector.broadcast %24 : vector<16x1xf32> to vector<16x32xf32>
      %26 = arith.subf %20, %25 : vector<16x32xf32>
      %27 = arith.mulf %26, %26 : vector<16x32xf32>
      %cst_19 = arith.constant dense<0.000000e+00> : vector<16xf32>
      %28 = vector.multi_reduction <add>, %27, %cst_19 [1] : vector<16x32xf32> to vector<16xf32>
      %29 = vector.shape_cast %28 : vector<16xf32> to vector<16x1xf32>
      %cst_20 = arith.constant 3.200000e+01 : f32
      %30 = vector.broadcast %cst_20 : f32 to vector<16x1xf32>
      %31 = arith.divf %29, %30 : vector<16x1xf32>
      %cst_21 = arith.constant 9.99999974E-6 : f32
      %32 = vector.broadcast %cst_21 : f32 to vector<16x1xf32>
      %33 = arith.addf %31, %32 : vector<16x1xf32>
      %34 = math.rsqrt %33 : vector<16x1xf32>
      %35 = vector.broadcast %34 : vector<16x1xf32> to vector<16x32xf32>
      %36 = arith.mulf %26, %35 : vector<16x32xf32>
      %c0_22 = arith.constant 0 : index
      %c0_23 = arith.constant 0 : index
      %37 = vector.load %arg6[%c0_22, %c0_23] : memref<1x32xf32, #tpu.memory_space<vmem>>, vector<1x32xf32>
      %38 = vector.broadcast %37 : vector<1x32xf32> to vector<16x32xf32>
      %39 = arith.mulf %36, %38 : vector<16x32xf32>
      %c0_24 = arith.constant 0 : index
      %c0_25 = arith.constant 0 : index
      %40 = vector.load %arg7[%c0_24, %c0_25] : memref<1x32xf32, #tpu.memory_space<vmem>>, vector<1x32xf32>
      %41 = vector.broadcast %40 : vector<1x32xf32> to vector<16x32xf32>
      %42 = arith.addf %39, %41 : vector<16x32xf32>
      %43 = arith.truncf %42 : vector<16x32xf32> to vector<16x32xbf16>
      %c0_26 = arith.constant 0 : index
      %c0_27 = arith.constant 0 : index
      %44 = vector.load %arg8[%c0_26, %c0_27] : memref<16x32xbf16, #tpu.memory_space<vmem>>, vector<16x32xbf16>
      tpu.vector_store %arg8[%c0_26, %c0_27], %43 {strides = array<i32>} : memref<16x32xbf16, #tpu.memory_space<vmem>>, vector<16x32xbf16>,
    } else {
    }
    return
  }
  func.func @transform_0(%arg0: i32, %arg1: i32) -> (i32, i32) {
    %c0_i32 = arith.constant 0 : i32
    return %arg0, %arg1 : i32, i32
  }
  func.func @transform_1(%arg0: i32, %arg1: i32) -> (i32, i32) {
    %c0_i32 = arith.constant 0 : i32
    %c0_i32_0 = arith.constant 0 : i32
    return %arg1, %c0_i32 : i32, i32
  }
  func.func @transform_2(%arg0: i32, %arg1: i32) -> (i32, i32) {
    %c0_i32 = arith.constant 0 : i32
    %c0_i32_0 = arith.constant 0 : i32
    %c0_i32_1 = arith.constant 0 : i32
    return %c0_i32, %c0_i32_0 : i32, i32
  }
  func.func @transform_3(%arg0: i32, %arg1: i32) -> (i32, i32) {
    %c0_i32 = arith.constant 0 : i32
    %c0_i32_0 = arith.constant 0 : i32
    return %arg0, %c0_i32 : i32, i32
  }
  func.func @transform_4(%arg0: i32, %arg1: i32) -> (i32, i32) {
    %c0_i32 = arith.constant 0 : i32
    %c0_i32_0 = arith.constant 0 : i32
    %c0_i32_1 = arith.constant 0 : i32
    return %c0_i32, %c0_i32_0 : i32, i32
  }
  func.func @transform_5(%arg0: i32, %arg1: i32) -> (i32, i32) {
    %c0_i32 = arith.constant 0 : i32
    %c0_i32_0 = arith.constant 0 : i32
    %c0_i32_1 = arith.constant 0 : i32
    return %c0_i32, %c0_i32_0 : i32, i32
  }
  func.func @transform_6(%arg0: i32, %arg1: i32) -> (i32, i32) {
    %c0_i32 = arith.constant 0 : i32
    %c0_i32_0 = arith.constant 0 : i32
    return %arg0, %c0_i32 : i32, i32
  }
}

module attributes {stable_mosaic.version = 11 : i64} {
  func.func @_matmul_kernel(%arg0: i32, %arg1: i32, %arg2: i32, %arg3: memref<16x128xbf16, #tpu.memory_space<vmem>>, %arg4: memref<128x128xbf16, #tpu.memory_space<vmem>>, %arg5: memref<1x128xf32, #tpu.memory_space<vmem>>, %arg6: memref<16x128xbf16, #tpu.memory_space<vmem>>, %arg7: memref<16x128xf32, #tpu.memory_space<vmem>>) attributes {dimension_semantics = [#tpu.dimension_semantics<parallel>, #tpu.dimension_semantics<parallel>, #tpu.dimension_semantics<arbitrary>], iteration_bounds = array<i64: 1, 1, 1>, scalar_prefetch = 0 : i64, scratch_operands = 1 : i64, tpu.core_type = #tpu.core_type<tc>, window_params = [{transform_indices = @transform_0, window_bounds = array<i64: 16, 128>}, {transform_indices = @transform_1, window_bounds = array<i64: 128, 128>}, {transform_indices = @transform_2, window_bounds = array<i64: 1, 128>}, {transform_indices = @transform_3, window_bounds = array<i64: 16, 128>}]} {
    %c0_i32 = arith.constant 0 : i32
    %0 = arith.cmpi eq, %arg2, %c0_i32 : i32
    %1 = arith.extui %0 : i1 to i32
    %c0_i32_0 = arith.constant 0 : i32
    %2 = arith.cmpi ne, %1, %c0_i32_0 : i32
    scf.if %2 {
      %cst_10 = arith.constant 0.000000e+00 : f32
      %12 = vector.broadcast %cst_10 : f32 to vector<16x128xf32>
      %c0_11 = arith.constant 0 : index
      %c0_12 = arith.constant 0 : index
      %13 = vector.load %arg7[%c0_11, %c0_12] : memref<16x128xf32, #tpu.memory_space<vmem>>, vector<16x128xf32>
      tpu.vector_store %arg7[%c0_11, %c0_12], %12 {strides = array<i32>} : memref<16x128xf32, #tpu.memory_space<vmem>>, vector<16x128xf32>,
    } else {
    }
    %c0 = arith.constant 0 : index
    %c0_1 = arith.constant 0 : index
    %3 = vector.load %arg7[%c0, %c0_1] : memref<16x128xf32, #tpu.memory_space<vmem>>, vector<16x128xf32>
    %c0_2 = arith.constant 0 : index
    %c0_3 = arith.constant 0 : index
    %4 = vector.load %arg3[%c0_2, %c0_3] : memref<16x128xbf16, #tpu.memory_space<vmem>>, vector<16x128xbf16>
    %c0_4 = arith.constant 0 : index
    %c0_5 = arith.constant 0 : index
    %5 = vector.load %arg4[%c0_4, %c0_5] : memref<128x128xbf16, #tpu.memory_space<vmem>>, vector<128x128xbf16>
    %cst = arith.constant dense<0.000000e+00> : vector<16x128xf32>
    %6 = tpu.matmul %4, %5, %cst {dimension_numbers = #tpu.dot_dimension_numbers<[1], [0], [0], [1], [0, 0, 1, 1], [], []>} : vector<16x128xbf16>, vector<128x128xbf16>, vector<16x128xf32> -> vector<16x128xf32>
    %7 = arith.addf %3, %6 : vector<16x128xf32>
    %c0_6 = arith.constant 0 : index
    %c0_7 = arith.constant 0 : index
    %8 = vector.load %arg7[%c0_6, %c0_7] : memref<16x128xf32, #tpu.memory_space<vmem>>, vector<16x128xf32>
    tpu.vector_store %arg7[%c0_6, %c0_7], %7 {strides = array<i32>} : memref<16x128xf32, #tpu.memory_space<vmem>>, vector<16x128xf32>,
    %c0_i32_8 = arith.constant 0 : i32
    %9 = arith.cmpi eq, %arg2, %c0_i32_8 : i32
    %10 = arith.extui %9 : i1 to i32
    %c0_i32_9 = arith.constant 0 : i32
    %11 = arith.cmpi ne, %10, %c0_i32_9 : i32
    scf.if %11 {
      %c0_10 = arith.constant 0 : index
      %c0_11 = arith.constant 0 : index
      %12 = vector.load %arg7[%c0_10, %c0_11] : memref<16x128xf32, #tpu.memory_space<vmem>>, vector<16x128xf32>
      %c0_12 = arith.constant 0 : index
      %c0_13 = arith.constant 0 : index
      %13 = vector.load %arg5[%c0_12, %c0_13] : memref<1x128xf32, #tpu.memory_space<vmem>>, vector<1x128xf32>
      %14 = vector.broadcast %13 : vector<1x128xf32> to vector<16x128xf32>
      %15 = arith.addf %12, %14 : vector<16x128xf32>
      %cst_14 = arith.constant 0.000000e+00 : f32
      %16 = vector.broadcast %cst_14 : f32 to vector<16x128xf32>
      %17 = arith.maximumf %15, %16 : vector<16x128xf32>
      %18 = arith.truncf %17 : vector<16x128xf32> to vector<16x128xbf16>
      %c0_15 = arith.constant 0 : index
      %c0_16 = arith.constant 0 : index
      %19 = vector.load %arg6[%c0_15, %c0_16] : memref<16x128xbf16, #tpu.memory_space<vmem>>, vector<16x128xbf16>
      tpu.vector_store %arg6[%c0_15, %c0_16], %18 {strides = array<i32>} : memref<16x128xbf16, #tpu.memory_space<vmem>>, vector<16x128xbf16>,
    } else {
    }
    return
  }
  func.func @transform_0(%arg0: i32, %arg1: i32, %arg2: i32) -> (i32, i32) {
    %c0_i32 = arith.constant 0 : i32
    return %arg0, %arg2 : i32, i32
  }
  func.func @transform_1(%arg0: i32, %arg1: i32, %arg2: i32) -> (i32, i32) {
    %c0_i32 = arith.constant 0 : i32
    return %arg2, %arg1 : i32, i32
  }
  func.func @transform_2(%arg0: i32, %arg1: i32, %arg2: i32) -> (i32, i32) {
    %c0_i32 = arith.constant 0 : i32
    %c0_i32_0 = arith.constant 0 : i32
    return %c0_i32, %arg1 : i32, i32
  }
  func.func @transform_3(%arg0: i32, %arg1: i32, %arg2: i32) -> (i32, i32) {
    %c0_i32 = arith.constant 0 : i32
    return %arg0, %arg1 : i32, i32
  }
}

module attributes {stable_mosaic.version = 11 : i64} {
  func.func @_matmul_kernel(%arg0: i32, %arg1: i32, %arg2: i32, %arg3: memref<16x128xbf16, #tpu.memory_space<vmem>>, %arg4: memref<128x128xbf16, #tpu.memory_space<vmem>>, %arg5: memref<1x128xf32, #tpu.memory_space<vmem>>, %arg6: memref<16x128xf32, #tpu.memory_space<vmem>>, %arg7: memref<16x128xf32, #tpu.memory_space<vmem>>) attributes {dimension_semantics = [#tpu.dimension_semantics<parallel>, #tpu.dimension_semantics<parallel>, #tpu.dimension_semantics<arbitrary>], iteration_bounds = array<i64: 1, 1, 1>, scalar_prefetch = 0 : i64, scratch_operands = 1 : i64, tpu.core_type = #tpu.core_type<tc>, window_params = [{transform_indices = @transform_0, window_bounds = array<i64: 16, 128>}, {transform_indices = @transform_1, window_bounds = array<i64: 128, 128>}, {transform_indices = @transform_2, window_bounds = array<i64: 1, 128>}, {transform_indices = @transform_3, window_bounds = array<i64: 16, 128>}]} {
    %c0_i32 = arith.constant 0 : i32
    %0 = arith.cmpi eq, %arg2, %c0_i32 : i32
    %1 = arith.extui %0 : i1 to i32
    %c0_i32_0 = arith.constant 0 : i32
    %2 = arith.cmpi ne, %1, %c0_i32_0 : i32
    scf.if %2 {
      %cst_10 = arith.constant 0.000000e+00 : f32
      %12 = vector.broadcast %cst_10 : f32 to vector<16x128xf32>
      %c0_11 = arith.constant 0 : index
      %c0_12 = arith.constant 0 : index
      %13 = vector.load %arg7[%c0_11, %c0_12] : memref<16x128xf32, #tpu.memory_space<vmem>>, vector<16x128xf32>
      tpu.vector_store %arg7[%c0_11, %c0_12], %12 {strides = array<i32>} : memref<16x128xf32, #tpu.memory_space<vmem>>, vector<16x128xf32>,
    } else {
    }
    %c0 = arith.constant 0 : index
    %c0_1 = arith.constant 0 : index
    %3 = vector.load %arg7[%c0, %c0_1] : memref<16x128xf32, #tpu.memory_space<vmem>>, vector<16x128xf32>
    %c0_2 = arith.constant 0 : index
    %c0_3 = arith.constant 0 : index
    %4 = vector.load %arg3[%c0_2, %c0_3] : memref<16x128xbf16, #tpu.memory_space<vmem>>, vector<16x128xbf16>
    %c0_4 = arith.constant 0 : index
    %c0_5 = arith.constant 0 : index
    %5 = vector.load %arg4[%c0_4, %c0_5] : memref<128x128xbf16, #tpu.memory_space<vmem>>, vector<128x128xbf16>
    %cst = arith.constant dense<0.000000e+00> : vector<16x128xf32>
    %6 = tpu.matmul %4, %5, %cst {dimension_numbers = #tpu.dot_dimension_numbers<[1], [0], [0], [1], [0, 0, 1, 1], [], []>} : vector<16x128xbf16>, vector<128x128xbf16>, vector<16x128xf32> -> vector<16x128xf32>
    %7 = arith.addf %3, %6 : vector<16x128xf32>
    %c0_6 = arith.constant 0 : index
    %c0_7 = arith.constant 0 : index
    %8 = vector.load %arg7[%c0_6, %c0_7] : memref<16x128xf32, #tpu.memory_space<vmem>>, vector<16x128xf32>
    tpu.vector_store %arg7[%c0_6, %c0_7], %7 {strides = array<i32>} : memref<16x128xf32, #tpu.memory_space<vmem>>, vector<16x128xf32>,
    %c0_i32_8 = arith.constant 0 : i32
    %9 = arith.cmpi eq, %arg2, %c0_i32_8 : i32
    %10 = arith.extui %9 : i1 to i32
    %c0_i32_9 = arith.constant 0 : i32
    %11 = arith.cmpi ne, %10, %c0_i32_9 : i32
    scf.if %11 {
      %c0_10 = arith.constant 0 : index
      %c0_11 = arith.constant 0 : index
      %12 = vector.load %arg7[%c0_10, %c0_11] : memref<16x128xf32, #tpu.memory_space<vmem>>, vector<16x128xf32>
      %c0_12 = arith.constant 0 : index
      %c0_13 = arith.constant 0 : index
      %13 = vector.load %arg5[%c0_12, %c0_13] : memref<1x128xf32, #tpu.memory_space<vmem>>, vector<1x128xf32>
      %14 = vector.broadcast %13 : vector<1x128xf32> to vector<16x128xf32>
      %15 = arith.addf %12, %14 : vector<16x128xf32>
      %c0_14 = arith.constant 0 : index
      %c0_15 = arith.constant 0 : index
      %16 = vector.load %arg6[%c0_14, %c0_15] : memref<16x128xf32, #tpu.memory_space<vmem>>, vector<16x128xf32>
      tpu.vector_store %arg6[%c0_14, %c0_15], %15 {strides = array<i32>} : memref<16x128xf32, #tpu.memory_space<vmem>>, vector<16x128xf32>,
    } else {
    }
    return
  }
  func.func @transform_0(%arg0: i32, %arg1: i32, %arg2: i32) -> (i32, i32) {
    %c0_i32 = arith.constant 0 : i32
    return %arg0, %arg2 : i32, i32
  }
  func.func @transform_1(%arg0: i32, %arg1: i32, %arg2: i32) -> (i32, i32) {
    %c0_i32 = arith.constant 0 : i32
    return %arg2, %arg1 : i32, i32
  }
  func.func @transform_2(%arg0: i32, %arg1: i32, %arg2: i32) -> (i32, i32) {
    %c0_i32 = arith.constant 0 : i32
    %c0_i32_0 = arith.constant 0 : i32
    return %c0_i32, %arg1 : i32, i32
  }
  func.func @transform_3(%arg0: i32, %arg1: i32, %arg2: i32) -> (i32, i32) {
    %c0_i32 = arith.constant 0 : i32
    return %arg0, %arg1 : i32, i32
  }
}

</mosaic_0001>

<llo_original>
// kernel: transformer_decoder_forward.19
$region0: #{transformer_decoder_forward.19}
  #allocation0 [shape = 'u32[]', space=smem, size = 0x4, offset = 0x4, fixed_abs, tag = 'smem constant byte address 0x4 - core index']
  #allocation1 [shape = 'u32[144,128]{1,0:T(1,128)}', space=vmem, size = 0x12000, scoped, tag = 'internal scratch']
  #allocation2 [shape = 'f32[16,128]{1,0:T(8,128)}', space=vmem, size = 0x2000, scoped, tag = 'scratch operand']
  %s0 = inlined_call_operand.vmem [shape: bf16[16,128], index: 0, kind: input, shape index: {}]
  %s1 = inlined_call_operand.vmem [shape: bf16[128,128], index: 1, kind: input, shape index: {}]
  %s2 = inlined_call_operand.vmem [shape: f32[1,128], index: 2, kind: input, shape index: {}]
  %s3 = inlined_call_operand.vmem [shape: bf16[16,128], index: 3, kind: output, shape index: {}]
  %s4 = sld [smem:[#allocation0]]
  $region30: #{transformer_decoder_forward.19} parent=0
    _
  %s6 = ssub.s32 1, %s4
  %s7 = scalar_select 0, %s6, %s4
  // Predicated region
  $region2: #{transformer_decoder_forward.19} parent=0 // pred_check
    _
  $region3: #{transformer_decoder_forward.19} parent=0 // pred_check_branch
    %9 = sbr.rel (0) target = $region5
  $region4: #{transformer_decoder_forward.19} parent=0 // pred_region
    _
  $region5: #{transformer_decoder_forward.19} parent=0 // pred_fallthru
    _
  // Predicated region
  $region6: #{transformer_decoder_forward.19} parent=0 // pred_check
    _
  $region7: #{transformer_decoder_forward.19} parent=0 // pred_check_branch
    %11 = sbr.rel (0) target = $region9
  $region8: #{transformer_decoder_forward.19} parent=0 // pred_region
    _
  $region9: #{transformer_decoder_forward.19} parent=0 // pred_fallthru
    _
  // Predicated region
  $region10: #{transformer_decoder_forward.19} parent=0 // pred_check
    _
  $region11: #{transformer_decoder_forward.19} parent=0 // pred_check_branch
    %13 = sbr.rel (0) target = $region13
  $region12: #{transformer_decoder_forward.19} parent=0 // pred_region
    _
  $region13: #{transformer_decoder_forward.19} parent=0 // pred_fallthru
    _
  %p15 = scmp.eq.s32.totalorder 0, 0
  // Predicated region
  $region14: #{transformer_decoder_forward.19} parent=0 // pred_check
    %p16 = pneg %p15
  $region15: #{transformer_decoder_forward.19} parent=0 // pred_check_branch
    %18 = sbr.rel (%p16) target = $region17
  $region16: #{transformer_decoder_forward.19} parent=0 // pred_region
    %19 = vst [vmem:[#allocation2] sm:$0xff] 0.0
    %20 = vst [vmem:[#allocation2 + $0x8] sm:$0xff] 0.0
  $region17: #{transformer_decoder_forward.19} parent=0 // pred_fallthru
    _
  %v21 = vld [vmem:[#allocation2] sm:$0xff]
  %v22 = vld [vmem:[#allocation2 + $0x8] sm:$0xff]
  %v23 = vld [vmem:[%s0] sm:$0xf]
  %v24 = vld [vmem:[%s0 + $0x4] sm:$0xf]
  %v25 = vld [vmem:[%s1] sm:$0xf]
  %v26 = vld [vmem:[%s1 + $0x4] sm:$0xf]
  %v27 = vld [vmem:[%s1 + $0x8] sm:$0xf]
  %v28 = vld [vmem:[%s1 + $0xc] sm:$0xf]
  %v29 = vld [vmem:[%s1 + $0x10] sm:$0xf]
  %v30 = vld [vmem:[%s1 + $0x14] sm:$0xf]
  %v31 = vld [vmem:[%s1 + $0x18] sm:$0xf]
  %v32 = vld [vmem:[%s1 + $0x1c] sm:$0xf]
  %v33 = vld [vmem:[%s1 + $0x20] sm:$0xf]
  %v34 = vld [vmem:[%s1 + $0x24] sm:$0xf]
  %v35 = vld [vmem:[%s1 + $0x28] sm:$0xf]
  %v36 = vld [vmem:[%s1 + $0x2c] sm:$0xf]
  %v37 = vld [vmem:[%s1 + $0x30] sm:$0xf]
  %v38 = vld [vmem:[%s1 + $0x34] sm:$0xf]
  %v39 = vld [vmem:[%s1 + $0x38] sm:$0xf]
  %v40 = vld [vmem:[%s1 + $0x3c] sm:$0xf]
  %v43 = vunpack.c.l.b16 %v23
  %v44 = vunpack.c.l.b16 %v24
  %v45 = vpack.c.b16 %v44, %v43
  %v63 = vunpack.c.l.b16 %v25
  %v64 = vunpack.c.l.b16 %v26
  %v65 = vunpack.c.l.b16 %v27
  %v66 = vunpack.c.l.b16 %v28
  %v67 = vunpack.c.l.b16 %v29
  %v68 = vunpack.c.l.b16 %v30
  %v69 = vunpack.c.l.b16 %v31
  %v70 = vunpack.c.l.b16 %v32
  %v71 = vunpack.c.l.b16 %v33
  %v72 = vunpack.c.l.b16 %v34
  %v73 = vunpack.c.l.b16 %v35
  %v74 = vunpack.c.l.b16 %v36
  %v75 = vunpack.c.l.b16 %v37
  %v76 = vunpack.c.l.b16 %v38
  %v77 = vunpack.c.l.b16 %v39
  %v78 = vunpack.c.l.b16 %v40
  %v79 = vpack.c.b16 %v64, %v63
  %v80 = vpack.c.b16 %v66, %v65
  %v81 = vpack.c.b16 %v68, %v67
  %v82 = vpack.c.b16 %v70, %v69
  %v83 = vpack.c.b16 %v72, %v71
  %v84 = vpack.c.b16 %v74, %v73
  %v85 = vpack.c.b16 %v76, %v75
  %v86 = vpack.c.b16 %v78, %v77
  %95 = vmatprep.subr.bf16.mxu0 0
  %96 = vmatpush1.bf16.msra.mxu0 %v86
  %97 = vmatprep.subr.bf16.mxu0 0
  %98 = vmatpush1.bf16.msra.mxu0 %v85
  %99 = vmatprep.subr.bf16.mxu0 0
  %100 = vmatpush1.bf16.msra.mxu0 %v84
  %101 = vmatprep.subr.bf16.mxu0 0
  %102 = vmatpush1.bf16.msra.mxu0 %v83
  %103 = vmatprep.subr.bf16.mxu0 0
  %104 = vmatpush1.bf16.msra.mxu0 %v82
  %105 = vmatprep.subr.bf16.mxu0 0
  %106 = vmatpush1.bf16.msra.mxu0 %v81
  %107 = vmatprep.subr.bf16.mxu0 0
  %108 = vmatpush1.bf16.msra.mxu0 %v80
  %109 = vmatprep.subr.bf16.mxu0 0
  %110 = vmatpush1.bf16.msra.mxu0 %v79
  %111 = vmatprep.subr.bf16.mxu0 0
  %112 = vmatpush2.bf16.msra.mxu0 0
  %113 = vmatprep.subr.bf16.mxu0 0
  %114 = vmatpush2.bf16.msra.mxu0 0
  %115 = vmatprep.subr.bf16.mxu0 0
  %116 = vmatpush2.bf16.msra.mxu0 0
  %117 = vmatprep.subr.bf16.mxu0 0
  %118 = vmatpush2.bf16.msra.mxu0 0
  %119 = vmatprep.subr.bf16.mxu0 0
  %120 = vmatpush2.bf16.msra.mxu0 0
  %121 = vmatprep.subr.bf16.mxu0 0
  %122 = vmatpush2.bf16.msra.mxu0 0
  %123 = vmatprep.subr.bf16.mxu0 0
  %124 = vmatpush2.bf16.msra.mxu0 0
  %125 = vmatprep.subr.bf16.mxu0 0
  %126 = vmatpush2.bf16.msra.mxu0 0
  %127 = vmatprep.mubr.bf16.mxu0 0
  %128 = vmatmul.mubr.bf16.gmra.mxu0 %v45
  %v129 = vpop.f32.mrf.mxu0
  %v130 = vadd.f32 0.0, %v129
  %v131 = vpop.f32.mrf.mxu0
  %v132 = vpop.f32.mrf.mxu0
  %v133 = vadd.f32 0.0, %v132
  %v134 = vpop.f32.mrf.mxu0
  %135 = vdwg.mxu0
  %v136 = vadd.f32 %v21, %v130
  %v137 = vadd.f32 %v22, %v133
  %138 = vst [vmem:[#allocation2] sm:$0xff] %v136
  %139 = vst [vmem:[#allocation2 + $0x8] sm:$0xff] %v137
  // Predicated region
  $region18: #{transformer_decoder_forward.19} parent=0 // pred_check
    %p140 = pneg %p15
  $region19: #{transformer_decoder_forward.19} parent=0 // pred_check_branch
    %142 = sbr.rel (%p140) target = $region21
  $region20: #{transformer_decoder_forward.19} parent=0 // pred_region
    %v143 = vld [vmem:[#allocation2] sm:$0xff]
    %v144 = vld [vmem:[#allocation2 + $0x8] sm:$0xff]
    %v145 = vld [vmem:[%s2] sm:$0x1]
    %v147 = vlaneseq
    %v148 = vshrl.u32 %v147, 7
    %v149 = vsub.s32 0, %v148
    %v150 = vrot.slane %v145, %v149
    %v152 = vadd.f32 %v143, %v150
    %v153 = vadd.f32 %v144, %v150
    %v154 = vpack.c.bf16 %v153, %v152
    %v156 = vunpack.c.l.b16 %v154
    %v157 = vunpack.c.h.b16 %v154
    %v158 = vpack.c.b16 %v156, %v156
    %v159 = vpack.c.b16 %v157, %v157
    %162 = vst [vmem:[%s3] sm:$0xf] %v158
    %163 = vst [vmem:[%s3 + $0x4] sm:$0xf] %v159
  $region21: #{transformer_decoder_forward.19} parent=0 // pred_fallthru
    _
  // Predicated region
  $region22: #{transformer_decoder_forward.19} parent=0 // pred_check
    _
  $region23: #{transformer_decoder_forward.19} parent=0 // pred_check_branch
    %165 = sbr.rel (0) target = $region25
  $region24: #{transformer_decoder_forward.19} parent=0 // pred_region
    _
  $region25: #{transformer_decoder_forward.19} parent=0 // pred_fallthru
    _
  // Predicated region
  $region26: #{transformer_decoder_forward.19} parent=0 // pred_check
    _
  $region27: #{transformer_decoder_forward.19} parent=0 // pred_check_branch
    %167 = sbr.rel (0) target = $region29
  $region28: #{transformer_decoder_forward.19} parent=0 // pred_region
    _
  $region29: #{transformer_decoder_forward.19} parent=0 // pred_fallthru
    _

// kernel: transformer_decoder_forward.21
$region0: #{transformer_decoder_forward.21}
  #allocation0 [shape = 'u32[]', space=smem, size = 0x4, offset = 0x4, fixed_abs, tag = 'smem constant byte address 0x4 - core index']
  #allocation1 [shape = 'u32[144,128]{1,0:T(1,128)}', space=vmem, size = 0x12000, scoped, tag = 'internal scratch']
  #allocation2 [shape = 'f32[16,32]{1,0:T(8,128)}', space=vmem, size = 0x2000, scoped, tag = 'scratch operand']
  %s0 = inlined_call_operand.vmem [shape: bf16[16,128], index: 0, kind: input, shape index: {}]
  %s1 = inlined_call_operand.vmem [shape: bf16[128,32], index: 1, kind: input, shape index: {}]
  %s2 = inlined_call_operand.vmem [shape: f32[1,32], index: 2, kind: input, shape index: {}]
  %s3 = inlined_call_operand.vmem [shape: bf16[16,32], index: 3, kind: input, shape index: {}]
  %s4 = inlined_call_operand.vmem [shape: f32[1,32], index: 4, kind: input, shape index: {}]
  %s5 = inlined_call_operand.vmem [shape: f32[1,32], index: 5, kind: input, shape index: {}]
  %s6 = inlined_call_operand.vmem [shape: bf16[16,32], index: 6, kind: output, shape index: {}]
  %s7 = sld [smem:[#allocation0]]
  $region42: #{transformer_decoder_forward.21} parent=0
    _
  %s9 = ssub.s32 1, %s7
  %s10 = scalar_select 0, %s9, %s7
  // Predicated region
  $region2: #{transformer_decoder_forward.21} parent=0 // pred_check
    _
  $region3: #{transformer_decoder_forward.21} parent=0 // pred_check_branch
    %12 = sbr.rel (0) target = $region5
  $region4: #{transformer_decoder_forward.21} parent=0 // pred_region
    _
  $region5: #{transformer_decoder_forward.21} parent=0 // pred_fallthru
    _
  // Predicated region
  $region6: #{transformer_decoder_forward.21} parent=0 // pred_check
    _
  $region7: #{transformer_decoder_forward.21} parent=0 // pred_check_branch
    %14 = sbr.rel (0) target = $region9
  $region8: #{transformer_decoder_forward.21} parent=0 // pred_region
    _
  $region9: #{transformer_decoder_forward.21} parent=0 // pred_fallthru
    _
  // Predicated region
  $region10: #{transformer_decoder_forward.21} parent=0 // pred_check
    _
  $region11: #{transformer_decoder_forward.21} parent=0 // pred_check_branch
    %16 = sbr.rel (0) target = $region13
  $region12: #{transformer_decoder_forward.21} parent=0 // pred_region
    _
  $region13: #{transformer_decoder_forward.21} parent=0 // pred_fallthru
    _
  // Predicated region
  $region14: #{transformer_decoder_forward.21} parent=0 // pred_check
    _
  $region15: #{transformer_decoder_forward.21} parent=0 // pred_check_branch
    %18 = sbr.rel (0) target = $region17
  $region16: #{transformer_decoder_forward.21} parent=0 // pred_region
    _
  $region17: #{transformer_decoder_forward.21} parent=0 // pred_fallthru
    _
  // Predicated region
  $region18: #{transformer_decoder_forward.21} parent=0 // pred_check
    _
  $region19: #{transformer_decoder_forward.21} parent=0 // pred_check_branch
    %20 = sbr.rel (0) target = $region21
  $region20: #{transformer_decoder_forward.21} parent=0 // pred_region
    _
  $region21: #{transformer_decoder_forward.21} parent=0 // pred_fallthru
    _
  // Predicated region
  $region22: #{transformer_decoder_forward.21} parent=0 // pred_check
    _
  $region23: #{transformer_decoder_forward.21} parent=0 // pred_check_branch
    %22 = sbr.rel (0) target = $region25
  $region24: #{transformer_decoder_forward.21} parent=0 // pred_region
    _
  $region25: #{transformer_decoder_forward.21} parent=0 // pred_fallthru
    _
  %p24 = scmp.eq.s32.totalorder 0, 0
  // Predicated region
  $region26: #{transformer_decoder_forward.21} parent=0 // pred_check
    %p25 = pneg %p24
  $region27: #{transformer_decoder_forward.21} parent=0 // pred_check_branch
    %27 = sbr.rel (%p25) target = $region29
  $region28: #{transformer_decoder_forward.21} parent=0 // pred_region
    %vm28 = vcmask 261120
    %29 = vst.msk [vmem:[#allocation2] sm:$0xff] %vm28, 0.0
    %30 = vst.msk [vmem:[#allocation2 + $0x8] sm:$0xff] %vm28, 0.0
  $region29: #{transformer_decoder_forward.21} parent=0 // pred_fallthru
    _
  %v31 = vld [vmem:[#allocation2] sm:$0xff]
  %v32 = vld [vmem:[#allocation2 + $0x8] sm:$0xff]
  %v33 = vld [vmem:[%s0] sm:$0xf]
  %v34 = vld [vmem:[%s0 + $0x4] sm:$0xf]
  %v35 = vld [vmem:[%s1] sm:$0xf]
  %v36 = vld [vmem:[%s1 + $0x4] sm:$0xf]
  %v37 = vld [vmem:[%s1 + $0x8] sm:$0xf]
  %v38 = vld [vmem:[%s1 + $0xc] sm:$0xf]
  %v39 = vld [vmem:[%s1 + $0x10] sm:$0xf]
  %v40 = vld [vmem:[%s1 + $0x14] sm:$0xf]
  %v41 = vld [vmem:[%s1 + $0x18] sm:$0xf]
  %v42 = vld [vmem:[%s1 + $0x1c] sm:$0xf]
  %v43 = vld [vmem:[%s1 + $0x20] sm:$0xf]
  %v44 = vld [vmem:[%s1 + $0x24] sm:$0xf]
  %v45 = vld [vmem:[%s1 + $0x28] sm:$0xf]
  %v46 = vld [vmem:[%s1 + $0x2c] sm:$0xf]
  %v47 = vld [vmem:[%s1 + $0x30] sm:$0xf]
  %v48 = vld [vmem:[%s1 + $0x34] sm:$0xf]
  %v49 = vld [vmem:[%s1 + $0x38] sm:$0xf]
  %v50 = vld [vmem:[%s1 + $0x3c] sm:$0xf]
  %v53 = vunpack.c.l.b16 %v33
  %v54 = vunpack.c.l.b16 %v34
  %v55 = vpack.c.b16 %v54, %v53
  %v73 = vunpack.c.l.b16 %v35
  %v74 = vunpack.c.l.b16 %v36
  %v75 = vunpack.c.l.b16 %v37
  %v76 = vunpack.c.l.b16 %v38
  %v77 = vunpack.c.l.b16 %v39
  %v78 = vunpack.c.l.b16 %v40
  %v79 = vunpack.c.l.b16 %v41
  %v80 = vunpack.c.l.b16 %v42
  %v81 = vunpack.c.l.b16 %v43
  %v82 = vunpack.c.l.b16 %v44
  %v83 = vunpack.c.l.b16 %v45
  %v84 = vunpack.c.l.b16 %v46
  %v85 = vunpack.c.l.b16 %v47
  %v86 = vunpack.c.l.b16 %v48
  %v87 = vunpack.c.l.b16 %v49
  %v88 = vunpack.c.l.b16 %v50
  %v89 = vpack.c.b16 %v74, %v73
  %v90 = vpack.c.b16 %v76, %v75
  %v91 = vpack.c.b16 %v78, %v77
  %v92 = vpack.c.b16 %v80, %v79
  %v93 = vpack.c.b16 %v82, %v81
  %v94 = vpack.c.b16 %v84, %v83
  %v95 = vpack.c.b16 %v86, %v85
  %v96 = vpack.c.b16 %v88, %v87
  %105 = vmatprep.subr.bf16.mxu0 0
  %106 = vmatpush1.bf16.msra.mxu0 %v96
  %107 = vmatprep.subr.bf16.mxu0 0
  %108 = vmatpush1.bf16.msra.mxu0 %v95
  %109 = vmatprep.subr.bf16.mxu0 0
  %110 = vmatpush1.bf16.msra.mxu0 %v94
  %111 = vmatprep.subr.bf16.mxu0 0
  %112 = vmatpush1.bf16.msra.mxu0 %v93
  %113 = vmatprep.subr.bf16.mxu0 0
  %114 = vmatpush1.bf16.msra.mxu0 %v92
  %115 = vmatprep.subr.bf16.mxu0 0
  %116 = vmatpush1.bf16.msra.mxu0 %v91
  %117 = vmatprep.subr.bf16.mxu0 0
  %118 = vmatpush1.bf16.msra.mxu0 %v90
  %119 = vmatprep.subr.bf16.mxu0 0
  %120 = vmatpush1.bf16.msra.mxu0 %v89
  %121 = vmatprep.subr.bf16.mxu0 0
  %122 = vmatpush2.bf16.msra.mxu0 0
  %123 = vmatprep.subr.bf16.mxu0 0
  %124 = vmatpush2.bf16.msra.mxu0 0
  %125 = vmatprep.subr.bf16.mxu0 0
  %126 = vmatpush2.bf16.msra.mxu0 0
  %127 = vmatprep.subr.bf16.mxu0 0
  %128 = vmatpush2.bf16.msra.mxu0 0
  %129 = vmatprep.subr.bf16.mxu0 0
  %130 = vmatpush2.bf16.msra.mxu0 0
  %131 = vmatprep.subr.bf16.mxu0 0
  %132 = vmatpush2.bf16.msra.mxu0 0
  %133 = vmatprep.subr.bf16.mxu0 0
  %134 = vmatpush2.bf16.msra.mxu0 0
  %135 = vmatprep.subr.bf16.mxu0 0
  %136 = vmatpush2.bf16.msra.mxu0 0
  %137 = vmatprep.mubr.bf16.mxu0 0
  %138 = vmatmul.mubr.bf16.gmra.mxu0 %v55
  %v139 = vpop.f32.mrf.mxu0
  %v140 = vadd.f32 0.0, %v139
  %v141 = vpop.f32.mrf.mxu0
  %v142 = vpop.f32.mrf.mxu0
  %v143 = vadd.f32 0.0, %v142
  %v144 = vpop.f32.mrf.mxu0
  %145 = vdwg.mxu0
  %v146 = vadd.f32 %v31, %v140
  %v147 = vadd.f32 %v32, %v143
  %vm148 = vcmask 261120
  %149 = vst.msk [vmem:[#allocation2] sm:$0xff] %vm148, %v146
  %150 = vst.msk [vmem:[#allocation2 + $0x8] sm:$0xff] %vm148, %v147
  // Predicated region
  $region30: #{transformer_decoder_forward.21} parent=0 // pred_check
    %p151 = pneg %p24
  $region31: #{transformer_decoder_forward.21} parent=0 // pred_check_branch
    %153 = sbr.rel (%p151) target = $region33
  $region32: #{transformer_decoder_forward.21} parent=0 // pred_region
    %v154 = vld [vmem:[#allocation2] sm:$0xff]
    %v155 = vld [vmem:[#allocation2 + $0x8] sm:$0xff]
    %v156 = vld [vmem:[%s2] sm:$0x1]
    %v158 = vlaneseq
    %v159 = vshrl.u32 %v158, 7
    %v160 = vsub.s32 0, %v159
    %v161 = vrot.slane %v156, %v160
    %v163 = vadd.f32 %v154, %v161
    %v164 = vadd.f32 %v155, %v161
    %v165 = vld [vmem:[%s3] sm:$0xf]
    %v166 = vld [vmem:[%s3 + $0x4] sm:$0xf]
    %v167 = vunpack.c.l.bf16 %v165
    %v168 = vunpack.c.l.bf16 %v166
    %v169 = vadd.f32 %v163, %v167
    %v170 = vadd.f32 %v164, %v168
    %v171 = vsel %vm148, %v169, 0.0
    %172 = vadd.xlane.f32.xlu0 %v171
    %v173 = vpop.xlane.xlu0 %172
    %v174 = vsel %vm148, %v170, 0.0
    %175 = vadd.xlane.f32.xlu0 %v174
    %v176 = vpop.xlane.xlu0 %175
    %v177 = vrcp.pop 32.0
    %v178 = vmul.f32 %v173, %v177
    %v179 = vmul.f32 %v176, %v177
    %v180 = vsub.f32 %v169, %v178
    %v181 = vsub.f32 %v170, %v179
    %v182 = vmul.f32 %v180, %v180
    %v183 = vmul.f32 %v181, %v181
    %v184 = vsel %vm148, %v182, 0.0
    %185 = vadd.xlane.f32.xlu0 %v184
    %v186 = vpop.xlane.xlu0 %185
    %v187 = vsel %vm148, %v183, 0.0
    %188 = vadd.xlane.f32.xlu0 %v187
    %v189 = vpop.xlane.xlu0 %188
    %v190 = vmul.f32 %v186, %v177
    %v191 = vmul.f32 %v189, %v177
    %v192 = vadd.f32 %v190, 1e-05
    %v193 = vadd.f32 %v191, 1e-05
    %v194 = vrsqrt.pop %v192
    %v195 = vrsqrt.pop %v193
    %v196 = vmul.f32 %v180, %v194
    %v197 = vmul.f32 %v181, %v195
    %v198 = vld [vmem:[%s4] sm:$0x1]
    %v200 = vlaneseq
    %v201 = vshrl.u32 %v200, 7
    %v202 = vsub.s32 0, %v201
    %v203 = vrot.slane %v198, %v202
    %v205 = vmul.f32 %v196, %v203
    %v206 = vmul.f32 %v197, %v203
    %v207 = vld [vmem:[%s5] sm:$0x1]
    %v209 = vlaneseq
    %v210 = vshrl.u32 %v209, 7
    %v211 = vsub.s32 0, %v210
    %v212 = vrot.slane %v207, %v211
    %v214 = vadd.f32 %v205, %v212
    %v215 = vadd.f32 %v206, %v212
    %v216 = vpack.c.bf16 %v215, %v214
    %v218 = vunpack.c.l.b16 %v216
    %v219 = vunpack.c.h.b16 %v216
    %v220 = vpack.c.b16 %v218, %v218
    %v221 = vpack.c.b16 %v219, %v219
    %vm224 = vcmask 257024
    %225 = vst.msk [vmem:[%s6] sm:$0xf] %vm224, %v220
    %226 = vst.msk [vmem:[%s6 + $0x4] sm:$0xf] %vm224, %v221
  $region33: #{transformer_decoder_forward.21} parent=0 // pred_fallthru
    _
  // Predicated region
  $region34: #{transformer_decoder_forward.21} parent=0 // pred_check
    _
  $region35: #{transformer_decoder_forward.21} parent=0 // pred_check_branch
    %228 = sbr.rel (0) target = $region37
  $region36: #{transformer_decoder_forward.21} parent=0 // pred_region
    _
  $region37: #{transformer_decoder_forward.21} parent=0 // pred_fallthru
    _
  // Predicated region
  $region38: #{transformer_decoder_forward.21} parent=0 // pred_check
    _
  $region39: #{transformer_decoder_forward.21} parent=0 // pred_check_branch
    %230 = sbr.rel (0) target = $region41
  $region40: #{transformer_decoder_forward.21} parent=0 // pred_region
    _
  $region41: #{transformer_decoder_forward.21} parent=0 // pred_fallthru
    _

// kernel: transformer_decoder_forward.20
$region0: #{transformer_decoder_forward.20}
  #allocation0 [shape = 'u32[]', space=smem, size = 0x4, offset = 0x4, fixed_abs, tag = 'smem constant byte address 0x4 - core index']
  #allocation1 [shape = 'u32[144,128]{1,0:T(1,128)}', space=vmem, size = 0x12000, scoped, tag = 'internal scratch']
  %s0 = inlined_call_operand.vmem [shape: bf16[2,8,96], index: 0, kind: input, shape index: {}]
  %s1 = inlined_call_operand.vmem [shape: f32[2,8,8], index: 1, kind: input, shape index: {}]
  %s2 = inlined_call_operand.vmem [shape: bf16[2,8,32], index: 2, kind: output, shape index: {}]
  %s3 = sld [smem:[#allocation0]]
  $region41: #{transformer_decoder_forward.20} parent=0
    _
  %s5 = ssub.s32 1, %s3
  %s6 = scalar_select 0, %s5, %s3
  loop: start=0, step=1, limit=4
  $region2: #{transformer_decoder_forward.20} parent=0 // loop_pre_header
    _
  $region3: #{transformer_decoder_forward.20} parent=0 // loop_header
    %s8 = sphi 0, %s12
    %p9 = scmp.ge.s32.totalorder %s8, 4
    %s18 = sphi 0, %s20
    %s21 = sphi 0, %s18
    %s22 = sphi 0, %s21
    %s38 = sphi 0, %s22
    %s44 = sphi 0, %s46
    %s47 = sphi 0, %s44
    %s48 = sphi 0, %s47
    %s64 = sphi 0, %s48
    %s70 = sphi 0, %s72
    %s73 = sphi 0, %s70
    %s74 = sphi 0, %s73
    %s90 = sphi 0, %s74
  $region4: #{transformer_decoder_forward.20} parent=0 // loop_header_branch
    %11 = sbr.rel (%p9) target = $region8
  $region5: #{transformer_decoder_forward.20} parent=0 // loop_body
    %s13 = ssub.s32 %s8, 1
    %s14 = ssub.s32 %s8, 2
    %s15 = sadd.s32 %s8, 1
    %s16 = ssub.s32 %s8, %s15
    %p17 = scmp.eq.s32.totalorder %s16, 0
    %s19 = sadd.s32 %s18, 1
    %s20 = scalar_select %p17, %s18, %s19
    %p23 = pneg %p17
    %p24 = scmp.eq.s32.totalorder %s8, 1
    %p25 = por %p23, %p24
    %p26 = scmp.ne.s32.totalorder %s18, %s21
    %p27 = scmp.eq.s32.totalorder %s8, 0
    %p28 = por %p26, %p27
    %p29 = scmp.ne.s32.totalorder %s18, %s21
    %p30 = scmp.eq.s32.totalorder %s13, 1
    %p31 = por %p29, %p30
    %p32 = scmp.ne.s32.totalorder %s21, %s22
    %p33 = scmp.eq.s32.totalorder %s13, 0
    %p34 = por %p32, %p33
    %p35 = scmp.ne.s32.totalorder %s21, %s22
    %p36 = scmp.eq.s32.totalorder %s14, 1
    %p37 = por %p35, %p36
    %p39 = scmp.ne.s32.totalorder %s22, %s38
    %p40 = scmp.eq.s32.totalorder %s14, 0
    %p41 = por %p39, %p40
    %s42 = ssub.s32 %s8, %s15
    %p43 = scmp.eq.s32.totalorder %s42, 0
    %s45 = sadd.s32 %s44, 1
    %s46 = scalar_select %p43, %s44, %s45
    %p49 = pneg %p43
    %p50 = scmp.eq.s32.totalorder %s8, 1
    %p51 = por %p49, %p50
    %p52 = scmp.ne.s32.totalorder %s44, %s47
    %p53 = scmp.eq.s32.totalorder %s8, 0
    %p54 = por %p52, %p53
    %p55 = scmp.ne.s32.totalorder %s44, %s47
    %p56 = scmp.eq.s32.totalorder %s13, 1
    %p57 = por %p55, %p56
    %p58 = scmp.ne.s32.totalorder %s47, %s48
    %p59 = scmp.eq.s32.totalorder %s13, 0
    %p60 = por %p58, %p59
    %p61 = scmp.ne.s32.totalorder %s47, %s48
    %p62 = scmp.eq.s32.totalorder %s14, 1
    %p63 = por %p61, %p62
    %p65 = scmp.ne.s32.totalorder %s48, %s64
    %p66 = scmp.eq.s32.totalorder %s14, 0
    %p67 = por %p65, %p66
    %s68 = ssub.s32 %s8, %s15
    %p69 = scmp.eq.s32.totalorder %s68, 0
    %s71 = sadd.s32 %s70, 1
    %s72 = scalar_select %p69, %s70, %s71
    %p75 = pneg %p69
    %p76 = scmp.eq.s32.totalorder %s8, 1
    %p77 = por %p75, %p76
    %p78 = scmp.ne.s32.totalorder %s70, %s73
    %p79 = scmp.eq.s32.totalorder %s8, 0
    %p80 = por %p78, %p79
    %p81 = scmp.ne.s32.totalorder %s70, %s73
    %p82 = scmp.eq.s32.totalorder %s13, 1
    %p83 = por %p81, %p82
    %p84 = scmp.ne.s32.totalorder %s73, %s74
    %p85 = scmp.eq.s32.totalorder %s13, 0
    %p86 = por %p84, %p85
    %p87 = scmp.ne.s32.totalorder %s73, %s74
    %p88 = scmp.eq.s32.totalorder %s14, 1
    %p89 = por %p87, %p88
    %p91 = scmp.ne.s32.totalorder %s74, %s90
    %p92 = scmp.eq.s32.totalorder %s14, 0
    %p93 = por %p91, %p92
    %p94 = scmp.le.s32.totalorder 1, %s8
    %p95 = scmp.lt.s32.totalorder %s8, 3
    %p96 = pnand %p94, %p95
    %p97 = pneg %p96
    // Predicated region
    $region9: #{transformer_decoder_forward.20} parent=5 // pred_check
      _
    $region10: #{transformer_decoder_forward.20} parent=5 // pred_check_branch
      %99 = sbr.rel (%p96) target = $region12
    $region11: #{transformer_decoder_forward.20} parent=5 // pred_region
      %s100 = ssub.s32 %s8, 1
    $region12: #{transformer_decoder_forward.20} parent=5 // pred_fallthru
      _
    %p101 = scmp.lt.s32.totalorder %s8, 2
    // Predicated region
    $region13: #{transformer_decoder_forward.20} parent=5 // pred_check
      %p102 = pneg %p101
    $region14: #{transformer_decoder_forward.20} parent=5 // pred_check_branch
      %104 = sbr.rel (%p102) target = $region16
    $region15: #{transformer_decoder_forward.20} parent=5 // pred_region
      // Predicated region
      $region17: #{transformer_decoder_forward.20} parent=15 // pred_check
        %p105 = pneg %p28
      $region18: #{transformer_decoder_forward.20} parent=15 // pred_check_branch
        %107 = sbr.rel (%p105) target = $region20
      $region19: #{transformer_decoder_forward.20} parent=15 // pred_region
        %p108 = scmp.lt.s32.totalorder %s8, 1
        %s109 = scalar_select %p108, %s8, 1
        %s110 = smul.addr %s109, 4
        %s111 = scalar_lea.vmem %s0, %s110
      $region20: #{transformer_decoder_forward.20} parent=15 // pred_fallthru
        _
      // Predicated region
      $region21: #{transformer_decoder_forward.20} parent=15 // pred_check
        %p112 = pneg %p54
      $region22: #{transformer_decoder_forward.20} parent=15 // pred_check_branch
        %114 = sbr.rel (%p112) target = $region24
      $region23: #{transformer_decoder_forward.20} parent=15 // pred_region
        %p115 = scmp.lt.s32.totalorder %s8, 1
        %s116 = scalar_select %p115, %s8, 1
        %s117 = smul.addr %s116, 8
        %s118 = scalar_lea.vmem %s1, %s117
      $region24: #{transformer_decoder_forward.20} parent=15 // pred_fallthru
        _
    $region16: #{transformer_decoder_forward.20} parent=5 // pred_fallthru
      _
    %p119 = scmp.le.s32.totalorder 1, %s8
    %p120 = scmp.lt.s32.totalorder %s8, 3
    %p121 = pnand %p119, %p120
    %p122 = pneg %p121
    // Predicated region
    $region25: #{transformer_decoder_forward.20} parent=5 // pred_check
      _
    $region26: #{transformer_decoder_forward.20} parent=5 // pred_check_branch
      %124 = sbr.rel (%p121) target = $region28
    $region27: #{transformer_decoder_forward.20} parent=5 // pred_region
      %s125 = ssub.s32 %s8, 1
      %p126 = scmp.lt.s32.totalorder %s13, 1
      %s127 = scalar_select %p126, %s13, 1
      %s128 = smul.addr %s127, 4
      %s129 = scalar_lea.vmem %s0, %s128
      %p130 = pneg %p34
      %p131 = pneg %p31
      %p132 = scmp.lt.s32.totalorder %s13, 1
      %s133 = scalar_select %p132, %s13, 1
      %s134 = smul.addr %s133, 8
      %s135 = scalar_lea.vmem %s1, %s134
      %p136 = pneg %p60
      %p137 = pneg %p57
      %p138 = pneg %p86
      %p139 = pneg %p83
      %p140 = scmp.lt.s32.totalorder %s13, 1
      %s141 = scalar_select %p140, %s13, 1
      %s142 = smul.addr %s141, 4
      %s143 = scalar_lea.vmem %s2, %s142
      %p144 = scmp.lt.s32.totalorder %s13, 1
      %s145 = scalar_select %p144, %s13, 1
      %s146 = smul.addr %s145, 4
      %s147 = scalar_lea.vmem %s0, %s146
      %p148 = scmp.lt.s32.totalorder %s13, 1
      %s149 = scalar_select %p148, %s13, 1
      %s150 = smul.addr %s149, 8
      %s151 = scalar_lea.vmem %s1, %s150
      %p152 = scmp.lt.s32.totalorder %s13, 1
      %s153 = scalar_select %p152, %s13, 1
      %s154 = smul.addr %s153, 4
      %s155 = scalar_lea.vmem %s2, %s154
      %v157 = vld [vmem:[%s151] sm:$0xff]
      %v158 = vld [vmem:[%s147] sm:$0xf]
      %v160 = vunpack.c.l.b16 %v158
      %v161 = vpack.c.b16 %v160, %v160
      %162 = vrot.lane.b32.xlu0 %v161, 96
      %v163 = vpop.permute.xlu0 %162
      %vm164 = vcmask 64512
      %v166 = vsel %vm164, %v158, 0
      %v169 = vsel %vm164, %v163, 0
      %171 = vmatprep.subr.bf16.mxu0 0
      %172 = vmatpush1.bf16.xpose.msra.mxu0 0
      %173 = vmatprep.subr.bf16.mxu0 0
      %174 = vmatpush1.bf16.xpose.msra.mxu0 0
      %175 = vmatprep.subr.bf16.mxu0 0
      %176 = vmatpush1.bf16.xpose.msra.mxu0 0
      %177 = vmatprep.subr.bf16.mxu0 0
      %178 = vmatpush1.bf16.xpose.msra.mxu0 0
      %179 = vmatprep.subr.bf16.mxu0 0
      %180 = vmatpush1.bf16.xpose.msra.mxu0 0
      %181 = vmatprep.subr.bf16.mxu0 0
      %182 = vmatpush1.bf16.xpose.msra.mxu0 0
      %183 = vmatprep.subr.bf16.mxu0 0
      %184 = vmatpush1.bf16.xpose.msra.mxu0 0
      %185 = vmatprep.subr.bf16.mxu0 0
      %186 = vmatpush1.bf16.xpose.msra.mxu0 %v169
      %187 = vmatprep.subr.bf16.mxu0 0
      %188 = vmatpush2.bf16.xpose.msra.mxu0 0
      %189 = vmatprep.subr.bf16.mxu0 0
      %190 = vmatpush2.bf16.xpose.msra.mxu0 0
      %191 = vmatprep.subr.bf16.mxu0 0
      %192 = vmatpush2.bf16.xpose.msra.mxu0 0
      %193 = vmatprep.subr.bf16.mxu0 0
      %194 = vmatpush2.bf16.xpose.msra.mxu0 0
      %195 = vmatprep.subr.bf16.mxu0 0
      %196 = vmatpush2.bf16.xpose.msra.mxu0 0
      %197 = vmatprep.subr.bf16.mxu0 0
      %198 = vmatpush2.bf16.xpose.msra.mxu0 0
      %199 = vmatprep.subr.bf16.mxu0 0
      %200 = vmatpush2.bf16.xpose.msra.mxu0 0
      %201 = vmatprep.subr.bf16.mxu0 0
      %202 = vmatpush2.bf16.xpose.msra.mxu0 0
      %203 = vmatprep.mubr.bf16.mxu0 0
      %204 = vmatmul.mubr.bf16.gmra.mxu0 %v166
      %v205 = vpop.f32.mrf.mxu0
      %v206 = vadd.f32 %v157, %v205
      %v207 = vpop.f32.mrf.mxu0
      %v208 = vpop.f32.mrf.mxu0
      %v209 = vpop.f32.mrf.mxu0
      %210 = vdwg.mxu0
      %v211 = vsel %vm164, %v206, -inf
      %212 = vmax.xlane.f32.xlu0 %v211
      %v213 = vpop.xlane.xlu0 %212
      %v214 = vsub.f32 %v206, %v213
      %v215 = vmul.f32 %v214, 1.442695
      %v216 = vpow.pop %v215
      %v217 = vsel %vm164, %v216, 0.0
      %218 = vadd.xlane.f32.xlu0 %v217
      %v219 = vpop.xlane.xlu0 %218
      %v220 = vrcp.pop %v219
      %v221 = vmul.f32 %v216, %v220
      %v222 = vpack.c.bf16 %v221, %v221
      %223 = vrot.lane.b32.xlu0 %v161, 64
      %v224 = vpop.permute.xlu0 %223
      %v226 = vsel %vm164, %v222, 0
      %vm228 = vcmask 1043456
      %v230 = vsel %vm228, %v224, 0
      %232 = vmatprep.subr.bf16.mxu0 0
      %233 = vmatpush1.bf16.msra.mxu0 0
      %234 = vmatprep.subr.bf16.mxu0 0
      %235 = vmatpush1.bf16.msra.mxu0 0
      %236 = vmatprep.subr.bf16.mxu0 0
      %237 = vmatpush1.bf16.msra.mxu0 0
      %238 = vmatprep.subr.bf16.mxu0 0
      %239 = vmatpush1.bf16.msra.mxu0 0
      %240 = vmatprep.subr.bf16.mxu0 0
      %241 = vmatpush1.bf16.msra.mxu0 0
      %242 = vmatprep.subr.bf16.mxu0 0
      %243 = vmatpush1.bf16.msra.mxu0 0
      %244 = vmatprep.subr.bf16.mxu0 0
      %245 = vmatpush1.bf16.msra.mxu0 0
      %246 = vmatprep.subr.bf16.mxu0 0
      %247 = vmatpush1.bf16.msra.mxu0 %v230
      %248 = vmatprep.subr.bf16.mxu0 0
      %249 = vmatpush2.bf16.msra.mxu0 0
      %250 = vmatprep.subr.bf16.mxu0 0
      %251 = vmatpush2.bf16.msra.mxu0 0
      %252 = vmatprep.subr.bf16.mxu0 0
      %253 = vmatpush2.bf16.msra.mxu0 0
      %254 = vmatprep.subr.bf16.mxu0 0
      %255 = vmatpush2.bf16.msra.mxu0 0
      %256 = vmatprep.subr.bf16.mxu0 0
      %257 = vmatpush2.bf16.msra.mxu0 0
      %258 = vmatprep.subr.bf16.mxu0 0
      %259 = vmatpush2.bf16.msra.mxu0 0
      %260 = vmatprep.subr.bf16.mxu0 0
      %261 = vmatpush2.bf16.msra.mxu0 0
      %262 = vmatprep.subr.bf16.mxu0 0
      %263 = vmatpush2.bf16.msra.mxu0 0
      %264 = vmatprep.mubr.bf16.mxu0 0
      %265 = vmatmul.mubr.bf16.gmra.mxu0 %v226
      %v266 = vpop.f32.mrf.mxu0
      %v267 = vadd.f32 0.0, %v266
      %v268 = vpop.f32.mrf.mxu0
      %v269 = vpop.f32.mrf.mxu0
      %v270 = vpop.f32.mrf.mxu0
      %271 = vdwg.mxu0
      %v272 = vpack.c.bf16 %v267, %v267
      %vm273 = vcmask 60416
      %274 = vst.msk [vmem:[%s155] sm:$0xf] %vm273, %v272
      %v275 = vld [vmem:[%s147] sm:$0xf]
      %v277 = vunpack.c.l.b16 %v275
      %v278 = vpack.c.b16 %v277, %v277
      %279 = vrot.lane.b32.xlu0 %v278, 120
      %v280 = vpop.permute.xlu0 %279
      %281 = vrot.lane.b32.xlu0 %v278, 88
      %v282 = vpop.permute.xlu0 %281
      %v284 = vsel %vm164, %v280, 0
      %v287 = vsel %vm164, %v282, 0
      %289 = vmatprep.subr.bf16.mxu0 0
      %290 = vmatpush1.bf16.xpose.msra.mxu0 0
      %291 = vmatprep.subr.bf16.mxu0 0
      %292 = vmatpush1.bf16.xpose.msra.mxu0 0
      %293 = vmatprep.subr.bf16.mxu0 0
      %294 = vmatpush1.bf16.xpose.msra.mxu0 0
      %295 = vmatprep.subr.bf16.mxu0 0
      %296 = vmatpush1.bf16.xpose.msra.mxu0 0
      %297 = vmatprep.subr.bf16.mxu0 0
      %298 = vmatpush1.bf16.xpose.msra.mxu0 0
      %299 = vmatprep.subr.bf16.mxu0 0
      %300 = vmatpush1.bf16.xpose.msra.mxu0 0
      %301 = vmatprep.subr.bf16.mxu0 0
      %302 = vmatpush1.bf16.xpose.msra.mxu0 0
      %303 = vmatprep.subr.bf16.mxu0 0
      %304 = vmatpush1.bf16.xpose.msra.mxu0 %v287
      %305 = vmatprep.subr.bf16.mxu0 0
      %306 = vmatpush2.bf16.xpose.msra.mxu0 0
      %307 = vmatprep.subr.bf16.mxu0 0
      %308 = vmatpush2.bf16.xpose.msra.mxu0 0
      %309 = vmatprep.subr.bf16.mxu0 0
      %310 = vmatpush2.bf16.xpose.msra.mxu0 0
      %311 = vmatprep.subr.bf16.mxu0 0
      %312 = vmatpush2.bf16.xpose.msra.mxu0 0
      %313 = vmatprep.subr.bf16.mxu0 0
      %314 = vmatpush2.bf16.xpose.msra.mxu0 0
      %315 = vmatprep.subr.bf16.mxu0 0
      %316 = vmatpush2.bf16.xpose.msra.mxu0 0
      %317 = vmatprep.subr.bf16.mxu0 0
      %318 = vmatpush2.bf16.xpose.msra.mxu0 0
      %319 = vmatprep.subr.bf16.mxu0 0
      %320 = vmatpush2.bf16.xpose.msra.mxu0 0
      %321 = vmatprep.mubr.bf16.mxu0 0
      %322 = vmatmul.mubr.bf16.gmra.mxu0 %v284
      %v323 = vpop.f32.mrf.mxu0
      %v324 = vadd.f32 %v157, %v323
      %v325 = vpop.f32.mrf.mxu0
      %v326 = vpop.f32.mrf.mxu0
      %v327 = vpop.f32.mrf.mxu0
      %328 = vdwg.mxu0
      %v329 = vsel %vm164, %v324, -inf
      %330 = vmax.xlane.f32.xlu0 %v329
      %v331 = vpop.xlane.xlu0 %330
      %v332 = vsub.f32 %v324, %v331
      %v333 = vmul.f32 %v332, 1.442695
      %v334 = vpow.pop %v333
      %v335 = vsel %vm164, %v334, 0.0
      %336 = vadd.xlane.f32.xlu0 %v335
      %v337 = vpop.xlane.xlu0 %336
      %v338 = vrcp.pop %v337
      %v339 = vmul.f32 %v334, %v338
      %v340 = vpack.c.bf16 %v339, %v339
      %341 = vrot.lane.b32.xlu0 %v278, 56
      %v342 = vpop.permute.xlu0 %341
      %v344 = vsel %vm164, %v340, 0
      %v347 = vsel %vm228, %v342, 0
      %349 = vmatprep.subr.bf16.mxu0 0
      %350 = vmatpush1.bf16.msra.mxu0 0
      %351 = vmatprep.subr.bf16.mxu0 0
      %352 = vmatpush1.bf16.msra.mxu0 0
      %353 = vmatprep.subr.bf16.mxu0 0
      %354 = vmatpush1.bf16.msra.mxu0 0
      %355 = vmatprep.subr.bf16.mxu0 0
      %356 = vmatpush1.bf16.msra.mxu0 0
      %357 = vmatprep.subr.bf16.mxu0 0
      %358 = vmatpush1.bf16.msra.mxu0 0
      %359 = vmatprep.subr.bf16.mxu0 0
      %360 = vmatpush1.bf16.msra.mxu0 0
      %361 = vmatprep.subr.bf16.mxu0 0
      %362 = vmatpush1.bf16.msra.mxu0 0
      %363 = vmatprep.subr.bf16.mxu0 0
      %364 = vmatpush1.bf16.msra.mxu0 %v347
      %365 = vmatprep.subr.bf16.mxu0 0
      %366 = vmatpush2.bf16.msra.mxu0 0
      %367 = vmatprep.subr.bf16.mxu0 0
      %368 = vmatpush2.bf16.msra.mxu0 0
      %369 = vmatprep.subr.bf16.mxu0 0
      %370 = vmatpush2.bf16.msra.mxu0 0
      %371 = vmatprep.subr.bf16.mxu0 0
      %372 = vmatpush2.bf16.msra.mxu0 0
      %373 = vmatprep.subr.bf16.mxu0 0
      %374 = vmatpush2.bf16.msra.mxu0 0
      %375 = vmatprep.subr.bf16.mxu0 0
      %376 = vmatpush2.bf16.msra.mxu0 0
      %377 = vmatprep.subr.bf16.mxu0 0
      %378 = vmatpush2.bf16.msra.mxu0 0
      %379 = vmatprep.subr.bf16.mxu0 0
      %380 = vmatpush2.bf16.msra.mxu0 0
      %381 = vmatprep.mubr.bf16.mxu0 0
      %382 = vmatmul.mubr.bf16.gmra.mxu0 %v344
      %v383 = vpop.f32.mrf.mxu0
      %v384 = vadd.f32 0.0, %v383
      %v385 = vpop.f32.mrf.mxu0
      %v386 = vpop.f32.mrf.mxu0
      %v387 = vpop.f32.mrf.mxu0
      %388 = vdwg.mxu0
      %v389 = vpack.c.bf16 %v384, %v384
      %v391 = vunpack.c.l.b16 %v389
      %v392 = vpack.c.b16 %v391, %v391
      %393 = vrot.lane.b32.xlu0 %v392, 8
      %v394 = vpop.permute.xlu0 %393
      %vm396 = vcmask 126016
      %397 = vst.msk [vmem:[%s155] sm:$0xf] %vm396, %v394
      %v398 = vld [vmem:[%s147] sm:$0xf]
      %v400 = vunpack.c.l.b16 %v398
      %v401 = vpack.c.b16 %v400, %v400
      %402 = vrot.lane.b32.xlu0 %v401, 112
      %v403 = vpop.permute.xlu0 %402
      %404 = vrot.lane.b32.xlu0 %v401, 80
      %v405 = vpop.permute.xlu0 %404
      %v407 = vsel %vm164, %v403, 0
      %v410 = vsel %vm164, %v405, 0
      %412 = vmatprep.subr.bf16.mxu0 0
      %413 = vmatpush1.bf16.xpose.msra.mxu0 0
      %414 = vmatprep.subr.bf16.mxu0 0
      %415 = vmatpush1.bf16.xpose.msra.mxu0 0
      %416 = vmatprep.subr.bf16.mxu0 0
      %417 = vmatpush1.bf16.xpose.msra.mxu0 0
      %418 = vmatprep.subr.bf16.mxu0 0
      %419 = vmatpush1.bf16.xpose.msra.mxu0 0
      %420 = vmatprep.subr.bf16.mxu0 0
      %421 = vmatpush1.bf16.xpose.msra.mxu0 0
      %422 = vmatprep.subr.bf16.mxu0 0
      %423 = vmatpush1.bf16.xpose.msra.mxu0 0
      %424 = vmatprep.subr.bf16.mxu0 0
      %425 = vmatpush1.bf16.xpose.msra.mxu0 0
      %426 = vmatprep.subr.bf16.mxu0 0
      %427 = vmatpush1.bf16.xpose.msra.mxu0 %v410
      %428 = vmatprep.subr.bf16.mxu0 0
      %429 = vmatpush2.bf16.xpose.msra.mxu0 0
      %430 = vmatprep.subr.bf16.mxu0 0
      %431 = vmatpush2.bf16.xpose.msra.mxu0 0
      %432 = vmatprep.subr.bf16.mxu0 0
      %433 = vmatpush2.bf16.xpose.msra.mxu0 0
      %434 = vmatprep.subr.bf16.mxu0 0
      %435 = vmatpush2.bf16.xpose.msra.mxu0 0
      %436 = vmatprep.subr.bf16.mxu0 0
      %437 = vmatpush2.bf16.xpose.msra.mxu0 0
      %438 = vmatprep.subr.bf16.mxu0 0
      %439 = vmatpush2.bf16.xpose.msra.mxu0 0
      %440 = vmatprep.subr.bf16.mxu0 0
      %441 = vmatpush2.bf16.xpose.msra.mxu0 0
      %442 = vmatprep.subr.bf16.mxu0 0
      %443 = vmatpush2.bf16.xpose.msra.mxu0 0
      %444 = vmatprep.mubr.bf16.mxu0 0
      %445 = vmatmul.mubr.bf16.gmra.mxu0 %v407
      %v446 = vpop.f32.mrf.mxu0
      %v447 = vadd.f32 %v157, %v446
      %v448 = vpop.f32.mrf.mxu0
      %v449 = vpop.f32.mrf.mxu0
      %v450 = vpop.f32.mrf.mxu0
      %451 = vdwg.mxu0
      %v452 = vsel %vm164, %v447, -inf
      %453 = vmax.xlane.f32.xlu0 %v452
      %v454 = vpop.xlane.xlu0 %453
      %v455 = vsub.f32 %v447, %v454
      %v456 = vmul.f32 %v455, 1.442695
      %v457 = vpow.pop %v456
      %v458 = vsel %vm164, %v457, 0.0
      %459 = vadd.xlane.f32.xlu0 %v458
      %v460 = vpop.xlane.xlu0 %459
      %v461 = vrcp.pop %v460
      %v462 = vmul.f32 %v457, %v461
      %v463 = vpack.c.bf16 %v462, %v462
      %464 = vrot.lane.b32.xlu0 %v401, 48
      %v465 = vpop.permute.xlu0 %464
      %v467 = vsel %vm164, %v463, 0
      %v470 = vsel %vm228, %v465, 0
      %472 = vmatprep.subr.bf16.mxu0 0
      %473 = vmatpush1.bf16.msra.mxu0 0
      %474 = vmatprep.subr.bf16.mxu0 0
      %475 = vmatpush1.bf16.msra.mxu0 0
      %476 = vmatprep.subr.bf16.mxu0 0
      %477 = vmatpush1.bf16.msra.mxu0 0
      %478 = vmatprep.subr.bf16.mxu0 0
      %479 = vmatpush1.bf16.msra.mxu0 0
      %480 = vmatprep.subr.bf16.mxu0 0
      %481 = vmatpush1.bf16.msra.mxu0 0
      %482 = vmatprep.subr.bf16.mxu0 0
      %483 = vmatpush1.bf16.msra.mxu0 0
      %484 = vmatprep.subr.bf16.mxu0 0
      %485 = vmatpush1.bf16.msra.mxu0 0
      %486 = vmatprep.subr.bf16.mxu0 0
      %487 = vmatpush1.bf16.msra.mxu0 %v470
      %488 = vmatprep.subr.bf16.mxu0 0
      %489 = vmatpush2.bf16.msra.mxu0 0
      %490 = vmatprep.subr.bf16.mxu0 0
      %491 = vmatpush2.bf16.msra.mxu0 0
      %492 = vmatprep.subr.bf16.mxu0 0
      %493 = vmatpush2.bf16.msra.mxu0 0
      %494 = vmatprep.subr.bf16.mxu0 0
      %495 = vmatpush2.bf16.msra.mxu0 0
      %496 = vmatprep.subr.bf16.mxu0 0
      %497 = vmatpush2.bf16.msra.mxu0 0
      %498 = vmatprep.subr.bf16.mxu0 0
      %499 = vmatpush2.bf16.msra.mxu0 0
      %500 = vmatprep.subr.bf16.mxu0 0
      %501 = vmatpush2.bf16.msra.mxu0 0
      %502 = vmatprep.subr.bf16.mxu0 0
      %503 = vmatpush2.bf16.msra.mxu0 0
      %504 = vmatprep.mubr.bf16.mxu0 0
      %505 = vmatmul.mubr.bf16.gmra.mxu0 %v467
      %v506 = vpop.f32.mrf.mxu0
      %v507 = vadd.f32 0.0, %v506
      %v508 = vpop.f32.mrf.mxu0
      %v509 = vpop.f32.mrf.mxu0
      %v510 = vpop.f32.mrf.mxu0
      %511 = vdwg.mxu0
      %v512 = vpack.c.bf16 %v507, %v507
      %v514 = vunpack.c.l.b16 %v512
      %v515 = vpack.c.b16 %v514, %v514
      %516 = vrot.lane.b32.xlu0 %v515, 16
      %v517 = vpop.permute.xlu0 %516
      %vm519 = vcmask 191616
      %520 = vst.msk [vmem:[%s155] sm:$0xf] %vm519, %v517
      %v521 = vld [vmem:[%s147] sm:$0xf]
      %v523 = vunpack.c.l.b16 %v521
      %v524 = vpack.c.b16 %v523, %v523
      %525 = vrot.lane.b32.xlu0 %v524, 104
      %v526 = vpop.permute.xlu0 %525
      %527 = vrot.lane.b32.xlu0 %v524, 72
      %v528 = vpop.permute.xlu0 %527
      %v530 = vsel %vm164, %v526, 0
      %v533 = vsel %vm164, %v528, 0
      %535 = vmatprep.subr.bf16.mxu0 0
      %536 = vmatpush1.bf16.xpose.msra.mxu0 0
      %537 = vmatprep.subr.bf16.mxu0 0
      %538 = vmatpush1.bf16.xpose.msra.mxu0 0
      %539 = vmatprep.subr.bf16.mxu0 0
      %540 = vmatpush1.bf16.xpose.msra.mxu0 0
      %541 = vmatprep.subr.bf16.mxu0 0
      %542 = vmatpush1.bf16.xpose.msra.mxu0 0
      %543 = vmatprep.subr.bf16.mxu0 0
      %544 = vmatpush1.bf16.xpose.msra.mxu0 0
      %545 = vmatprep.subr.bf16.mxu0 0
      %546 = vmatpush1.bf16.xpose.msra.mxu0 0
      %547 = vmatprep.subr.bf16.mxu0 0
      %548 = vmatpush1.bf16.xpose.msra.mxu0 0
      %549 = vmatprep.subr.bf16.mxu0 0
      %550 = vmatpush1.bf16.xpose.msra.mxu0 %v533
      %551 = vmatprep.subr.bf16.mxu0 0
      %552 = vmatpush2.bf16.xpose.msra.mxu0 0
      %553 = vmatprep.subr.bf16.mxu0 0
      %554 = vmatpush2.bf16.xpose.msra.mxu0 0
      %555 = vmatprep.subr.bf16.mxu0 0
      %556 = vmatpush2.bf16.xpose.msra.mxu0 0
      %557 = vmatprep.subr.bf16.mxu0 0
      %558 = vmatpush2.bf16.xpose.msra.mxu0 0
      %559 = vmatprep.subr.bf16.mxu0 0
      %560 = vmatpush2.bf16.xpose.msra.mxu0 0
      %561 = vmatprep.subr.bf16.mxu0 0
      %562 = vmatpush2.bf16.xpose.msra.mxu0 0
      %563 = vmatprep.subr.bf16.mxu0 0
      %564 = vmatpush2.bf16.xpose.msra.mxu0 0
      %565 = vmatprep.subr.bf16.mxu0 0
      %566 = vmatpush2.bf16.xpose.msra.mxu0 0
      %567 = vmatprep.mubr.bf16.mxu0 0
      %568 = vmatmul.mubr.bf16.gmra.mxu0 %v530
      %v569 = vpop.f32.mrf.mxu0
      %v570 = vadd.f32 %v157, %v569
      %v571 = vpop.f32.mrf.mxu0
      %v572 = vpop.f32.mrf.mxu0
      %v573 = vpop.f32.mrf.mxu0
      %574 = vdwg.mxu0
      %v575 = vsel %vm164, %v570, -inf
      %576 = vmax.xlane.f32.xlu0 %v575
      %v577 = vpop.xlane.xlu0 %576
      %v578 = vsub.f32 %v570, %v577
      %v579 = vmul.f32 %v578, 1.442695
      %v580 = vpow.pop %v579
      %v581 = vsel %vm164, %v580, 0.0
      %582 = vadd.xlane.f32.xlu0 %v581
      %v583 = vpop.xlane.xlu0 %582
      %v584 = vrcp.pop %v583
      %v585 = vmul.f32 %v580, %v584
      %v586 = vpack.c.bf16 %v585, %v585
      %587 = vrot.lane.b32.xlu0 %v524, 40
      %v588 = vpop.permute.xlu0 %587
      %v590 = vsel %vm164, %v586, 0
      %v593 = vsel %vm228, %v588, 0
      %595 = vmatprep.subr.bf16.mxu0 0
      %596 = vmatpush1.bf16.msra.mxu0 0
      %597 = vmatprep.subr.bf16.mxu0 0
      %598 = vmatpush1.bf16.msra.mxu0 0
      %599 = vmatprep.subr.bf16.mxu0 0
      %600 = vmatpush1.bf16.msra.mxu0 0
      %601 = vmatprep.subr.bf16.mxu0 0
      %602 = vmatpush1.bf16.msra.mxu0 0
      %603 = vmatprep.subr.bf16.mxu0 0
      %604 = vmatpush1.bf16.msra.mxu0 0
      %605 = vmatprep.subr.bf16.mxu0 0
      %606 = vmatpush1.bf16.msra.mxu0 0
      %607 = vmatprep.subr.bf16.mxu0 0
      %608 = vmatpush1.bf16.msra.mxu0 0
      %609 = vmatprep.subr.bf16.mxu0 0
      %610 = vmatpush1.bf16.msra.mxu0 %v593
      %611 = vmatprep.subr.bf16.mxu0 0
      %612 = vmatpush2.bf16.msra.mxu0 0
      %613 = vmatprep.subr.bf16.mxu0 0
      %614 = vmatpush2.bf16.msra.mxu0 0
      %615 = vmatprep.subr.bf16.mxu0 0
      %616 = vmatpush2.bf16.msra.mxu0 0
      %617 = vmatprep.subr.bf16.mxu0 0
      %618 = vmatpush2.bf16.msra.mxu0 0
      %619 = vmatprep.subr.bf16.mxu0 0
      %620 = vmatpush2.bf16.msra.mxu0 0
      %621 = vmatprep.subr.bf16.mxu0 0
      %622 = vmatpush2.bf16.msra.mxu0 0
      %623 = vmatprep.subr.bf16.mxu0 0
      %624 = vmatpush2.bf16.msra.mxu0 0
      %625 = vmatprep.subr.bf16.mxu0 0
      %626 = vmatpush2.bf16.msra.mxu0 0
      %627 = vmatprep.mubr.bf16.mxu0 0
      %628 = vmatmul.mubr.bf16.gmra.mxu0 %v590
      %v629 = vpop.f32.mrf.mxu0
      %v630 = vadd.f32 0.0, %v629
      %v631 = vpop.f32.mrf.mxu0
      %v632 = vpop.f32.mrf.mxu0
      %v633 = vpop.f32.mrf.mxu0
      %634 = vdwg.mxu0
      %v635 = vpack.c.bf16 %v630, %v630
      %v637 = vunpack.c.l.b16 %v635
      %v638 = vpack.c.b16 %v637, %v637
      %639 = vrot.lane.b32.xlu0 %v638, 24
      %v640 = vpop.permute.xlu0 %639
      %vm642 = vcmask 257216
      %643 = vst.msk [vmem:[%s155] sm:$0xf] %vm642, %v640
      %p644 = scmp.lt.s32.totalorder %s13, 1
      %s645 = scalar_select %p644, %s13, 1
      %s646 = smul.addr %s645, 4
      %s647 = scalar_lea.vmem %s2, %s646
      // Predicated region
      $region29: #{transformer_decoder_forward.20} parent=27 // pred_check
        %p648 = pneg %p83
      $region30: #{transformer_decoder_forward.20} parent=27 // pred_check_branch
        %650 = sbr.rel (%p648) target = $region32
      $region31: #{transformer_decoder_forward.20} parent=27 // pred_region
        _
      $region32: #{transformer_decoder_forward.20} parent=27 // pred_fallthru
        _
    $region28: #{transformer_decoder_forward.20} parent=5 // pred_fallthru
      _
    %p651 = scmp.le.s32.totalorder 2, %s8
    // Predicated region
    $region33: #{transformer_decoder_forward.20} parent=5 // pred_check
      %p652 = pneg %p651
    $region34: #{transformer_decoder_forward.20} parent=5 // pred_check_branch
      %654 = sbr.rel (%p652) target = $region36
    $region35: #{transformer_decoder_forward.20} parent=5 // pred_region
      %s655 = ssub.s32 %s8, 2
      // Predicated region
      $region37: #{transformer_decoder_forward.20} parent=35 // pred_check
        %p656 = pneg %p89
      $region38: #{transformer_decoder_forward.20} parent=35 // pred_check_branch
        %658 = sbr.rel (%p656) target = $region40
      $region39: #{transformer_decoder_forward.20} parent=35 // pred_region
        %p659 = scmp.lt.s32.totalorder %s14, 1
        %s660 = scalar_select %p659, %s14, 1
        %s661 = smul.addr %s660, 4
        %s662 = scalar_lea.vmem %s2, %s661
      $region40: #{transformer_decoder_forward.20} parent=35 // pred_fallthru
        _
    $region36: #{transformer_decoder_forward.20} parent=5 // pred_fallthru
      _
  $region6: #{transformer_decoder_forward.20} parent=0 // loop_footer
    %s12 = sadd.s32 1, %s8
  $region7: #{transformer_decoder_forward.20} parent=0 // loop_footer_branch
    %7 = sbr.rel target = $region3
  $region8: #{transformer_decoder_forward.20} parent=0 // loop_exit
    _

// kernel: transformer_decoder_forward.23
$region0: #{transformer_decoder_forward.23}
  #allocation0 [shape = 'u32[]', space=smem, size = 0x4, offset = 0x4, fixed_abs, tag = 'smem constant byte address 0x4 - core index']
  #allocation1 [shape = 'u32[144,128]{1,0:T(1,128)}', space=vmem, size = 0x12000, scoped, tag = 'internal scratch']
  #allocation2 [shape = 'f32[32,128]{1,0:T(8,128)}', space=vmem, size = 0x4000, scoped, tag = 'scratch operand']
  %s0 = inlined_call_operand.vmem [shape: bf16[32,128], index: 0, kind: input, shape index: {}]
  %s1 = inlined_call_operand.vmem [shape: bf16[128,128], index: 1, kind: input, shape index: {}]
  %s2 = inlined_call_operand.vmem [shape: f32[1,128], index: 2, kind: input, shape index: {}]
  %s3 = inlined_call_operand.vmem [shape: bf16[32,128], index: 3, kind: output, shape index: {}]
  %s4 = sld [smem:[#allocation0]]
  $region30: #{transformer_decoder_forward.23} parent=0
    _
  %s6 = ssub.s32 1, %s4
  %s7 = scalar_select 0, %s6, %s4
  // Predicated region
  $region2: #{transformer_decoder_forward.23} parent=0 // pred_check
    _
  $region3: #{transformer_decoder_forward.23} parent=0 // pred_check_branch
    %9 = sbr.rel (0) target = $region5
  $region4: #{transformer_decoder_forward.23} parent=0 // pred_region
    _
  $region5: #{transformer_decoder_forward.23} parent=0 // pred_fallthru
    _
  // Predicated region
  $region6: #{transformer_decoder_forward.23} parent=0 // pred_check
    _
  $region7: #{transformer_decoder_forward.23} parent=0 // pred_check_branch
    %11 = sbr.rel (0) target = $region9
  $region8: #{transformer_decoder_forward.23} parent=0 // pred_region
    _
  $region9: #{transformer_decoder_forward.23} parent=0 // pred_fallthru
    _
  // Predicated region
  $region10: #{transformer_decoder_forward.23} parent=0 // pred_check
    _
  $region11: #{transformer_decoder_forward.23} parent=0 // pred_check_branch
    %13 = sbr.rel (0) target = $region13
  $region12: #{transformer_decoder_forward.23} parent=0 // pred_region
    _
  $region13: #{transformer_decoder_forward.23} parent=0 // pred_fallthru
    _
  %p15 = scmp.eq.s32.totalorder 0, 0
  // Predicated region
  $region14: #{transformer_decoder_forward.23} parent=0 // pred_check
    %p16 = pneg %p15
  $region15: #{transformer_decoder_forward.23} parent=0 // pred_check_branch
    %18 = sbr.rel (%p16) target = $region17
  $region16: #{transformer_decoder_forward.23} parent=0 // pred_region
    %19 = vst [vmem:[#allocation2] sm:$0xff] 0.0
    %20 = vst [vmem:[#allocation2 + $0x8] sm:$0xff] 0.0
    %21 = vst [vmem:[#allocation2 + $0x10] sm:$0xff] 0.0
    %22 = vst [vmem:[#allocation2 + $0x18] sm:$0xff] 0.0
  $region17: #{transformer_decoder_forward.23} parent=0 // pred_fallthru
    _
  %v23 = vld [vmem:[#allocation2] sm:$0xff]
  %v24 = vld [vmem:[#allocation2 + $0x8] sm:$0xff]
  %v25 = vld [vmem:[#allocation2 + $0x10] sm:$0xff]
  %v26 = vld [vmem:[#allocation2 + $0x18] sm:$0xff]
  %v27 = vld [vmem:[%s0] sm:$0xf]
  %v28 = vld [vmem:[%s0 + $0x4] sm:$0xf]
  %v29 = vld [vmem:[%s0 + $0x8] sm:$0xf]
  %v30 = vld [vmem:[%s0 + $0xc] sm:$0xf]
  %v31 = vld [vmem:[%s1] sm:$0xf]
  %v32 = vld [vmem:[%s1 + $0x4] sm:$0xf]
  %v33 = vld [vmem:[%s1 + $0x8] sm:$0xf]
  %v34 = vld [vmem:[%s1 + $0xc] sm:$0xf]
  %v35 = vld [vmem:[%s1 + $0x10] sm:$0xf]
  %v36 = vld [vmem:[%s1 + $0x14] sm:$0xf]
  %v37 = vld [vmem:[%s1 + $0x18] sm:$0xf]
  %v38 = vld [vmem:[%s1 + $0x1c] sm:$0xf]
  %v39 = vld [vmem:[%s1 + $0x20] sm:$0xf]
  %v40 = vld [vmem:[%s1 + $0x24] sm:$0xf]
  %v41 = vld [vmem:[%s1 + $0x28] sm:$0xf]
  %v42 = vld [vmem:[%s1 + $0x2c] sm:$0xf]
  %v43 = vld [vmem:[%s1 + $0x30] sm:$0xf]
  %v44 = vld [vmem:[%s1 + $0x34] sm:$0xf]
  %v45 = vld [vmem:[%s1 + $0x38] sm:$0xf]
  %v46 = vld [vmem:[%s1 + $0x3c] sm:$0xf]
  %v51 = vunpack.c.l.b16 %v27
  %v52 = vunpack.c.l.b16 %v28
  %v53 = vunpack.c.l.b16 %v29
  %v54 = vunpack.c.l.b16 %v30
  %v55 = vpack.c.b16 %v52, %v51
  %v56 = vpack.c.b16 %v54, %v53
  %v75 = vunpack.c.l.b16 %v31
  %v76 = vunpack.c.l.b16 %v32
  %v77 = vunpack.c.l.b16 %v33
  %v78 = vunpack.c.l.b16 %v34
  %v79 = vunpack.c.l.b16 %v35
  %v80 = vunpack.c.l.b16 %v36
  %v81 = vunpack.c.l.b16 %v37
  %v82 = vunpack.c.l.b16 %v38
  %v83 = vunpack.c.l.b16 %v39
  %v84 = vunpack.c.l.b16 %v40
  %v85 = vunpack.c.l.b16 %v41
  %v86 = vunpack.c.l.b16 %v42
  %v87 = vunpack.c.l.b16 %v43
  %v88 = vunpack.c.l.b16 %v44
  %v89 = vunpack.c.l.b16 %v45
  %v90 = vunpack.c.l.b16 %v46
  %v91 = vpack.c.b16 %v76, %v75
  %v92 = vpack.c.b16 %v78, %v77
  %v93 = vpack.c.b16 %v80, %v79
  %v94 = vpack.c.b16 %v82, %v81
  %v95 = vpack.c.b16 %v84, %v83
  %v96 = vpack.c.b16 %v86, %v85
  %v97 = vpack.c.b16 %v88, %v87
  %v98 = vpack.c.b16 %v90, %v89
  %107 = vmatprep.subr.bf16.mxu0 0
  %108 = vmatpush1.bf16.msra.mxu0 %v98
  %109 = vmatprep.subr.bf16.mxu0 0
  %110 = vmatpush1.bf16.msra.mxu0 %v97
  %111 = vmatprep.subr.bf16.mxu0 0
  %112 = vmatpush1.bf16.msra.mxu0 %v96
  %113 = vmatprep.subr.bf16.mxu0 0
  %114 = vmatpush1.bf16.msra.mxu0 %v95
  %115 = vmatprep.subr.bf16.mxu0 0
  %116 = vmatpush1.bf16.msra.mxu0 %v94
  %117 = vmatprep.subr.bf16.mxu0 0
  %118 = vmatpush1.bf16.msra.mxu0 %v93
  %119 = vmatprep.subr.bf16.mxu0 0
  %120 = vmatpush1.bf16.msra.mxu0 %v92
  %121 = vmatprep.subr.bf16.mxu0 0
  %122 = vmatpush1.bf16.msra.mxu0 %v91
  %123 = vmatprep.subr.bf16.mxu0 0
  %124 = vmatpush2.bf16.msra.mxu0 0
  %125 = vmatprep.subr.bf16.mxu0 0
  %126 = vmatpush2.bf16.msra.mxu0 0
  %127 = vmatprep.subr.bf16.mxu0 0
  %128 = vmatpush2.bf16.msra.mxu0 0
  %129 = vmatprep.subr.bf16.mxu0 0
  %130 = vmatpush2.bf16.msra.mxu0 0
  %131 = vmatprep.subr.bf16.mxu0 0
  %132 = vmatpush2.bf16.msra.mxu0 0
  %133 = vmatprep.subr.bf16.mxu0 0
  %134 = vmatpush2.bf16.msra.mxu0 0
  %135 = vmatprep.subr.bf16.mxu0 0
  %136 = vmatpush2.bf16.msra.mxu0 0
  %137 = vmatprep.subr.bf16.mxu0 0
  %138 = vmatpush2.bf16.msra.mxu0 0
  %139 = vmatprep.mubr.bf16.mxu0 0
  %140 = vmatmul.mubr.bf16.gmra.mxu0 %v55
  %v141 = vpop.f32.mrf.mxu0
  %v142 = vadd.f32 0.0, %v141
  %v143 = vpop.f32.mrf.mxu0
  %v144 = vpop.f32.mrf.mxu0
  %v145 = vadd.f32 0.0, %v144
  %v146 = vpop.f32.mrf.mxu0
  %147 = vmatprep.mubr.bf16.mxu0 0
  %148 = vmatmul.mubr.bf16.gmra.mxu0 %v56
  %v149 = vpop.f32.mrf.mxu0
  %v150 = vadd.f32 0.0, %v149
  %v151 = vpop.f32.mrf.mxu0
  %v152 = vpop.f32.mrf.mxu0
  %v153 = vadd.f32 0.0, %v152
  %v154 = vpop.f32.mrf.mxu0
  %155 = vdwg.mxu0
  %v156 = vadd.f32 %v23, %v142
  %v157 = vadd.f32 %v24, %v145
  %v158 = vadd.f32 %v25, %v150
  %v159 = vadd.f32 %v26, %v153
  %160 = vst [vmem:[#allocation2] sm:$0xff] %v156
  %161 = vst [vmem:[#allocation2 + $0x8] sm:$0xff] %v157
  %162 = vst [vmem:[#allocation2 + $0x10] sm:$0xff] %v158
  %163 = vst [vmem:[#allocation2 + $0x18] sm:$0xff] %v159
  // Predicated region
  $region18: #{transformer_decoder_forward.23} parent=0 // pred_check
    %p164 = pneg %p15
  $region19: #{transformer_decoder_forward.23} parent=0 // pred_check_branch
    %166 = sbr.rel (%p164) target = $region21
  $region20: #{transformer_decoder_forward.23} parent=0 // pred_region
    %v167 = vld [vmem:[#allocation2] sm:$0xff]
    %v168 = vld [vmem:[#allocation2 + $0x8] sm:$0xff]
    %v169 = vld [vmem:[#allocation2 + $0x10] sm:$0xff]
    %v170 = vld [vmem:[#allocation2 + $0x18] sm:$0xff]
    %v171 = vld [vmem:[%s2] sm:$0x1]
    %v173 = vlaneseq
    %v174 = vshrl.u32 %v173, 7
    %v175 = vsub.s32 0, %v174
    %v176 = vrot.slane %v171, %v175
    %v178 = vadd.f32 %v167, %v176
    %v179 = vadd.f32 %v168, %v176
    %v180 = vadd.f32 %v169, %v176
    %v181 = vadd.f32 %v170, %v176
    %v182 = vpack.c.bf16 %v179, %v178
    %v183 = vpack.c.bf16 %v181, %v180
    %v186 = vunpack.c.l.b16 %v182
    %v187 = vunpack.c.h.b16 %v182
    %v188 = vunpack.c.l.b16 %v183
    %v189 = vunpack.c.h.b16 %v183
    %v190 = vpack.c.b16 %v186, %v186
    %v191 = vpack.c.b16 %v187, %v187
    %v192 = vpack.c.b16 %v188, %v188
    %v193 = vpack.c.b16 %v189, %v189
    %198 = vst [vmem:[%s3] sm:$0xf] %v190
    %199 = vst [vmem:[%s3 + $0x4] sm:$0xf] %v191
    %200 = vst [vmem:[%s3 + $0x8] sm:$0xf] %v192
    %201 = vst [vmem:[%s3 + $0xc] sm:$0xf] %v193
  $region21: #{transformer_decoder_forward.23} parent=0 // pred_fallthru
    _
  // Predicated region
  $region22: #{transformer_decoder_forward.23} parent=0 // pred_check
    _
  $region23: #{transformer_decoder_forward.23} parent=0 // pred_check_branch
    %203 = sbr.rel (0) target = $region25
  $region24: #{transformer_decoder_forward.23} parent=0 // pred_region
    _
  $region25: #{transformer_decoder_forward.23} parent=0 // pred_fallthru
    _
  // Predicated region
  $region26: #{transformer_decoder_forward.23} parent=0 // pred_check
    _
  $region27: #{transformer_decoder_forward.23} parent=0 // pred_check_branch
    %205 = sbr.rel (0) target = $region29
  $region28: #{transformer_decoder_forward.23} parent=0 // pred_region
    _
  $region29: #{transformer_decoder_forward.23} parent=0 // pred_fallthru
    _

// kernel: transformer_decoder_forward.27
$region0: #{transformer_decoder_forward.27}
  #allocation0 [shape = 'u32[]', space=smem, size = 0x4, offset = 0x4, fixed_abs, tag = 'smem constant byte address 0x4 - core index']
  #allocation1 [shape = 'u32[144,128]{1,0:T(1,128)}', space=vmem, size = 0x12000, scoped, tag = 'internal scratch']
  #allocation2 [shape = 'f32[16,32]{1,0:T(8,128)}', space=vmem, size = 0x2000, scoped, tag = 'scratch operand']
  %s0 = inlined_call_operand.vmem [shape: bf16[16,128], index: 0, kind: input, shape index: {}]
  %s1 = inlined_call_operand.vmem [shape: bf16[128,32], index: 1, kind: input, shape index: {}]
  %s2 = inlined_call_operand.vmem [shape: f32[1,32], index: 2, kind: input, shape index: {}]
  %s3 = inlined_call_operand.vmem [shape: bf16[16,32], index: 3, kind: input, shape index: {}]
  %s4 = inlined_call_operand.vmem [shape: f32[1,32], index: 4, kind: input, shape index: {}]
  %s5 = inlined_call_operand.vmem [shape: f32[1,32], index: 5, kind: input, shape index: {}]
  %s6 = inlined_call_operand.vmem [shape: bf16[16,32], index: 6, kind: output, shape index: {}]
  %s7 = sld [smem:[#allocation0]]
  $region42: #{transformer_decoder_forward.27} parent=0
    _
  %s9 = ssub.s32 1, %s7
  %s10 = scalar_select 0, %s9, %s7
  // Predicated region
  $region2: #{transformer_decoder_forward.27} parent=0 // pred_check
    _
  $region3: #{transformer_decoder_forward.27} parent=0 // pred_check_branch
    %12 = sbr.rel (0) target = $region5
  $region4: #{transformer_decoder_forward.27} parent=0 // pred_region
    _
  $region5: #{transformer_decoder_forward.27} parent=0 // pred_fallthru
    _
  // Predicated region
  $region6: #{transformer_decoder_forward.27} parent=0 // pred_check
    _
  $region7: #{transformer_decoder_forward.27} parent=0 // pred_check_branch
    %14 = sbr.rel (0) target = $region9
  $region8: #{transformer_decoder_forward.27} parent=0 // pred_region
    _
  $region9: #{transformer_decoder_forward.27} parent=0 // pred_fallthru
    _
  // Predicated region
  $region10: #{transformer_decoder_forward.27} parent=0 // pred_check
    _
  $region11: #{transformer_decoder_forward.27} parent=0 // pred_check_branch
    %16 = sbr.rel (0) target = $region13
  $region12: #{transformer_decoder_forward.27} parent=0 // pred_region
    _
  $region13: #{transformer_decoder_forward.27} parent=0 // pred_fallthru
    _
  // Predicated region
  $region14: #{transformer_decoder_forward.27} parent=0 // pred_check
    _
  $region15: #{transformer_decoder_forward.27} parent=0 // pred_check_branch
    %18 = sbr.rel (0) target = $region17
  $region16: #{transformer_decoder_forward.27} parent=0 // pred_region
    _
  $region17: #{transformer_decoder_forward.27} parent=0 // pred_fallthru
    _
  // Predicated region
  $region18: #{transformer_decoder_forward.27} parent=0 // pred_check
    _
  $region19: #{transformer_decoder_forward.27} parent=0 // pred_check_branch
    %20 = sbr.rel (0) target = $region21
  $region20: #{transformer_decoder_forward.27} parent=0 // pred_region
    _
  $region21: #{transformer_decoder_forward.27} parent=0 // pred_fallthru
    _
  // Predicated region
  $region22: #{transformer_decoder_forward.27} parent=0 // pred_check
    _
  $region23: #{transformer_decoder_forward.27} parent=0 // pred_check_branch
    %22 = sbr.rel (0) target = $region25
  $region24: #{transformer_decoder_forward.27} parent=0 // pred_region
    _
  $region25: #{transformer_decoder_forward.27} parent=0 // pred_fallthru
    _
  %p24 = scmp.eq.s32.totalorder 0, 0
  // Predicated region
  $region26: #{transformer_decoder_forward.27} parent=0 // pred_check
    %p25 = pneg %p24
  $region27: #{transformer_decoder_forward.27} parent=0 // pred_check_branch
    %27 = sbr.rel (%p25) target = $region29
  $region28: #{transformer_decoder_forward.27} parent=0 // pred_region
    %vm28 = vcmask 261120
    %29 = vst.msk [vmem:[#allocation2] sm:$0xff] %vm28, 0.0
    %30 = vst.msk [vmem:[#allocation2 + $0x8] sm:$0xff] %vm28, 0.0
  $region29: #{transformer_decoder_forward.27} parent=0 // pred_fallthru
    _
  %v31 = vld [vmem:[#allocation2] sm:$0xff]
  %v32 = vld [vmem:[#allocation2 + $0x8] sm:$0xff]
  %v33 = vld [vmem:[%s0] sm:$0xf]
  %v34 = vld [vmem:[%s0 + $0x4] sm:$0xf]
  %v35 = vld [vmem:[%s1] sm:$0xf]
  %v36 = vld [vmem:[%s1 + $0x4] sm:$0xf]
  %v37 = vld [vmem:[%s1 + $0x8] sm:$0xf]
  %v38 = vld [vmem:[%s1 + $0xc] sm:$0xf]
  %v39 = vld [vmem:[%s1 + $0x10] sm:$0xf]
  %v40 = vld [vmem:[%s1 + $0x14] sm:$0xf]
  %v41 = vld [vmem:[%s1 + $0x18] sm:$0xf]
  %v42 = vld [vmem:[%s1 + $0x1c] sm:$0xf]
  %v43 = vld [vmem:[%s1 + $0x20] sm:$0xf]
  %v44 = vld [vmem:[%s1 + $0x24] sm:$0xf]
  %v45 = vld [vmem:[%s1 + $0x28] sm:$0xf]
  %v46 = vld [vmem:[%s1 + $0x2c] sm:$0xf]
  %v47 = vld [vmem:[%s1 + $0x30] sm:$0xf]
  %v48 = vld [vmem:[%s1 + $0x34] sm:$0xf]
  %v49 = vld [vmem:[%s1 + $0x38] sm:$0xf]
  %v50 = vld [vmem:[%s1 + $0x3c] sm:$0xf]
  %v53 = vunpack.c.l.b16 %v33
  %v54 = vunpack.c.l.b16 %v34
  %v55 = vpack.c.b16 %v54, %v53
  %v73 = vunpack.c.l.b16 %v35
  %v74 = vunpack.c.l.b16 %v36
  %v75 = vunpack.c.l.b16 %v37
  %v76 = vunpack.c.l.b16 %v38
  %v77 = vunpack.c.l.b16 %v39
  %v78 = vunpack.c.l.b16 %v40
  %v79 = vunpack.c.l.b16 %v41
  %v80 = vunpack.c.l.b16 %v42
  %v81 = vunpack.c.l.b16 %v43
  %v82 = vunpack.c.l.b16 %v44
  %v83 = vunpack.c.l.b16 %v45
  %v84 = vunpack.c.l.b16 %v46
  %v85 = vunpack.c.l.b16 %v47
  %v86 = vunpack.c.l.b16 %v48
  %v87 = vunpack.c.l.b16 %v49
  %v88 = vunpack.c.l.b16 %v50
  %v89 = vpack.c.b16 %v74, %v73
  %v90 = vpack.c.b16 %v76, %v75
  %v91 = vpack.c.b16 %v78, %v77
  %v92 = vpack.c.b16 %v80, %v79
  %v93 = vpack.c.b16 %v82, %v81
  %v94 = vpack.c.b16 %v84, %v83
  %v95 = vpack.c.b16 %v86, %v85
  %v96 = vpack.c.b16 %v88, %v87
  %105 = vmatprep.subr.bf16.mxu0 0
  %106 = vmatpush1.bf16.msra.mxu0 %v96
  %107 = vmatprep.subr.bf16.mxu0 0
  %108 = vmatpush1.bf16.msra.mxu0 %v95
  %109 = vmatprep.subr.bf16.mxu0 0
  %110 = vmatpush1.bf16.msra.mxu0 %v94
  %111 = vmatprep.subr.bf16.mxu0 0
  %112 = vmatpush1.bf16.msra.mxu0 %v93
  %113 = vmatprep.subr.bf16.mxu0 0
  %114 = vmatpush1.bf16.msra.mxu0 %v92
  %115 = vmatprep.subr.bf16.mxu0 0
  %116 = vmatpush1.bf16.msra.mxu0 %v91
  %117 = vmatprep.subr.bf16.mxu0 0
  %118 = vmatpush1.bf16.msra.mxu0 %v90
  %119 = vmatprep.subr.bf16.mxu0 0
  %120 = vmatpush1.bf16.msra.mxu0 %v89
  %121 = vmatprep.subr.bf16.mxu0 0
  %122 = vmatpush2.bf16.msra.mxu0 0
  %123 = vmatprep.subr.bf16.mxu0 0
  %124 = vmatpush2.bf16.msra.mxu0 0
  %125 = vmatprep.subr.bf16.mxu0 0
  %126 = vmatpush2.bf16.msra.mxu0 0
  %127 = vmatprep.subr.bf16.mxu0 0
  %128 = vmatpush2.bf16.msra.mxu0 0
  %129 = vmatprep.subr.bf16.mxu0 0
  %130 = vmatpush2.bf16.msra.mxu0 0
  %131 = vmatprep.subr.bf16.mxu0 0
  %132 = vmatpush2.bf16.msra.mxu0 0
  %133 = vmatprep.subr.bf16.mxu0 0
  %134 = vmatpush2.bf16.msra.mxu0 0
  %135 = vmatprep.subr.bf16.mxu0 0
  %136 = vmatpush2.bf16.msra.mxu0 0
  %137 = vmatprep.mubr.bf16.mxu0 0
  %138 = vmatmul.mubr.bf16.gmra.mxu0 %v55
  %v139 = vpop.f32.mrf.mxu0
  %v140 = vadd.f32 0.0, %v139
  %v141 = vpop.f32.mrf.mxu0
  %v142 = vpop.f32.mrf.mxu0
  %v143 = vadd.f32 0.0, %v142
  %v144 = vpop.f32.mrf.mxu0
  %145 = vdwg.mxu0
  %v146 = vadd.f32 %v31, %v140
  %v147 = vadd.f32 %v32, %v143
  %vm148 = vcmask 261120
  %149 = vst.msk [vmem:[#allocation2] sm:$0xff] %vm148, %v146
  %150 = vst.msk [vmem:[#allocation2 + $0x8] sm:$0xff] %vm148, %v147
  // Predicated region
  $region30: #{transformer_decoder_forward.27} parent=0 // pred_check
    %p151 = pneg %p24
  $region31: #{transformer_decoder_forward.27} parent=0 // pred_check_branch
    %153 = sbr.rel (%p151) target = $region33
  $region32: #{transformer_decoder_forward.27} parent=0 // pred_region
    %v154 = vld [vmem:[#allocation2] sm:$0xff]
    %v155 = vld [vmem:[#allocation2 + $0x8] sm:$0xff]
    %v156 = vld [vmem:[%s2] sm:$0x1]
    %v158 = vlaneseq
    %v159 = vshrl.u32 %v158, 7
    %v160 = vsub.s32 0, %v159
    %v161 = vrot.slane %v156, %v160
    %v163 = vadd.f32 %v154, %v161
    %v164 = vadd.f32 %v155, %v161
    %v165 = vmax.f32 %v163, 0.0
    %v166 = vmax.f32 %v164, 0.0
    %v167 = vld [vmem:[%s3] sm:$0xf]
    %v168 = vld [vmem:[%s3 + $0x4] sm:$0xf]
    %v169 = vunpack.c.l.bf16 %v167
    %v170 = vunpack.c.l.bf16 %v168
    %v171 = vadd.f32 %v165, %v169
    %v172 = vadd.f32 %v166, %v170
    %v173 = vsel %vm148, %v171, 0.0
    %174 = vadd.xlane.f32.xlu0 %v173
    %v175 = vpop.xlane.xlu0 %174
    %v176 = vsel %vm148, %v172, 0.0
    %177 = vadd.xlane.f32.xlu0 %v176
    %v178 = vpop.xlane.xlu0 %177
    %v179 = vrcp.pop 32.0
    %v180 = vmul.f32 %v175, %v179
    %v181 = vmul.f32 %v178, %v179
    %v182 = vsub.f32 %v171, %v180
    %v183 = vsub.f32 %v172, %v181
    %v184 = vmul.f32 %v182, %v182
    %v185 = vmul.f32 %v183, %v183
    %v186 = vsel %vm148, %v184, 0.0
    %187 = vadd.xlane.f32.xlu0 %v186
    %v188 = vpop.xlane.xlu0 %187
    %v189 = vsel %vm148, %v185, 0.0
    %190 = vadd.xlane.f32.xlu0 %v189
    %v191 = vpop.xlane.xlu0 %190
    %v192 = vmul.f32 %v188, %v179
    %v193 = vmul.f32 %v191, %v179
    %v194 = vadd.f32 %v192, 1e-05
    %v195 = vadd.f32 %v193, 1e-05
    %v196 = vrsqrt.pop %v194
    %v197 = vrsqrt.pop %v195
    %v198 = vmul.f32 %v182, %v196
    %v199 = vmul.f32 %v183, %v197
    %v200 = vld [vmem:[%s4] sm:$0x1]
    %v202 = vlaneseq
    %v203 = vshrl.u32 %v202, 7
    %v204 = vsub.s32 0, %v203
    %v205 = vrot.slane %v200, %v204
    %v207 = vmul.f32 %v198, %v205
    %v208 = vmul.f32 %v199, %v205
    %v209 = vld [vmem:[%s5] sm:$0x1]
    %v211 = vlaneseq
    %v212 = vshrl.u32 %v211, 7
    %v213 = vsub.s32 0, %v212
    %v214 = vrot.slane %v209, %v213
    %v216 = vadd.f32 %v207, %v214
    %v217 = vadd.f32 %v208, %v214
    %v218 = vpack.c.bf16 %v217, %v216
    %v220 = vunpack.c.l.b16 %v218
    %v221 = vunpack.c.h.b16 %v218
    %v222 = vpack.c.b16 %v220, %v220
    %v223 = vpack.c.b16 %v221, %v221
    %vm226 = vcmask 257024
    %227 = vst.msk [vmem:[%s6] sm:$0xf] %vm226, %v222
    %228 = vst.msk [vmem:[%s6 + $0x4] sm:$0xf] %vm226, %v223
  $region33: #{transformer_decoder_forward.27} parent=0 // pred_fallthru
    _
  // Predicated region
  $region34: #{transformer_decoder_forward.27} parent=0 // pred_check
    _
  $region35: #{transformer_decoder_forward.27} parent=0 // pred_check_branch
    %230 = sbr.rel (0) target = $region37
  $region36: #{transformer_decoder_forward.27} parent=0 // pred_region
    _
  $region37: #{transformer_decoder_forward.27} parent=0 // pred_fallthru
    _
  // Predicated region
  $region38: #{transformer_decoder_forward.27} parent=0 // pred_check
    _
  $region39: #{transformer_decoder_forward.27} parent=0 // pred_check_branch
    %232 = sbr.rel (0) target = $region41
  $region40: #{transformer_decoder_forward.27} parent=0 // pred_region
    _
  $region41: #{transformer_decoder_forward.27} parent=0 // pred_fallthru
    _

// kernel: transformer_decoder_forward.24
$region0: #{transformer_decoder_forward.24}
  #allocation0 [shape = 'u32[]', space=smem, size = 0x4, offset = 0x4, fixed_abs, tag = 'smem constant byte address 0x4 - core index']
  #allocation1 [shape = 'u32[144,128]{1,0:T(1,128)}', space=vmem, size = 0x12000, scoped, tag = 'internal scratch']
  %s0 = inlined_call_operand.vmem [shape: bf16[2,8,32], index: 0, kind: input, shape index: {}]
  %s1 = inlined_call_operand.vmem [shape: bf16[2,16,64], index: 1, kind: input, shape index: {}]
  %s2 = inlined_call_operand.vmem [shape: bf16[2,8,32], index: 2, kind: output, shape index: {}]
  %s3 = sld [smem:[#allocation0]]
  $region41: #{transformer_decoder_forward.24} parent=0
    _
  %s5 = ssub.s32 1, %s3
  %s6 = scalar_select 0, %s5, %s3
  loop: start=0, step=1, limit=4
  $region2: #{transformer_decoder_forward.24} parent=0 // loop_pre_header
    _
  $region3: #{transformer_decoder_forward.24} parent=0 // loop_header
    %s8 = sphi 0, %s12
    %p9 = scmp.ge.s32.totalorder %s8, 4
    %s18 = sphi 0, %s20
    %s21 = sphi 0, %s18
    %s22 = sphi 0, %s21
    %s38 = sphi 0, %s22
    %s44 = sphi 0, %s46
    %s47 = sphi 0, %s44
    %s48 = sphi 0, %s47
    %s64 = sphi 0, %s48
    %s70 = sphi 0, %s72
    %s73 = sphi 0, %s70
    %s74 = sphi 0, %s73
    %s90 = sphi 0, %s74
  $region4: #{transformer_decoder_forward.24} parent=0 // loop_header_branch
    %11 = sbr.rel (%p9) target = $region8
  $region5: #{transformer_decoder_forward.24} parent=0 // loop_body
    %s13 = ssub.s32 %s8, 1
    %s14 = ssub.s32 %s8, 2
    %s15 = sadd.s32 %s8, 1
    %s16 = ssub.s32 %s8, %s15
    %p17 = scmp.eq.s32.totalorder %s16, 0
    %s19 = sadd.s32 %s18, 1
    %s20 = scalar_select %p17, %s18, %s19
    %p23 = pneg %p17
    %p24 = scmp.eq.s32.totalorder %s8, 1
    %p25 = por %p23, %p24
    %p26 = scmp.ne.s32.totalorder %s18, %s21
    %p27 = scmp.eq.s32.totalorder %s8, 0
    %p28 = por %p26, %p27
    %p29 = scmp.ne.s32.totalorder %s18, %s21
    %p30 = scmp.eq.s32.totalorder %s13, 1
    %p31 = por %p29, %p30
    %p32 = scmp.ne.s32.totalorder %s21, %s22
    %p33 = scmp.eq.s32.totalorder %s13, 0
    %p34 = por %p32, %p33
    %p35 = scmp.ne.s32.totalorder %s21, %s22
    %p36 = scmp.eq.s32.totalorder %s14, 1
    %p37 = por %p35, %p36
    %p39 = scmp.ne.s32.totalorder %s22, %s38
    %p40 = scmp.eq.s32.totalorder %s14, 0
    %p41 = por %p39, %p40
    %s42 = ssub.s32 %s8, %s15
    %p43 = scmp.eq.s32.totalorder %s42, 0
    %s45 = sadd.s32 %s44, 1
    %s46 = scalar_select %p43, %s44, %s45
    %p49 = pneg %p43
    %p50 = scmp.eq.s32.totalorder %s8, 1
    %p51 = por %p49, %p50
    %p52 = scmp.ne.s32.totalorder %s44, %s47
    %p53 = scmp.eq.s32.totalorder %s8, 0
    %p54 = por %p52, %p53
    %p55 = scmp.ne.s32.totalorder %s44, %s47
    %p56 = scmp.eq.s32.totalorder %s13, 1
    %p57 = por %p55, %p56
    %p58 = scmp.ne.s32.totalorder %s47, %s48
    %p59 = scmp.eq.s32.totalorder %s13, 0
    %p60 = por %p58, %p59
    %p61 = scmp.ne.s32.totalorder %s47, %s48
    %p62 = scmp.eq.s32.totalorder %s14, 1
    %p63 = por %p61, %p62
    %p65 = scmp.ne.s32.totalorder %s48, %s64
    %p66 = scmp.eq.s32.totalorder %s14, 0
    %p67 = por %p65, %p66
    %s68 = ssub.s32 %s8, %s15
    %p69 = scmp.eq.s32.totalorder %s68, 0
    %s71 = sadd.s32 %s70, 1
    %s72 = scalar_select %p69, %s70, %s71
    %p75 = pneg %p69
    %p76 = scmp.eq.s32.totalorder %s8, 1
    %p77 = por %p75, %p76
    %p78 = scmp.ne.s32.totalorder %s70, %s73
    %p79 = scmp.eq.s32.totalorder %s8, 0
    %p80 = por %p78, %p79
    %p81 = scmp.ne.s32.totalorder %s70, %s73
    %p82 = scmp.eq.s32.totalorder %s13, 1
    %p83 = por %p81, %p82
    %p84 = scmp.ne.s32.totalorder %s73, %s74
    %p85 = scmp.eq.s32.totalorder %s13, 0
    %p86 = por %p84, %p85
    %p87 = scmp.ne.s32.totalorder %s73, %s74
    %p88 = scmp.eq.s32.totalorder %s14, 1
    %p89 = por %p87, %p88
    %p91 = scmp.ne.s32.totalorder %s74, %s90
    %p92 = scmp.eq.s32.totalorder %s14, 0
    %p93 = por %p91, %p92
    %p94 = scmp.le.s32.totalorder 1, %s8
    %p95 = scmp.lt.s32.totalorder %s8, 3
    %p96 = pnand %p94, %p95
    %p97 = pneg %p96
    // Predicated region
    $region9: #{transformer_decoder_forward.24} parent=5 // pred_check
      _
    $region10: #{transformer_decoder_forward.24} parent=5 // pred_check_branch
      %99 = sbr.rel (%p96) target = $region12
    $region11: #{transformer_decoder_forward.24} parent=5 // pred_region
      %s100 = ssub.s32 %s8, 1
    $region12: #{transformer_decoder_forward.24} parent=5 // pred_fallthru
      _
    %p101 = scmp.lt.s32.totalorder %s8, 2
    // Predicated region
    $region13: #{transformer_decoder_forward.24} parent=5 // pred_check
      %p102 = pneg %p101
    $region14: #{transformer_decoder_forward.24} parent=5 // pred_check_branch
      %104 = sbr.rel (%p102) target = $region16
    $region15: #{transformer_decoder_forward.24} parent=5 // pred_region
      // Predicated region
      $region17: #{transformer_decoder_forward.24} parent=15 // pred_check
        %p105 = pneg %p28
      $region18: #{transformer_decoder_forward.24} parent=15 // pred_check_branch
        %107 = sbr.rel (%p105) target = $region20
      $region19: #{transformer_decoder_forward.24} parent=15 // pred_region
        %p108 = scmp.lt.s32.totalorder %s8, 1
        %s109 = scalar_select %p108, %s8, 1
        %s110 = smul.addr %s109, 4
        %s111 = scalar_lea.vmem %s0, %s110
      $region20: #{transformer_decoder_forward.24} parent=15 // pred_fallthru
        _
      // Predicated region
      $region21: #{transformer_decoder_forward.24} parent=15 // pred_check
        %p112 = pneg %p54
      $region22: #{transformer_decoder_forward.24} parent=15 // pred_check_branch
        %114 = sbr.rel (%p112) target = $region24
      $region23: #{transformer_decoder_forward.24} parent=15 // pred_region
        %p115 = scmp.lt.s32.totalorder %s8, 1
        %s116 = scalar_select %p115, %s8, 1
        %s117 = smul.addr %s116, 2
        %s118 = smul.addr %s117, 4
        %s119 = scalar_lea.vmem %s1, %s118
      $region24: #{transformer_decoder_forward.24} parent=15 // pred_fallthru
        _
    $region16: #{transformer_decoder_forward.24} parent=5 // pred_fallthru
      _
    %p120 = scmp.le.s32.totalorder 1, %s8
    %p121 = scmp.lt.s32.totalorder %s8, 3
    %p122 = pnand %p120, %p121
    %p123 = pneg %p122
    // Predicated region
    $region25: #{transformer_decoder_forward.24} parent=5 // pred_check
      _
    $region26: #{transformer_decoder_forward.24} parent=5 // pred_check_branch
      %125 = sbr.rel (%p122) target = $region28
    $region27: #{transformer_decoder_forward.24} parent=5 // pred_region
      %s126 = ssub.s32 %s8, 1
      %p127 = scmp.lt.s32.totalorder %s13, 1
      %s128 = scalar_select %p127, %s13, 1
      %s129 = smul.addr %s128, 4
      %s130 = scalar_lea.vmem %s0, %s129
      %p131 = pneg %p34
      %p132 = pneg %p31
      %p133 = scmp.lt.s32.totalorder %s13, 1
      %s134 = scalar_select %p133, %s13, 1
      %s135 = smul.addr %s134, 2
      %s136 = smul.addr %s135, 4
      %s137 = scalar_lea.vmem %s1, %s136
      %p138 = pneg %p60
      %p139 = pneg %p57
      %p140 = pneg %p86
      %p141 = pneg %p83
      %p142 = scmp.lt.s32.totalorder %s13, 1
      %s143 = scalar_select %p142, %s13, 1
      %s144 = smul.addr %s143, 4
      %s145 = scalar_lea.vmem %s2, %s144
      %p146 = scmp.lt.s32.totalorder %s13, 1
      %s147 = scalar_select %p146, %s13, 1
      %s148 = smul.addr %s147, 4
      %s149 = scalar_lea.vmem %s0, %s148
      %p150 = scmp.lt.s32.totalorder %s13, 1
      %s151 = scalar_select %p150, %s13, 1
      %s152 = smul.addr %s151, 2
      %s153 = smul.addr %s152, 4
      %s154 = scalar_lea.vmem %s1, %s153
      %p155 = scmp.lt.s32.totalorder %s13, 1
      %s156 = scalar_select %p155, %s13, 1
      %s157 = smul.addr %s156, 4
      %s158 = scalar_lea.vmem %s2, %s157
      %v160 = vld [vmem:[%s149] sm:$0xf]
      %v161 = vld [vmem:[%s154] sm:$0xf]
      %v162 = vld [vmem:[%s154 + $0x4] sm:$0xf]
      %v165 = vunpack.c.l.b16 %v161
      %v166 = vunpack.c.l.b16 %v162
      %v167 = vpack.c.b16 %v166, %v165
      %vm168 = vcmask 64512
      %v170 = vsel %vm168, %v160, 0
      %v173 = vsel %vm168, %v167, 0
      %175 = vmatprep.subr.bf16.mxu0 0
      %176 = vmatpush1.bf16.xpose.msra.mxu0 0
      %177 = vmatprep.subr.bf16.mxu0 0
      %178 = vmatpush1.bf16.xpose.msra.mxu0 0
      %179 = vmatprep.subr.bf16.mxu0 0
      %180 = vmatpush1.bf16.xpose.msra.mxu0 0
      %181 = vmatprep.subr.bf16.mxu0 0
      %182 = vmatpush1.bf16.xpose.msra.mxu0 0
      %183 = vmatprep.subr.bf16.mxu0 0
      %184 = vmatpush1.bf16.xpose.msra.mxu0 0
      %185 = vmatprep.subr.bf16.mxu0 0
      %186 = vmatpush1.bf16.xpose.msra.mxu0 0
      %187 = vmatprep.subr.bf16.mxu0 0
      %188 = vmatpush1.bf16.xpose.msra.mxu0 0
      %189 = vmatprep.subr.bf16.mxu0 0
      %190 = vmatpush1.bf16.xpose.msra.mxu0 %v173
      %191 = vmatprep.subr.bf16.mxu0 0
      %192 = vmatpush2.bf16.xpose.msra.mxu0 0
      %193 = vmatprep.subr.bf16.mxu0 0
      %194 = vmatpush2.bf16.xpose.msra.mxu0 0
      %195 = vmatprep.subr.bf16.mxu0 0
      %196 = vmatpush2.bf16.xpose.msra.mxu0 0
      %197 = vmatprep.subr.bf16.mxu0 0
      %198 = vmatpush2.bf16.xpose.msra.mxu0 0
      %199 = vmatprep.subr.bf16.mxu0 0
      %200 = vmatpush2.bf16.xpose.msra.mxu0 0
      %201 = vmatprep.subr.bf16.mxu0 0
      %202 = vmatpush2.bf16.xpose.msra.mxu0 0
      %203 = vmatprep.subr.bf16.mxu0 0
      %204 = vmatpush2.bf16.xpose.msra.mxu0 0
      %205 = vmatprep.subr.bf16.mxu0 0
      %206 = vmatpush2.bf16.xpose.msra.mxu0 0
      %207 = vmatprep.mubr.bf16.mxu0 0
      %208 = vmatmul.mubr.bf16.gmra.mxu0 %v170
      %v209 = vpop.f32.mrf.mxu0
      %v210 = vadd.f32 0.0, %v209
      %v211 = vpop.f32.mrf.mxu0
      %v212 = vpop.f32.mrf.mxu0
      %v213 = vpop.f32.mrf.mxu0
      %214 = vdwg.mxu0
      %vm215 = vcmask 130048
      %v216 = vsel %vm215, %v210, -inf
      %217 = vmax.xlane.f32.xlu0 %v216
      %v218 = vpop.xlane.xlu0 %217
      %v219 = vsub.f32 %v210, %v218
      %v220 = vmul.f32 %v219, 1.442695
      %v221 = vpow.pop %v220
      %v222 = vsel %vm215, %v221, 0.0
      %223 = vadd.xlane.f32.xlu0 %v222
      %v224 = vpop.xlane.xlu0 %223
      %v225 = vrcp.pop %v224
      %v226 = vmul.f32 %v221, %v225
      %v227 = vpack.c.bf16 %v226, %v226
      %228 = vrot.lane.b32.xlu0 %v167, 96
      %v229 = vpop.permute.xlu0 %228
      %v232 = vsel %vm215, %v227, 0
      %234 = vmatprep.subr.bf16.mxu0 0
      %235 = vmatpush1.bf16.msra.mxu0 0
      %236 = vmatprep.subr.bf16.mxu0 0
      %237 = vmatpush1.bf16.msra.mxu0 0
      %238 = vmatprep.subr.bf16.mxu0 0
      %239 = vmatpush1.bf16.msra.mxu0 0
      %240 = vmatprep.subr.bf16.mxu0 0
      %241 = vmatpush1.bf16.msra.mxu0 0
      %242 = vmatprep.subr.bf16.mxu0 0
      %243 = vmatpush1.bf16.msra.mxu0 0
      %244 = vmatprep.subr.bf16.mxu0 0
      %245 = vmatpush1.bf16.msra.mxu0 0
      %246 = vmatprep.subr.bf16.mxu0 0
      %247 = vmatpush1.bf16.msra.mxu0 0
      %248 = vmatprep.subr.bf16.mxu0 0
      %249 = vmatpush1.bf16.msra.mxu0 %v229
      %250 = vmatprep.subr.bf16.mxu0 0
      %251 = vmatpush2.bf16.msra.mxu0 0
      %252 = vmatprep.subr.bf16.mxu0 0
      %253 = vmatpush2.bf16.msra.mxu0 0
      %254 = vmatprep.subr.bf16.mxu0 0
      %255 = vmatpush2.bf16.msra.mxu0 0
      %256 = vmatprep.subr.bf16.mxu0 0
      %257 = vmatpush2.bf16.msra.mxu0 0
      %258 = vmatprep.subr.bf16.mxu0 0
      %259 = vmatpush2.bf16.msra.mxu0 0
      %260 = vmatprep.subr.bf16.mxu0 0
      %261 = vmatpush2.bf16.msra.mxu0 0
      %262 = vmatprep.subr.bf16.mxu0 0
      %263 = vmatpush2.bf16.msra.mxu0 0
      %264 = vmatprep.subr.bf16.mxu0 0
      %265 = vmatpush2.bf16.msra.mxu0 0
      %266 = vmatprep.mubr.bf16.mxu0 0
      %267 = vmatmul.mubr.bf16.gmra.mxu0 %v232
      %v268 = vpop.f32.mrf.mxu0
      %v269 = vadd.f32 0.0, %v268
      %v270 = vpop.f32.mrf.mxu0
      %v271 = vpop.f32.mrf.mxu0
      %v272 = vpop.f32.mrf.mxu0
      %273 = vdwg.mxu0
      %v274 = vpack.c.bf16 %v269, %v269
      %vm275 = vcmask 60416
      %276 = vst.msk [vmem:[%s158] sm:$0xf] %vm275, %v274
      %v277 = vld [vmem:[%s149] sm:$0xf]
      %v278 = vld [vmem:[%s154] sm:$0xf]
      %v279 = vld [vmem:[%s154 + $0x4] sm:$0xf]
      %v281 = vunpack.c.l.b16 %v277
      %v282 = vpack.c.b16 %v281, %v281
      %283 = vrot.lane.b32.xlu0 %v282, 120
      %v284 = vpop.permute.xlu0 %283
      %v287 = vunpack.c.l.b16 %v278
      %v288 = vunpack.c.l.b16 %v279
      %v289 = vpack.c.b16 %v288, %v287
      %290 = vrot.lane.b32.xlu0 %v289, 120
      %v291 = vpop.permute.xlu0 %290
      %v293 = vsel %vm168, %v284, 0
      %v296 = vsel %vm168, %v291, 0
      %298 = vmatprep.subr.bf16.mxu0 0
      %299 = vmatpush1.bf16.xpose.msra.mxu0 0
      %300 = vmatprep.subr.bf16.mxu0 0
      %301 = vmatpush1.bf16.xpose.msra.mxu0 0
      %302 = vmatprep.subr.bf16.mxu0 0
      %303 = vmatpush1.bf16.xpose.msra.mxu0 0
      %304 = vmatprep.subr.bf16.mxu0 0
      %305 = vmatpush1.bf16.xpose.msra.mxu0 0
      %306 = vmatprep.subr.bf16.mxu0 0
      %307 = vmatpush1.bf16.xpose.msra.mxu0 0
      %308 = vmatprep.subr.bf16.mxu0 0
      %309 = vmatpush1.bf16.xpose.msra.mxu0 0
      %310 = vmatprep.subr.bf16.mxu0 0
      %311 = vmatpush1.bf16.xpose.msra.mxu0 0
      %312 = vmatprep.subr.bf16.mxu0 0
      %313 = vmatpush1.bf16.xpose.msra.mxu0 %v296
      %314 = vmatprep.subr.bf16.mxu0 0
      %315 = vmatpush2.bf16.xpose.msra.mxu0 0
      %316 = vmatprep.subr.bf16.mxu0 0
      %317 = vmatpush2.bf16.xpose.msra.mxu0 0
      %318 = vmatprep.subr.bf16.mxu0 0
      %319 = vmatpush2.bf16.xpose.msra.mxu0 0
      %320 = vmatprep.subr.bf16.mxu0 0
      %321 = vmatpush2.bf16.xpose.msra.mxu0 0
      %322 = vmatprep.subr.bf16.mxu0 0
      %323 = vmatpush2.bf16.xpose.msra.mxu0 0
      %324 = vmatprep.subr.bf16.mxu0 0
      %325 = vmatpush2.bf16.xpose.msra.mxu0 0
      %326 = vmatprep.subr.bf16.mxu0 0
      %327 = vmatpush2.bf16.xpose.msra.mxu0 0
      %328 = vmatprep.subr.bf16.mxu0 0
      %329 = vmatpush2.bf16.xpose.msra.mxu0 0
      %330 = vmatprep.mubr.bf16.mxu0 0
      %331 = vmatmul.mubr.bf16.gmra.mxu0 %v293
      %v332 = vpop.f32.mrf.mxu0
      %v333 = vadd.f32 0.0, %v332
      %v334 = vpop.f32.mrf.mxu0
      %v335 = vpop.f32.mrf.mxu0
      %v336 = vpop.f32.mrf.mxu0
      %337 = vdwg.mxu0
      %v338 = vsel %vm215, %v333, -inf
      %339 = vmax.xlane.f32.xlu0 %v338
      %v340 = vpop.xlane.xlu0 %339
      %v341 = vsub.f32 %v333, %v340
      %v342 = vmul.f32 %v341, 1.442695
      %v343 = vpow.pop %v342
      %v344 = vsel %vm215, %v343, 0.0
      %345 = vadd.xlane.f32.xlu0 %v344
      %v346 = vpop.xlane.xlu0 %345
      %v347 = vrcp.pop %v346
      %v348 = vmul.f32 %v343, %v347
      %v349 = vpack.c.bf16 %v348, %v348
      %350 = vrot.lane.b32.xlu0 %v289, 88
      %v351 = vpop.permute.xlu0 %350
      %v354 = vsel %vm215, %v349, 0
      %356 = vmatprep.subr.bf16.mxu0 0
      %357 = vmatpush1.bf16.msra.mxu0 0
      %358 = vmatprep.subr.bf16.mxu0 0
      %359 = vmatpush1.bf16.msra.mxu0 0
      %360 = vmatprep.subr.bf16.mxu0 0
      %361 = vmatpush1.bf16.msra.mxu0 0
      %362 = vmatprep.subr.bf16.mxu0 0
      %363 = vmatpush1.bf16.msra.mxu0 0
      %364 = vmatprep.subr.bf16.mxu0 0
      %365 = vmatpush1.bf16.msra.mxu0 0
      %366 = vmatprep.subr.bf16.mxu0 0
      %367 = vmatpush1.bf16.msra.mxu0 0
      %368 = vmatprep.subr.bf16.mxu0 0
      %369 = vmatpush1.bf16.msra.mxu0 0
      %370 = vmatprep.subr.bf16.mxu0 0
      %371 = vmatpush1.bf16.msra.mxu0 %v351
      %372 = vmatprep.subr.bf16.mxu0 0
      %373 = vmatpush2.bf16.msra.mxu0 0
      %374 = vmatprep.subr.bf16.mxu0 0
      %375 = vmatpush2.bf16.msra.mxu0 0
      %376 = vmatprep.subr.bf16.mxu0 0
      %377 = vmatpush2.bf16.msra.mxu0 0
      %378 = vmatprep.subr.bf16.mxu0 0
      %379 = vmatpush2.bf16.msra.mxu0 0
      %380 = vmatprep.subr.bf16.mxu0 0
      %381 = vmatpush2.bf16.msra.mxu0 0
      %382 = vmatprep.subr.bf16.mxu0 0
      %383 = vmatpush2.bf16.msra.mxu0 0
      %384 = vmatprep.subr.bf16.mxu0 0
      %385 = vmatpush2.bf16.msra.mxu0 0
      %386 = vmatprep.subr.bf16.mxu0 0
      %387 = vmatpush2.bf16.msra.mxu0 0
      %388 = vmatprep.mubr.bf16.mxu0 0
      %389 = vmatmul.mubr.bf16.gmra.mxu0 %v354
      %v390 = vpop.f32.mrf.mxu0
      %v391 = vadd.f32 0.0, %v390
      %v392 = vpop.f32.mrf.mxu0
      %v393 = vpop.f32.mrf.mxu0
      %v394 = vpop.f32.mrf.mxu0
      %395 = vdwg.mxu0
      %v396 = vpack.c.bf16 %v391, %v391
      %v398 = vunpack.c.l.b16 %v396
      %v399 = vpack.c.b16 %v398, %v398
      %400 = vrot.lane.b32.xlu0 %v399, 8
      %v401 = vpop.permute.xlu0 %400
      %vm403 = vcmask 126016
      %404 = vst.msk [vmem:[%s158] sm:$0xf] %vm403, %v401
      %v405 = vld [vmem:[%s149] sm:$0xf]
      %v406 = vld [vmem:[%s154] sm:$0xf]
      %v407 = vld [vmem:[%s154 + $0x4] sm:$0xf]
      %v409 = vunpack.c.l.b16 %v405
      %v410 = vpack.c.b16 %v409, %v409
      %411 = vrot.lane.b32.xlu0 %v410, 112
      %v412 = vpop.permute.xlu0 %411
      %v415 = vunpack.c.l.b16 %v406
      %v416 = vunpack.c.l.b16 %v407
      %v417 = vpack.c.b16 %v416, %v415
      %418 = vrot.lane.b32.xlu0 %v417, 112
      %v419 = vpop.permute.xlu0 %418
      %v421 = vsel %vm168, %v412, 0
      %v424 = vsel %vm168, %v419, 0
      %426 = vmatprep.subr.bf16.mxu0 0
      %427 = vmatpush1.bf16.xpose.msra.mxu0 0
      %428 = vmatprep.subr.bf16.mxu0 0
      %429 = vmatpush1.bf16.xpose.msra.mxu0 0
      %430 = vmatprep.subr.bf16.mxu0 0
      %431 = vmatpush1.bf16.xpose.msra.mxu0 0
      %432 = vmatprep.subr.bf16.mxu0 0
      %433 = vmatpush1.bf16.xpose.msra.mxu0 0
      %434 = vmatprep.subr.bf16.mxu0 0
      %435 = vmatpush1.bf16.xpose.msra.mxu0 0
      %436 = vmatprep.subr.bf16.mxu0 0
      %437 = vmatpush1.bf16.xpose.msra.mxu0 0
      %438 = vmatprep.subr.bf16.mxu0 0
      %439 = vmatpush1.bf16.xpose.msra.mxu0 0
      %440 = vmatprep.subr.bf16.mxu0 0
      %441 = vmatpush1.bf16.xpose.msra.mxu0 %v424
      %442 = vmatprep.subr.bf16.mxu0 0
      %443 = vmatpush2.bf16.xpose.msra.mxu0 0
      %444 = vmatprep.subr.bf16.mxu0 0
      %445 = vmatpush2.bf16.xpose.msra.mxu0 0
      %446 = vmatprep.subr.bf16.mxu0 0
      %447 = vmatpush2.bf16.xpose.msra.mxu0 0
      %448 = vmatprep.subr.bf16.mxu0 0
      %449 = vmatpush2.bf16.xpose.msra.mxu0 0
      %450 = vmatprep.subr.bf16.mxu0 0
      %451 = vmatpush2.bf16.xpose.msra.mxu0 0
      %452 = vmatprep.subr.bf16.mxu0 0
      %453 = vmatpush2.bf16.xpose.msra.mxu0 0
      %454 = vmatprep.subr.bf16.mxu0 0
      %455 = vmatpush2.bf16.xpose.msra.mxu0 0
      %456 = vmatprep.subr.bf16.mxu0 0
      %457 = vmatpush2.bf16.xpose.msra.mxu0 0
      %458 = vmatprep.mubr.bf16.mxu0 0
      %459 = vmatmul.mubr.bf16.gmra.mxu0 %v421
      %v460 = vpop.f32.mrf.mxu0
      %v461 = vadd.f32 0.0, %v460
      %v462 = vpop.f32.mrf.mxu0
      %v463 = vpop.f32.mrf.mxu0
      %v464 = vpop.f32.mrf.mxu0
      %465 = vdwg.mxu0
      %v466 = vsel %vm215, %v461, -inf
      %467 = vmax.xlane.f32.xlu0 %v466
      %v468 = vpop.xlane.xlu0 %467
      %v469 = vsub.f32 %v461, %v468
      %v470 = vmul.f32 %v469, 1.442695
      %v471 = vpow.pop %v470
      %v472 = vsel %vm215, %v471, 0.0
      %473 = vadd.xlane.f32.xlu0 %v472
      %v474 = vpop.xlane.xlu0 %473
      %v475 = vrcp.pop %v474
      %v476 = vmul.f32 %v471, %v475
      %v477 = vpack.c.bf16 %v476, %v476
      %478 = vrot.lane.b32.xlu0 %v417, 80
      %v479 = vpop.permute.xlu0 %478
      %v482 = vsel %vm215, %v477, 0
      %484 = vmatprep.subr.bf16.mxu0 0
      %485 = vmatpush1.bf16.msra.mxu0 0
      %486 = vmatprep.subr.bf16.mxu0 0
      %487 = vmatpush1.bf16.msra.mxu0 0
      %488 = vmatprep.subr.bf16.mxu0 0
      %489 = vmatpush1.bf16.msra.mxu0 0
      %490 = vmatprep.subr.bf16.mxu0 0
      %491 = vmatpush1.bf16.msra.mxu0 0
      %492 = vmatprep.subr.bf16.mxu0 0
      %493 = vmatpush1.bf16.msra.mxu0 0
      %494 = vmatprep.subr.bf16.mxu0 0
      %495 = vmatpush1.bf16.msra.mxu0 0
      %496 = vmatprep.subr.bf16.mxu0 0
      %497 = vmatpush1.bf16.msra.mxu0 0
      %498 = vmatprep.subr.bf16.mxu0 0
      %499 = vmatpush1.bf16.msra.mxu0 %v479
      %500 = vmatprep.subr.bf16.mxu0 0
      %501 = vmatpush2.bf16.msra.mxu0 0
      %502 = vmatprep.subr.bf16.mxu0 0
      %503 = vmatpush2.bf16.msra.mxu0 0
      %504 = vmatprep.subr.bf16.mxu0 0
      %505 = vmatpush2.bf16.msra.mxu0 0
      %506 = vmatprep.subr.bf16.mxu0 0
      %507 = vmatpush2.bf16.msra.mxu0 0
      %508 = vmatprep.subr.bf16.mxu0 0
      %509 = vmatpush2.bf16.msra.mxu0 0
      %510 = vmatprep.subr.bf16.mxu0 0
      %511 = vmatpush2.bf16.msra.mxu0 0
      %512 = vmatprep.subr.bf16.mxu0 0
      %513 = vmatpush2.bf16.msra.mxu0 0
      %514 = vmatprep.subr.bf16.mxu0 0
      %515 = vmatpush2.bf16.msra.mxu0 0
      %516 = vmatprep.mubr.bf16.mxu0 0
      %517 = vmatmul.mubr.bf16.gmra.mxu0 %v482
      %v518 = vpop.f32.mrf.mxu0
      %v519 = vadd.f32 0.0, %v518
      %v520 = vpop.f32.mrf.mxu0
      %v521 = vpop.f32.mrf.mxu0
      %v522 = vpop.f32.mrf.mxu0
      %523 = vdwg.mxu0
      %v524 = vpack.c.bf16 %v519, %v519
      %v526 = vunpack.c.l.b16 %v524
      %v527 = vpack.c.b16 %v526, %v526
      %528 = vrot.lane.b32.xlu0 %v527, 16
      %v529 = vpop.permute.xlu0 %528
      %vm531 = vcmask 191616
      %532 = vst.msk [vmem:[%s158] sm:$0xf] %vm531, %v529
      %v533 = vld [vmem:[%s149] sm:$0xf]
      %v534 = vld [vmem:[%s154] sm:$0xf]
      %v535 = vld [vmem:[%s154 + $0x4] sm:$0xf]
      %v537 = vunpack.c.l.b16 %v533
      %v538 = vpack.c.b16 %v537, %v537
      %539 = vrot.lane.b32.xlu0 %v538, 104
      %v540 = vpop.permute.xlu0 %539
      %v543 = vunpack.c.l.b16 %v534
      %v544 = vunpack.c.l.b16 %v535
      %v545 = vpack.c.b16 %v544, %v543
      %546 = vrot.lane.b32.xlu0 %v545, 104
      %v547 = vpop.permute.xlu0 %546
      %v549 = vsel %vm168, %v540, 0
      %v552 = vsel %vm168, %v547, 0
      %554 = vmatprep.subr.bf16.mxu0 0
      %555 = vmatpush1.bf16.xpose.msra.mxu0 0
      %556 = vmatprep.subr.bf16.mxu0 0
      %557 = vmatpush1.bf16.xpose.msra.mxu0 0
      %558 = vmatprep.subr.bf16.mxu0 0
      %559 = vmatpush1.bf16.xpose.msra.mxu0 0
      %560 = vmatprep.subr.bf16.mxu0 0
      %561 = vmatpush1.bf16.xpose.msra.mxu0 0
      %562 = vmatprep.subr.bf16.mxu0 0
      %563 = vmatpush1.bf16.xpose.msra.mxu0 0
      %564 = vmatprep.subr.bf16.mxu0 0
      %565 = vmatpush1.bf16.xpose.msra.mxu0 0
      %566 = vmatprep.subr.bf16.mxu0 0
      %567 = vmatpush1.bf16.xpose.msra.mxu0 0
      %568 = vmatprep.subr.bf16.mxu0 0
      %569 = vmatpush1.bf16.xpose.msra.mxu0 %v552
      %570 = vmatprep.subr.bf16.mxu0 0
      %571 = vmatpush2.bf16.xpose.msra.mxu0 0
      %572 = vmatprep.subr.bf16.mxu0 0
      %573 = vmatpush2.bf16.xpose.msra.mxu0 0
      %574 = vmatprep.subr.bf16.mxu0 0
      %575 = vmatpush2.bf16.xpose.msra.mxu0 0
      %576 = vmatprep.subr.bf16.mxu0 0
      %577 = vmatpush2.bf16.xpose.msra.mxu0 0
      %578 = vmatprep.subr.bf16.mxu0 0
      %579 = vmatpush2.bf16.xpose.msra.mxu0 0
      %580 = vmatprep.subr.bf16.mxu0 0
      %581 = vmatpush2.bf16.xpose.msra.mxu0 0
      %582 = vmatprep.subr.bf16.mxu0 0
      %583 = vmatpush2.bf16.xpose.msra.mxu0 0
      %584 = vmatprep.subr.bf16.mxu0 0
      %585 = vmatpush2.bf16.xpose.msra.mxu0 0
      %586 = vmatprep.mubr.bf16.mxu0 0
      %587 = vmatmul.mubr.bf16.gmra.mxu0 %v549
      %v588 = vpop.f32.mrf.mxu0
      %v589 = vadd.f32 0.0, %v588
      %v590 = vpop.f32.mrf.mxu0
      %v591 = vpop.f32.mrf.mxu0
      %v592 = vpop.f32.mrf.mxu0
      %593 = vdwg.mxu0
      %v594 = vsel %vm215, %v589, -inf
      %595 = vmax.xlane.f32.xlu0 %v594
      %v596 = vpop.xlane.xlu0 %595
      %v597 = vsub.f32 %v589, %v596
      %v598 = vmul.f32 %v597, 1.442695
      %v599 = vpow.pop %v598
      %v600 = vsel %vm215, %v599, 0.0
      %601 = vadd.xlane.f32.xlu0 %v600
      %v602 = vpop.xlane.xlu0 %601
      %v603 = vrcp.pop %v602
      %v604 = vmul.f32 %v599, %v603
      %v605 = vpack.c.bf16 %v604, %v604
      %606 = vrot.lane.b32.xlu0 %v545, 72
      %v607 = vpop.permute.xlu0 %606
      %v610 = vsel %vm215, %v605, 0
      %612 = vmatprep.subr.bf16.mxu0 0
      %613 = vmatpush1.bf16.msra.mxu0 0
      %614 = vmatprep.subr.bf16.mxu0 0
      %615 = vmatpush1.bf16.msra.mxu0 0
      %616 = vmatprep.subr.bf16.mxu0 0
      %617 = vmatpush1.bf16.msra.mxu0 0
      %618 = vmatprep.subr.bf16.mxu0 0
      %619 = vmatpush1.bf16.msra.mxu0 0
      %620 = vmatprep.subr.bf16.mxu0 0
      %621 = vmatpush1.bf16.msra.mxu0 0
      %622 = vmatprep.subr.bf16.mxu0 0
      %623 = vmatpush1.bf16.msra.mxu0 0
      %624 = vmatprep.subr.bf16.mxu0 0
      %625 = vmatpush1.bf16.msra.mxu0 0
      %626 = vmatprep.subr.bf16.mxu0 0
      %627 = vmatpush1.bf16.msra.mxu0 %v607
      %628 = vmatprep.subr.bf16.mxu0 0
      %629 = vmatpush2.bf16.msra.mxu0 0
      %630 = vmatprep.subr.bf16.mxu0 0
      %631 = vmatpush2.bf16.msra.mxu0 0
      %632 = vmatprep.subr.bf16.mxu0 0
      %633 = vmatpush2.bf16.msra.mxu0 0
      %634 = vmatprep.subr.bf16.mxu0 0
      %635 = vmatpush2.bf16.msra.mxu0 0
      %636 = vmatprep.subr.bf16.mxu0 0
      %637 = vmatpush2.bf16.msra.mxu0 0
      %638 = vmatprep.subr.bf16.mxu0 0
      %639 = vmatpush2.bf16.msra.mxu0 0
      %640 = vmatprep.subr.bf16.mxu0 0
      %641 = vmatpush2.bf16.msra.mxu0 0
      %642 = vmatprep.subr.bf16.mxu0 0
      %643 = vmatpush2.bf16.msra.mxu0 0
      %644 = vmatprep.mubr.bf16.mxu0 0
      %645 = vmatmul.mubr.bf16.gmra.mxu0 %v610
      %v646 = vpop.f32.mrf.mxu0
      %v647 = vadd.f32 0.0, %v646
      %v648 = vpop.f32.mrf.mxu0
      %v649 = vpop.f32.mrf.mxu0
      %v650 = vpop.f32.mrf.mxu0
      %651 = vdwg.mxu0
      %v652 = vpack.c.bf16 %v647, %v647
      %v654 = vunpack.c.l.b16 %v652
      %v655 = vpack.c.b16 %v654, %v654
      %656 = vrot.lane.b32.xlu0 %v655, 24
      %v657 = vpop.permute.xlu0 %656
      %vm659 = vcmask 257216
      %660 = vst.msk [vmem:[%s158] sm:$0xf] %vm659, %v657
      %p661 = scmp.lt.s32.totalorder %s13, 1
      %s662 = scalar_select %p661, %s13, 1
      %s663 = smul.addr %s662, 4
      %s664 = scalar_lea.vmem %s2, %s663
      // Predicated region
      $region29: #{transformer_decoder_forward.24} parent=27 // pred_check
        %p665 = pneg %p83
      $region30: #{transformer_decoder_forward.24} parent=27 // pred_check_branch
        %667 = sbr.rel (%p665) target = $region32
      $region31: #{transformer_decoder_forward.24} parent=27 // pred_region
        _
      $region32: #{transformer_decoder_forward.24} parent=27 // pred_fallthru
        _
    $region28: #{transformer_decoder_forward.24} parent=5 // pred_fallthru
      _
    %p668 = scmp.le.s32.totalorder 2, %s8
    // Predicated region
    $region33: #{transformer_decoder_forward.24} parent=5 // pred_check
      %p669 = pneg %p668
    $region34: #{transformer_decoder_forward.24} parent=5 // pred_check_branch
      %671 = sbr.rel (%p669) target = $region36
    $region35: #{transformer_decoder_forward.24} parent=5 // pred_region
      %s672 = ssub.s32 %s8, 2
      // Predicated region
      $region37: #{transformer_decoder_forward.24} parent=35 // pred_check
        %p673 = pneg %p89
      $region38: #{transformer_decoder_forward.24} parent=35 // pred_check_branch
        %675 = sbr.rel (%p673) target = $region40
      $region39: #{transformer_decoder_forward.24} parent=35 // pred_region
        %p676 = scmp.lt.s32.totalorder %s14, 1
        %s677 = scalar_select %p676, %s14, 1
        %s678 = smul.addr %s677, 4
        %s679 = scalar_lea.vmem %s2, %s678
      $region40: #{transformer_decoder_forward.24} parent=35 // pred_fallthru
        _
    $region36: #{transformer_decoder_forward.24} parent=5 // pred_fallthru
      _
  $region6: #{transformer_decoder_forward.24} parent=0 // loop_footer
    %s12 = sadd.s32 1, %s8
  $region7: #{transformer_decoder_forward.24} parent=0 // loop_footer_branch
    %7 = sbr.rel target = $region3
  $region8: #{transformer_decoder_forward.24} parent=0 // loop_exit
    _

// kernel: transformer_decoder_forward.26
$region0: #{transformer_decoder_forward.26}
  #allocation0 [shape = 'u32[]', space=smem, size = 0x4, offset = 0x4, fixed_abs, tag = 'smem constant byte address 0x4 - core index']
  #allocation1 [shape = 'u32[144,128]{1,0:T(1,128)}', space=vmem, size = 0x12000, scoped, tag = 'internal scratch']
  #allocation2 [shape = 'f32[16,128]{1,0:T(8,128)}', space=vmem, size = 0x2000, scoped, tag = 'scratch operand']
  %s0 = inlined_call_operand.vmem [shape: bf16[16,128], index: 0, kind: input, shape index: {}]
  %s1 = inlined_call_operand.vmem [shape: bf16[128,128], index: 1, kind: input, shape index: {}]
  %s2 = inlined_call_operand.vmem [shape: f32[1,128], index: 2, kind: input, shape index: {}]
  %s3 = inlined_call_operand.vmem [shape: bf16[16,128], index: 3, kind: output, shape index: {}]
  %s4 = sld [smem:[#allocation0]]
  $region30: #{transformer_decoder_forward.26} parent=0
    _
  %s6 = ssub.s32 1, %s4
  %s7 = scalar_select 0, %s6, %s4
  // Predicated region
  $region2: #{transformer_decoder_forward.26} parent=0 // pred_check
    _
  $region3: #{transformer_decoder_forward.26} parent=0 // pred_check_branch
    %9 = sbr.rel (0) target = $region5
  $region4: #{transformer_decoder_forward.26} parent=0 // pred_region
    _
  $region5: #{transformer_decoder_forward.26} parent=0 // pred_fallthru
    _
  // Predicated region
  $region6: #{transformer_decoder_forward.26} parent=0 // pred_check
    _
  $region7: #{transformer_decoder_forward.26} parent=0 // pred_check_branch
    %11 = sbr.rel (0) target = $region9
  $region8: #{transformer_decoder_forward.26} parent=0 // pred_region
    _
  $region9: #{transformer_decoder_forward.26} parent=0 // pred_fallthru
    _
  // Predicated region
  $region10: #{transformer_decoder_forward.26} parent=0 // pred_check
    _
  $region11: #{transformer_decoder_forward.26} parent=0 // pred_check_branch
    %13 = sbr.rel (0) target = $region13
  $region12: #{transformer_decoder_forward.26} parent=0 // pred_region
    _
  $region13: #{transformer_decoder_forward.26} parent=0 // pred_fallthru
    _
  %p15 = scmp.eq.s32.totalorder 0, 0
  // Predicated region
  $region14: #{transformer_decoder_forward.26} parent=0 // pred_check
    %p16 = pneg %p15
  $region15: #{transformer_decoder_forward.26} parent=0 // pred_check_branch
    %18 = sbr.rel (%p16) target = $region17
  $region16: #{transformer_decoder_forward.26} parent=0 // pred_region
    %19 = vst [vmem:[#allocation2] sm:$0xff] 0.0
    %20 = vst [vmem:[#allocation2 + $0x8] sm:$0xff] 0.0
  $region17: #{transformer_decoder_forward.26} parent=0 // pred_fallthru
    _
  %v21 = vld [vmem:[#allocation2] sm:$0xff]
  %v22 = vld [vmem:[#allocation2 + $0x8] sm:$0xff]
  %v23 = vld [vmem:[%s0] sm:$0xf]
  %v24 = vld [vmem:[%s0 + $0x4] sm:$0xf]
  %v25 = vld [vmem:[%s1] sm:$0xf]
  %v26 = vld [vmem:[%s1 + $0x4] sm:$0xf]
  %v27 = vld [vmem:[%s1 + $0x8] sm:$0xf]
  %v28 = vld [vmem:[%s1 + $0xc] sm:$0xf]
  %v29 = vld [vmem:[%s1 + $0x10] sm:$0xf]
  %v30 = vld [vmem:[%s1 + $0x14] sm:$0xf]
  %v31 = vld [vmem:[%s1 + $0x18] sm:$0xf]
  %v32 = vld [vmem:[%s1 + $0x1c] sm:$0xf]
  %v33 = vld [vmem:[%s1 + $0x20] sm:$0xf]
  %v34 = vld [vmem:[%s1 + $0x24] sm:$0xf]
  %v35 = vld [vmem:[%s1 + $0x28] sm:$0xf]
  %v36 = vld [vmem:[%s1 + $0x2c] sm:$0xf]
  %v37 = vld [vmem:[%s1 + $0x30] sm:$0xf]
  %v38 = vld [vmem:[%s1 + $0x34] sm:$0xf]
  %v39 = vld [vmem:[%s1 + $0x38] sm:$0xf]
  %v40 = vld [vmem:[%s1 + $0x3c] sm:$0xf]
  %v43 = vunpack.c.l.b16 %v23
  %v44 = vunpack.c.l.b16 %v24
  %v45 = vpack.c.b16 %v44, %v43
  %v63 = vunpack.c.l.b16 %v25
  %v64 = vunpack.c.l.b16 %v26
  %v65 = vunpack.c.l.b16 %v27
  %v66 = vunpack.c.l.b16 %v28
  %v67 = vunpack.c.l.b16 %v29
  %v68 = vunpack.c.l.b16 %v30
  %v69 = vunpack.c.l.b16 %v31
  %v70 = vunpack.c.l.b16 %v32
  %v71 = vunpack.c.l.b16 %v33
  %v72 = vunpack.c.l.b16 %v34
  %v73 = vunpack.c.l.b16 %v35
  %v74 = vunpack.c.l.b16 %v36
  %v75 = vunpack.c.l.b16 %v37
  %v76 = vunpack.c.l.b16 %v38
  %v77 = vunpack.c.l.b16 %v39
  %v78 = vunpack.c.l.b16 %v40
  %v79 = vpack.c.b16 %v64, %v63
  %v80 = vpack.c.b16 %v66, %v65
  %v81 = vpack.c.b16 %v68, %v67
  %v82 = vpack.c.b16 %v70, %v69
  %v83 = vpack.c.b16 %v72, %v71
  %v84 = vpack.c.b16 %v74, %v73
  %v85 = vpack.c.b16 %v76, %v75
  %v86 = vpack.c.b16 %v78, %v77
  %95 = vmatprep.subr.bf16.mxu0 0
  %96 = vmatpush1.bf16.msra.mxu0 %v86
  %97 = vmatprep.subr.bf16.mxu0 0
  %98 = vmatpush1.bf16.msra.mxu0 %v85
  %99 = vmatprep.subr.bf16.mxu0 0
  %100 = vmatpush1.bf16.msra.mxu0 %v84
  %101 = vmatprep.subr.bf16.mxu0 0
  %102 = vmatpush1.bf16.msra.mxu0 %v83
  %103 = vmatprep.subr.bf16.mxu0 0
  %104 = vmatpush1.bf16.msra.mxu0 %v82
  %105 = vmatprep.subr.bf16.mxu0 0
  %106 = vmatpush1.bf16.msra.mxu0 %v81
  %107 = vmatprep.subr.bf16.mxu0 0
  %108 = vmatpush1.bf16.msra.mxu0 %v80
  %109 = vmatprep.subr.bf16.mxu0 0
  %110 = vmatpush1.bf16.msra.mxu0 %v79
  %111 = vmatprep.subr.bf16.mxu0 0
  %112 = vmatpush2.bf16.msra.mxu0 0
  %113 = vmatprep.subr.bf16.mxu0 0
  %114 = vmatpush2.bf16.msra.mxu0 0
  %115 = vmatprep.subr.bf16.mxu0 0
  %116 = vmatpush2.bf16.msra.mxu0 0
  %117 = vmatprep.subr.bf16.mxu0 0
  %118 = vmatpush2.bf16.msra.mxu0 0
  %119 = vmatprep.subr.bf16.mxu0 0
  %120 = vmatpush2.bf16.msra.mxu0 0
  %121 = vmatprep.subr.bf16.mxu0 0
  %122 = vmatpush2.bf16.msra.mxu0 0
  %123 = vmatprep.subr.bf16.mxu0 0
  %124 = vmatpush2.bf16.msra.mxu0 0
  %125 = vmatprep.subr.bf16.mxu0 0
  %126 = vmatpush2.bf16.msra.mxu0 0
  %127 = vmatprep.mubr.bf16.mxu0 0
  %128 = vmatmul.mubr.bf16.gmra.mxu0 %v45
  %v129 = vpop.f32.mrf.mxu0
  %v130 = vadd.f32 0.0, %v129
  %v131 = vpop.f32.mrf.mxu0
  %v132 = vpop.f32.mrf.mxu0
  %v133 = vadd.f32 0.0, %v132
  %v134 = vpop.f32.mrf.mxu0
  %135 = vdwg.mxu0
  %v136 = vadd.f32 %v21, %v130
  %v137 = vadd.f32 %v22, %v133
  %138 = vst [vmem:[#allocation2] sm:$0xff] %v136
  %139 = vst [vmem:[#allocation2 + $0x8] sm:$0xff] %v137
  // Predicated region
  $region18: #{transformer_decoder_forward.26} parent=0 // pred_check
    %p140 = pneg %p15
  $region19: #{transformer_decoder_forward.26} parent=0 // pred_check_branch
    %142 = sbr.rel (%p140) target = $region21
  $region20: #{transformer_decoder_forward.26} parent=0 // pred_region
    %v143 = vld [vmem:[#allocation2] sm:$0xff]
    %v144 = vld [vmem:[#allocation2 + $0x8] sm:$0xff]
    %v145 = vld [vmem:[%s2] sm:$0x1]
    %v147 = vlaneseq
    %v148 = vshrl.u32 %v147, 7
    %v149 = vsub.s32 0, %v148
    %v150 = vrot.slane %v145, %v149
    %v152 = vadd.f32 %v143, %v150
    %v153 = vadd.f32 %v144, %v150
    %v154 = vmax.f32 %v152, 0.0
    %v155 = vmax.f32 %v153, 0.0
    %v156 = vpack.c.bf16 %v155, %v154
    %v158 = vunpack.c.l.b16 %v156
    %v159 = vunpack.c.h.b16 %v156
    %v160 = vpack.c.b16 %v158, %v158
    %v161 = vpack.c.b16 %v159, %v159
    %164 = vst [vmem:[%s3] sm:$0xf] %v160
    %165 = vst [vmem:[%s3 + $0x4] sm:$0xf] %v161
  $region21: #{transformer_decoder_forward.26} parent=0 // pred_fallthru
    _
  // Predicated region
  $region22: #{transformer_decoder_forward.26} parent=0 // pred_check
    _
  $region23: #{transformer_decoder_forward.26} parent=0 // pred_check_branch
    %167 = sbr.rel (0) target = $region25
  $region24: #{transformer_decoder_forward.26} parent=0 // pred_region
    _
  $region25: #{transformer_decoder_forward.26} parent=0 // pred_fallthru
    _
  // Predicated region
  $region26: #{transformer_decoder_forward.26} parent=0 // pred_check
    _
  $region27: #{transformer_decoder_forward.26} parent=0 // pred_check_branch
    %169 = sbr.rel (0) target = $region29
  $region28: #{transformer_decoder_forward.26} parent=0 // pred_region
    _
  $region29: #{transformer_decoder_forward.26} parent=0 // pred_fallthru
    _

// kernel: transformer_decoder_forward.37
$region0: #{transformer_decoder_forward.37}
  #allocation0 [shape = 'u32[]', space=smem, size = 0x4, offset = 0x4, fixed_abs, tag = 'smem constant byte address 0x4 - core index']
  #allocation1 [shape = 'u32[144,128]{1,0:T(1,128)}', space=vmem, size = 0x12000, scoped, tag = 'internal scratch']
  #allocation2 [shape = 'f32[16,128]{1,0:T(8,128)}', space=vmem, size = 0x2000, scoped, tag = 'scratch operand']
  %s0 = inlined_call_operand.vmem [shape: bf16[16,128], index: 0, kind: input, shape index: {}]
  %s1 = inlined_call_operand.vmem [shape: bf16[128,128], index: 1, kind: input, shape index: {}]
  %s2 = inlined_call_operand.vmem [shape: f32[1,128], index: 2, kind: input, shape index: {}]
  %s3 = inlined_call_operand.vmem [shape: f32[16,128], index: 3, kind: output, shape index: {}]
  %s4 = sld [smem:[#allocation0]]
  $region30: #{transformer_decoder_forward.37} parent=0
    _
  %s6 = ssub.s32 1, %s4
  %s7 = scalar_select 0, %s6, %s4
  // Predicated region
  $region2: #{transformer_decoder_forward.37} parent=0 // pred_check
    _
  $region3: #{transformer_decoder_forward.37} parent=0 // pred_check_branch
    %9 = sbr.rel (0) target = $region5
  $region4: #{transformer_decoder_forward.37} parent=0 // pred_region
    _
  $region5: #{transformer_decoder_forward.37} parent=0 // pred_fallthru
    _
  // Predicated region
  $region6: #{transformer_decoder_forward.37} parent=0 // pred_check
    _
  $region7: #{transformer_decoder_forward.37} parent=0 // pred_check_branch
    %11 = sbr.rel (0) target = $region9
  $region8: #{transformer_decoder_forward.37} parent=0 // pred_region
    _
  $region9: #{transformer_decoder_forward.37} parent=0 // pred_fallthru
    _
  // Predicated region
  $region10: #{transformer_decoder_forward.37} parent=0 // pred_check
    _
  $region11: #{transformer_decoder_forward.37} parent=0 // pred_check_branch
    %13 = sbr.rel (0) target = $region13
  $region12: #{transformer_decoder_forward.37} parent=0 // pred_region
    _
  $region13: #{transformer_decoder_forward.37} parent=0 // pred_fallthru
    _
  %p15 = scmp.eq.s32.totalorder 0, 0
  // Predicated region
  $region14: #{transformer_decoder_forward.37} parent=0 // pred_check
    %p16 = pneg %p15
  $region15: #{transformer_decoder_forward.37} parent=0 // pred_check_branch
    %18 = sbr.rel (%p16) target = $region17
  $region16: #{transformer_decoder_forward.37} parent=0 // pred_region
    %19 = vst [vmem:[#allocation2] sm:$0xff] 0.0
    %20 = vst [vmem:[#allocation2 + $0x8] sm:$0xff] 0.0
  $region17: #{transformer_decoder_forward.37} parent=0 // pred_fallthru
    _
  %v21 = vld [vmem:[#allocation2] sm:$0xff]
  %v22 = vld [vmem:[#allocation2 + $0x8] sm:$0xff]
  %v23 = vld [vmem:[%s0] sm:$0xf]
  %v24 = vld [vmem:[%s0 + $0x4] sm:$0xf]
  %v25 = vld [vmem:[%s1] sm:$0xf]
  %v26 = vld [vmem:[%s1 + $0x4] sm:$0xf]
  %v27 = vld [vmem:[%s1 + $0x8] sm:$0xf]
  %v28 = vld [vmem:[%s1 + $0xc] sm:$0xf]
  %v29 = vld [vmem:[%s1 + $0x10] sm:$0xf]
  %v30 = vld [vmem:[%s1 + $0x14] sm:$0xf]
  %v31 = vld [vmem:[%s1 + $0x18] sm:$0xf]
  %v32 = vld [vmem:[%s1 + $0x1c] sm:$0xf]
  %v33 = vld [vmem:[%s1 + $0x20] sm:$0xf]
  %v34 = vld [vmem:[%s1 + $0x24] sm:$0xf]
  %v35 = vld [vmem:[%s1 + $0x28] sm:$0xf]
  %v36 = vld [vmem:[%s1 + $0x2c] sm:$0xf]
  %v37 = vld [vmem:[%s1 + $0x30] sm:$0xf]
  %v38 = vld [vmem:[%s1 + $0x34] sm:$0xf]
  %v39 = vld [vmem:[%s1 + $0x38] sm:$0xf]
  %v40 = vld [vmem:[%s1 + $0x3c] sm:$0xf]
  %v43 = vunpack.c.l.b16 %v23
  %v44 = vunpack.c.l.b16 %v24
  %v45 = vpack.c.b16 %v44, %v43
  %v63 = vunpack.c.l.b16 %v25
  %v64 = vunpack.c.l.b16 %v26
  %v65 = vunpack.c.l.b16 %v27
  %v66 = vunpack.c.l.b16 %v28
  %v67 = vunpack.c.l.b16 %v29
  %v68 = vunpack.c.l.b16 %v30
  %v69 = vunpack.c.l.b16 %v31
  %v70 = vunpack.c.l.b16 %v32
  %v71 = vunpack.c.l.b16 %v33
  %v72 = vunpack.c.l.b16 %v34
  %v73 = vunpack.c.l.b16 %v35
  %v74 = vunpack.c.l.b16 %v36
  %v75 = vunpack.c.l.b16 %v37
  %v76 = vunpack.c.l.b16 %v38
  %v77 = vunpack.c.l.b16 %v39
  %v78 = vunpack.c.l.b16 %v40
  %v79 = vpack.c.b16 %v64, %v63
  %v80 = vpack.c.b16 %v66, %v65
  %v81 = vpack.c.b16 %v68, %v67
  %v82 = vpack.c.b16 %v70, %v69
  %v83 = vpack.c.b16 %v72, %v71
  %v84 = vpack.c.b16 %v74, %v73
  %v85 = vpack.c.b16 %v76, %v75
  %v86 = vpack.c.b16 %v78, %v77
  %95 = vmatprep.subr.bf16.mxu0 0
  %96 = vmatpush1.bf16.msra.mxu0 %v86
  %97 = vmatprep.subr.bf16.mxu0 0
  %98 = vmatpush1.bf16.msra.mxu0 %v85
  %99 = vmatprep.subr.bf16.mxu0 0
  %100 = vmatpush1.bf16.msra.mxu0 %v84
  %101 = vmatprep.subr.bf16.mxu0 0
  %102 = vmatpush1.bf16.msra.mxu0 %v83
  %103 = vmatprep.subr.bf16.mxu0 0
  %104 = vmatpush1.bf16.msra.mxu0 %v82
  %105 = vmatprep.subr.bf16.mxu0 0
  %106 = vmatpush1.bf16.msra.mxu0 %v81
  %107 = vmatprep.subr.bf16.mxu0 0
  %108 = vmatpush1.bf16.msra.mxu0 %v80
  %109 = vmatprep.subr.bf16.mxu0 0
  %110 = vmatpush1.bf16.msra.mxu0 %v79
  %111 = vmatprep.subr.bf16.mxu0 0
  %112 = vmatpush2.bf16.msra.mxu0 0
  %113 = vmatprep.subr.bf16.mxu0 0
  %114 = vmatpush2.bf16.msra.mxu0 0
  %115 = vmatprep.subr.bf16.mxu0 0
  %116 = vmatpush2.bf16.msra.mxu0 0
  %117 = vmatprep.subr.bf16.mxu0 0
  %118 = vmatpush2.bf16.msra.mxu0 0
  %119 = vmatprep.subr.bf16.mxu0 0
  %120 = vmatpush2.bf16.msra.mxu0 0
  %121 = vmatprep.subr.bf16.mxu0 0
  %122 = vmatpush2.bf16.msra.mxu0 0
  %123 = vmatprep.subr.bf16.mxu0 0
  %124 = vmatpush2.bf16.msra.mxu0 0
  %125 = vmatprep.subr.bf16.mxu0 0
  %126 = vmatpush2.bf16.msra.mxu0 0
  %127 = vmatprep.mubr.bf16.mxu0 0
  %128 = vmatmul.mubr.bf16.gmra.mxu0 %v45
  %v129 = vpop.f32.mrf.mxu0
  %v130 = vadd.f32 0.0, %v129
  %v131 = vpop.f32.mrf.mxu0
  %v132 = vpop.f32.mrf.mxu0
  %v133 = vadd.f32 0.0, %v132
  %v134 = vpop.f32.mrf.mxu0
  %135 = vdwg.mxu0
  %v136 = vadd.f32 %v21, %v130
  %v137 = vadd.f32 %v22, %v133
  %138 = vst [vmem:[#allocation2] sm:$0xff] %v136
  %139 = vst [vmem:[#allocation2 + $0x8] sm:$0xff] %v137
  // Predicated region
  $region18: #{transformer_decoder_forward.37} parent=0 // pred_check
    %p140 = pneg %p15
  $region19: #{transformer_decoder_forward.37} parent=0 // pred_check_branch
    %142 = sbr.rel (%p140) target = $region21
  $region20: #{transformer_decoder_forward.37} parent=0 // pred_region
    %v143 = vld [vmem:[#allocation2] sm:$0xff]
    %v144 = vld [vmem:[#allocation2 + $0x8] sm:$0xff]
    %v145 = vld [vmem:[%s2] sm:$0x1]
    %v147 = vlaneseq
    %v148 = vshrl.u32 %v147, 7
    %v149 = vsub.s32 0, %v148
    %v150 = vrot.slane %v145, %v149
    %v152 = vadd.f32 %v143, %v150
    %v153 = vadd.f32 %v144, %v150
    %154 = vst [vmem:[%s3] sm:$0xff] %v152
    %155 = vst [vmem:[%s3 + $0x8] sm:$0xff] %v153
  $region21: #{transformer_decoder_forward.37} parent=0 // pred_fallthru
    _
  // Predicated region
  $region22: #{transformer_decoder_forward.37} parent=0 // pred_check
    _
  $region23: #{transformer_decoder_forward.37} parent=0 // pred_check_branch
    %157 = sbr.rel (0) target = $region25
  $region24: #{transformer_decoder_forward.37} parent=0 // pred_region
    _
  $region25: #{transformer_decoder_forward.37} parent=0 // pred_fallthru
    _
  // Predicated region
  $region26: #{transformer_decoder_forward.37} parent=0 // pred_check
    _
  $region27: #{transformer_decoder_forward.37} parent=0 // pred_check_branch
    %159 = sbr.rel (0) target = $region29
  $region28: #{transformer_decoder_forward.37} parent=0 // pred_region
    _
  $region29: #{transformer_decoder_forward.37} parent=0 // pred_fallthru
    _

</llo_original>
